<compile_context>
chip_gen: v6e
topology: v6e:2x2x1
jax: 0.10.0
libtpu: 0.0.40
codegen_flags: <defaults>
</compile_context>

<pallas_src>
import jax
import jax.numpy as jnp
from jax import lax
from jax.experimental import pallas as pl
from jax.experimental.pallas import tpu as pltpu

HIDDEN = 768        # BERT hidden size (fixed by nn.Linear(768, 256))
L0_OUT = 256
T_DIM = 5           # 261 - 256 extra features concatenated from tanh(t)
L1_OUT = 100
L2_OUT = 2
L1_PAD = 128        # L1 padded to lane width
L2_PAD = 128        # L2 padded to lane width (output sliced back to 2)
VOCAB = 1000
VOCAB_PAD = 1024    # lane-aligned vocab; rows [1000,1024) are zero
MAX_TOKENS_PER_TILE = 1024   # caps the (bt*S, VOCAB_PAD) one-hot intermediate


def _choose_b_tile(B, S):
    """Batch tile: full batch if tiny, else a multiple of 8 capped by tokens."""
    if B <= 8:
        return B
    cap = max(8, (MAX_TOKENS_PER_TILE // max(S, 1)) // 8 * 8)
    bt = min(B, cap)
    return max(8, (bt // 8) * 8)


# ---------------------------------------------------------------------------
# Fused kernel: gather+pool+pooler+head, one batch tile per grid step.
# ---------------------------------------------------------------------------
def timetron_kernel(ids_ref, mask_ref, t_ref, table_ref, wp_ref, bp_ref,
                    w0_ref, b0_ref, w1a_ref, w1b_ref, b1_ref, w2_ref, b2_ref,
                    out_ref):
    ids = ids_ref[...]                                   # (bt, S) int32
    mask = mask_ref[...]                                 # (bt, S) f32
    bt, S = ids.shape

    # Masked-out positions index a zero row of the padded table, so the mask
    # multiply on the (bt, S, V) one-hot disappears.
    masked_ids = jnp.where(mask > 0.5, ids, VOCAB)       # (bt, S)

    # Embedding gather + masked sum over the sequence, fused into one matmul:
    #   counts[b, v] = sum_s (masked_ids[b, s] == v)
    #   summed       = counts @ table                    # (bt, 768)
    iota_v = lax.broadcasted_iota(jnp.int32, (bt, S, VOCAB_PAD), 2)
    onehot = (masked_ids[:, :, None] == iota_v).astype(jnp.float32)
    counts = jnp.sum(onehot, axis=1)                     # (bt, VOCAB_PAD)
    summed = jnp.dot(counts, table_ref[...],
                     preferred_element_type=jnp.float32) # (bt, 768)
    cnt = jnp.sum(mask, axis=1, keepdims=True)           # (bt, 1)
    mean = summed / jnp.maximum(cnt, 1.0)

    # BERT-style pooler: tanh(mean @ Wp + bp).  bf16 operands, f32 accumulate.
    pooled = jnp.tanh(
        jnp.dot(mean.astype(jnp.bfloat16), wp_ref[...],
                preferred_element_type=jnp.float32) + bp_ref[...])

    # MLP head.  nn.Dropout(p=0.25) is the identity in eval mode.
    h0 = jnp.maximum(
        jnp.dot(pooled, w0_ref[...], preferred_element_type=jnp.float32)
        + b0_ref[...], 0.0)                              # (bt, 256)
    tt = jnp.tanh(t_ref[...])                            # (bt, 5)
    # concat(h0, tanh(t)) @ W1  ==  h0 @ W1a + tanh(t) @ W1b   (exact split)
    z1 = (jnp.dot(h0, w1a_ref[...], preferred_element_type=jnp.float32)
          + jnp.dot(tt, w1b_ref[...], preferred_element_type=jnp.float32)
          + b1_ref[...])                                 # (bt, 128)
    h1 = jnp.maximum(z1, 0.0)
    out_ref[...] = (jnp.dot(h1, w2_ref[...],
                            preferred_element_type=jnp.float32)
                    + b2_ref[...])                       # (bt, 128) lane-dense


def timetron_forward(params, input_ids, attention_mask, t):
    B, S = input_ids.shape
    bt = _choose_b_tile(B, S)
    grid = (pl.cdiv(B, bt),)

    def batch_spec(shape):
        return pl.BlockSpec(shape, lambda i: (i, 0))

    def const_spec(shape):
        return pl.BlockSpec(shape, lambda i: (0, 0))

    out = pl.pallas_call(
        timetron_kernel,
        out_shape=jax.ShapeDtypeStruct((B, L2_PAD), jnp.float32),
        grid=grid,
        in_specs=[
            batch_spec((bt, S)),                 # input_ids
            batch_spec((bt, S)),                 # attention_mask (f32)
            batch_spec((bt, T_DIM)),             # t
            const_spec((VOCAB_PAD, HIDDEN)),     # embedding table (resident)
            const_spec((HIDDEN, HIDDEN)),        # wp_t (bf16)
            const_spec((1, HIDDEN)),             # bp
            const_spec((HIDDEN, L0_OUT)),        # w0_t
            const_spec((1, L0_OUT)),             # b0
            const_spec((L0_OUT, L1_PAD)),        # w1a_t (padded)
            const_spec((T_DIM, L1_PAD)),         # w1b_t (padded)
            const_spec((1, L1_PAD)),             # b1    (padded)
            const_spec((L1_PAD, L2_PAD)),        # w2_t  (padded)
            const_spec((1, L2_PAD)),             # b2    (padded)
        ],
        out_specs=batch_spec((bt, L2_PAD)),
        compiler_params=pltpu.CompilerParams(
            dimension_semantics=("parallel",),
            vmem_limit_bytes=32 * 1024 * 1024),
    )(input_ids.astype(jnp.int32), attention_mask.astype(jnp.float32), t,
      params["emb_table"], params["wp_t"], params["bp"],
      params["w0_t"], params["b0"],
      params["w1a_t"], params["w1b_t"], params["b1"],
      params["w2_t"], params["b2"])
    return out[:, :L2_OUT]


# ---------------------------------------------------------------------------
# Parameters (PyTorch (out, in) weights, pre-transposed + lane-padded).
# ---------------------------------------------------------------------------
def make_params(key):
    ks = jax.random.split(key, 9)
    wp = jax.random.normal(ks[0], (HIDDEN, HIDDEN), jnp.float32) * 0.02
    bp = jax.random.normal(ks[1], (1, HIDDEN), jnp.float32) * 0.02
    w0 = jax.random.normal(ks[2], (L0_OUT, HIDDEN), jnp.float32) * 0.02
    b0 = jax.random.normal(ks[3], (1, L0_OUT), jnp.float32) * 0.02
    w1 = jax.random.normal(ks[4], (L1_OUT, L0_OUT + T_DIM), jnp.float32) * 0.02
    b1 = jax.random.normal(ks[5], (1, L1_OUT), jnp.float32) * 0.02
    w2 = jax.random.normal(ks[6], (L2_OUT, L1_OUT), jnp.float32) * 0.02
    b2 = jax.random.normal(ks[7], (1, L2_OUT), jnp.float32) * 0.02
    emb_table = jax.random.normal(ks[8], (VOCAB, HIDDEN), jnp.float32) * 0.02

    def pad_cols(a, n):
        return jnp.pad(a, ((0, 0), (0, n - a.shape[1])))

    def pad_rows(a, n):
        return jnp.pad(a, ((0, n - a.shape[0]), (0, 0)))

    return {
        "emb_table": pad_rows(emb_table, VOCAB_PAD),               # (1024, 768)
        "wp_t": wp.T.astype(jnp.bfloat16),                         # bf16 for MXU
        "bp": bp,
        "w0_t": w0.T, "b0": b0,
        "w1a_t": pad_cols(w1[:, :L0_OUT].T, L1_PAD),               # (256, 128)
        "w1b_t": pad_cols(w1[:, L0_OUT:].T, L1_PAD),               # (5, 128)
        "b1": pad_cols(b1, L1_PAD),                                # (1, 128)
        "w2_t": pad_cols(pad_rows(w2.T, L1_PAD), L2_PAD),          # (128, 128)
        "b2": pad_cols(b2, L2_PAD),                                # (1, 128)
    }


def reference_forward(params, input_ids, attention_mask, t):
    # Pure-JAX reference mirroring the PyTorch forward (with the synthetic BERT).
    emb = jnp.take(params["emb_table"], input_ids, axis=0)
    mask = attention_mask.astype(jnp.float32)
    mean = jnp.sum(emb * mask[:, :, None], axis=1) / jnp.maximum(
        jnp.sum(mask, axis=1, keepdims=True), 1.0)
    pooled = jnp.tanh(mean @ params["wp_t"].astype(jnp.float32) + params["bp"])
    h0 = jax.nn.relu(pooled @ params["w0_t"] + params["b0"])
    z1 = h0 @ params["w1a_t"] + jnp.tanh(t) @ params["w1b_t"] + params["b1"]
    h1 = jax.nn.relu(z1)
    out = h1 @ params["w2_t"] + params["b2"]
    return out[:, :L2_OUT]


if __name__ == "__main__":
    B, S = 2, 8
    key = jax.random.PRNGKey(0)
    k_ids, k_t, k_p = jax.random.split(key, 3)

    input_ids = jax.random.randint(k_ids, (B, S), 0, VOCAB, dtype=jnp.int32)
    attention_mask = jnp.array([[1, 1, 1, 1, 1, 1, 0, 0],
                                [1, 1, 1, 1, 0, 0, 0, 0]], dtype=jnp.int32)
    t = jax.random.normal(k_t, (B, T_DIM), jnp.float32)
    params = make_params(k_p)

    out = timetron_forward(params, input_ids, attention_mask, t)
    out = jax.block_until_ready(out)
    assert out.shape == (B, L2_OUT)

    ref = reference_forward(params, input_ids, attention_mask, t)
    # bf16 pooler matmul -> slightly looser tolerance than pure-f32.
    assert jnp.allclose(out, ref, atol=1e-3, rtol=1e-3), (out, ref)

    print("KERNEL_OK")
</pallas_src>

<mosaic_0001>
module attributes {stable_mosaic.version = 11 : i64} {
  func.func @timetron_kernel(%arg0: i32, %arg1: memref<2x8xi32, #tpu.memory_space<vmem>>, %arg2: memref<2x8xf32, #tpu.memory_space<vmem>>, %arg3: memref<2x5xf32, #tpu.memory_space<vmem>>, %arg4: memref<1024x768xf32, #tpu.memory_space<vmem>>, %arg5: memref<768x768xbf16, #tpu.memory_space<vmem>>, %arg6: memref<1x768xf32, #tpu.memory_space<vmem>>, %arg7: memref<768x256xf32, #tpu.memory_space<vmem>>, %arg8: memref<1x256xf32, #tpu.memory_space<vmem>>, %arg9: memref<256x128xf32, #tpu.memory_space<vmem>>, %arg10: memref<5x128xf32, #tpu.memory_space<vmem>>, %arg11: memref<1x128xf32, #tpu.memory_space<vmem>>, %arg12: memref<128x128xf32, #tpu.memory_space<vmem>>, %arg13: memref<1x128xf32, #tpu.memory_space<vmem>>, %arg14: memref<2x128xf32, #tpu.memory_space<vmem>>) attributes {dimension_semantics = [#tpu.dimension_semantics<parallel>], iteration_bounds = array<i64: 1>, scalar_prefetch = 0 : i64, scratch_operands = 0 : i64, tpu.core_type = #tpu.core_type<tc>, window_params = [{transform_indices = @transform_0, window_bounds = array<i64: 2, 8>}, {transform_indices = @transform_1, window_bounds = array<i64: 2, 8>}, {transform_indices = @transform_2, window_bounds = array<i64: 2, 5>}, {pipeline_mode = #tpu.pipeline_mode<synchronous>, transform_indices = @transform_3, window_bounds = array<i64: 1024, 768>}, {pipeline_mode = #tpu.pipeline_mode<synchronous>, transform_indices = @transform_4, window_bounds = array<i64: 768, 768>}, {pipeline_mode = #tpu.pipeline_mode<synchronous>, transform_indices = @transform_5, window_bounds = array<i64: 1, 768>}, {pipeline_mode = #tpu.pipeline_mode<synchronous>, transform_indices = @transform_6, window_bounds = array<i64: 768, 256>}, {pipeline_mode = #tpu.pipeline_mode<synchronous>, transform_indices = @transform_7, window_bounds = array<i64: 1, 256>}, {pipeline_mode = #tpu.pipeline_mode<synchronous>, transform_indices = @transform_8, window_bounds = array<i64: 256, 128>}, {pipeline_mode = #tpu.pipeline_mode<synchronous>, transform_indices = @transform_9, window_bounds = array<i64: 5, 128>}, {pipeline_mode = #tpu.pipeline_mode<synchronous>, transform_indices = @transform_10, window_bounds = array<i64: 1, 128>}, {pipeline_mode = #tpu.pipeline_mode<synchronous>, transform_indices = @transform_11, window_bounds = array<i64: 128, 128>}, {pipeline_mode = #tpu.pipeline_mode<synchronous>, transform_indices = @transform_12, window_bounds = array<i64: 1, 128>}, {transform_indices = @transform_13, window_bounds = array<i64: 2, 128>}]} {
    %c0 = arith.constant 0 : index
    %c0_0 = arith.constant 0 : index
    %0 = vector.load %arg1[%c0, %c0_0] : memref<2x8xi32, #tpu.memory_space<vmem>>, vector<2x8xi32>
    %c0_1 = arith.constant 0 : index
    %c0_2 = arith.constant 0 : index
    %1 = vector.load %arg2[%c0_1, %c0_2] : memref<2x8xf32, #tpu.memory_space<vmem>>, vector<2x8xf32>
    %cst = arith.constant 5.000000e-01 : f32
    %2 = vector.broadcast %cst : f32 to vector<2x8xf32>
    %3 = arith.cmpf ogt, %1, %2 : vector<2x8xf32>
    %c1000_i32 = arith.constant 1000 : i32
    %4 = vector.broadcast %c1000_i32 : i32 to vector<2x8xi32>
    %5 = arith.select %3, %0, %4 : vector<2x8xi1>, vector<2x8xi32>
    %6 = tpu.iota {dimensions = array<i32: 2>} : vector<2x8x1024xi32>
    %7 = vector.shape_cast %5 : vector<2x8xi32> to vector<2x8x1xi32>
    %8 = vector.broadcast %7 : vector<2x8x1xi32> to vector<2x8x1024xi32>
    %9 = arith.cmpi eq, %8, %6 : vector<2x8x1024xi32>
    %10 = arith.extui %9 : vector<2x8x1024xi1> to vector<2x8x1024xi32>
    %11 = arith.sitofp %10 : vector<2x8x1024xi32> to vector<2x8x1024xf32>
    %cst_3 = arith.constant dense<0.000000e+00> : vector<2x1024xf32>
    %12 = vector.multi_reduction <add>, %11, %cst_3 [1] : vector<2x8x1024xf32> to vector<2x1024xf32>
    %c0_4 = arith.constant 0 : index
    %c0_5 = arith.constant 0 : index
    %13 = vector.load %arg4[%c0_4, %c0_5] : memref<1024x768xf32, #tpu.memory_space<vmem>>, vector<1024x768xf32>
    %cst_6 = arith.constant dense<0.000000e+00> : vector<2x768xf32>
    %14 = tpu.matmul %12, %13, %cst_6 {dimension_numbers = #tpu.dot_dimension_numbers<[1], [0], [0], [1], [0, 0, 1, 1], [], []>} : vector<2x1024xf32>, vector<1024x768xf32>, vector<2x768xf32> -> vector<2x768xf32>
    %cst_7 = arith.constant dense<0.000000e+00> : vector<2xf32>
    %15 = vector.multi_reduction <add>, %1, %cst_7 [1] : vector<2x8xf32> to vector<2xf32>
    %16 = vector.shape_cast %15 : vector<2xf32> to vector<2x1xf32>
    %cst_8 = arith.constant 1.000000e+00 : f32
    %17 = vector.broadcast %cst_8 : f32 to vector<2x1xf32>
    %18 = arith.maximumf %16, %17 : vector<2x1xf32>
    %19 = vector.broadcast %18 : vector<2x1xf32> to vector<2x768xf32>
    %20 = arith.divf %14, %19 : vector<2x768xf32>
    %21 = arith.truncf %20 : vector<2x768xf32> to vector<2x768xbf16>
    %c0_9 = arith.constant 0 : index
    %c0_10 = arith.constant 0 : index
    %22 = vector.load %arg5[%c0_9, %c0_10] : memref<768x768xbf16, #tpu.memory_space<vmem>>, vector<768x768xbf16>
    %cst_11 = arith.constant dense<0.000000e+00> : vector<2x768xf32>
    %23 = tpu.matmul %21, %22, %cst_11 {dimension_numbers = #tpu.dot_dimension_numbers<[1], [0], [0], [1], [0, 0, 1, 1], [], []>} : vector<2x768xbf16>, vector<768x768xbf16>, vector<2x768xf32> -> vector<2x768xf32>
    %c0_12 = arith.constant 0 : index
    %c0_13 = arith.constant 0 : index
    %24 = vector.load %arg6[%c0_12, %c0_13] : memref<1x768xf32, #tpu.memory_space<vmem>>, vector<1x768xf32>
    %25 = vector.broadcast %24 : vector<1x768xf32> to vector<2x768xf32>
    %26 = arith.addf %23, %25 : vector<2x768xf32>
    %27 = math.tanh %26 : vector<2x768xf32>
    %c0_14 = arith.constant 0 : index
    %c0_15 = arith.constant 0 : index
    %28 = vector.load %arg7[%c0_14, %c0_15] : memref<768x256xf32, #tpu.memory_space<vmem>>, vector<768x256xf32>
    %cst_16 = arith.constant dense<0.000000e+00> : vector<2x256xf32>
    %29 = tpu.matmul %27, %28, %cst_16 {dimension_numbers = #tpu.dot_dimension_numbers<[1], [0], [0], [1], [0, 0, 1, 1], [], []>} : vector<2x768xf32>, vector<768x256xf32>, vector<2x256xf32> -> vector<2x256xf32>
    %c0_17 = arith.constant 0 : index
    %c0_18 = arith.constant 0 : index
    %30 = vector.load %arg8[%c0_17, %c0_18] : memref<1x256xf32, #tpu.memory_space<vmem>>, vector<1x256xf32>
    %31 = vector.broadcast %30 : vector<1x256xf32> to vector<2x256xf32>
    %32 = arith.addf %29, %31 : vector<2x256xf32>
    %cst_19 = arith.constant 0.000000e+00 : f32
    %33 = vector.broadcast %cst_19 : f32 to vector<2x256xf32>
    %34 = arith.maximumf %32, %33 : vector<2x256xf32>
    %c0_20 = arith.constant 0 : index
    %c0_21 = arith.constant 0 : index
    %35 = vector.load %arg3[%c0_20, %c0_21] : memref<2x5xf32, #tpu.memory_space<vmem>>, vector<2x5xf32>
    %36 = math.tanh %35 : vector<2x5xf32>
    %c0_22 = arith.constant 0 : index
    %c0_23 = arith.constant 0 : index
    %37 = vector.load %arg9[%c0_22, %c0_23] : memref<256x128xf32, #tpu.memory_space<vmem>>, vector<256x128xf32>
    %cst_24 = arith.constant dense<0.000000e+00> : vector<2x128xf32>
    %38 = tpu.matmul %34, %37, %cst_24 {dimension_numbers = #tpu.dot_dimension_numbers<[1], [0], [0], [1], [0, 0, 1, 1], [], []>} : vector<2x256xf32>, vector<256x128xf32>, vector<2x128xf32> -> vector<2x128xf32>
    %c0_25 = arith.constant 0 : index
    %c0_26 = arith.constant 0 : index
    %39 = vector.load %arg10[%c0_25, %c0_26] : memref<5x128xf32, #tpu.memory_space<vmem>>, vector<5x128xf32>
    %cst_27 = arith.constant dense<0.000000e+00> : vector<2x128xf32>
    %40 = tpu.matmul %36, %39, %cst_27 {dimension_numbers = #tpu.dot_dimension_numbers<[1], [0], [0], [1], [0, 0, 1, 1], [], []>} : vector<2x5xf32>, vector<5x128xf32>, vector<2x128xf32> -> vector<2x128xf32>
    %41 = arith.addf %38, %40 : vector<2x128xf32>
    %c0_28 = arith.constant 0 : index
    %c0_29 = arith.constant 0 : index
    %42 = vector.load %arg11[%c0_28, %c0_29] : memref<1x128xf32, #tpu.memory_space<vmem>>, vector<1x128xf32>
    %43 = vector.broadcast %42 : vector<1x128xf32> to vector<2x128xf32>
    %44 = arith.addf %41, %43 : vector<2x128xf32>
    %cst_30 = arith.constant 0.000000e+00 : f32
    %45 = vector.broadcast %cst_30 : f32 to vector<2x128xf32>
    %46 = arith.maximumf %44, %45 : vector<2x128xf32>
    %c0_31 = arith.constant 0 : index
    %c0_32 = arith.constant 0 : index
    %47 = vector.load %arg12[%c0_31, %c0_32] : memref<128x128xf32, #tpu.memory_space<vmem>>, vector<128x128xf32>
    %cst_33 = arith.constant dense<0.000000e+00> : vector<2x128xf32>
    %48 = tpu.matmul %46, %47, %cst_33 {dimension_numbers = #tpu.dot_dimension_numbers<[1], [0], [0], [1], [0, 0, 1, 1], [], []>} : vector<2x128xf32>, vector<128x128xf32>, vector<2x128xf32> -> vector<2x128xf32>
    %c0_34 = arith.constant 0 : index
    %c0_35 = arith.constant 0 : index
    %49 = vector.load %arg13[%c0_34, %c0_35] : memref<1x128xf32, #tpu.memory_space<vmem>>, vector<1x128xf32>
    %50 = vector.broadcast %49 : vector<1x128xf32> to vector<2x128xf32>
    %51 = arith.addf %48, %50 : vector<2x128xf32>
    %c0_36 = arith.constant 0 : index
    %c0_37 = arith.constant 0 : index
    %52 = vector.load %arg14[%c0_36, %c0_37] : memref<2x128xf32, #tpu.memory_space<vmem>>, vector<2x128xf32>
    tpu.vector_store %arg14[%c0_36, %c0_37], %51 {strides = array<i32>} : memref<2x128xf32, #tpu.memory_space<vmem>>, vector<2x128xf32>,
    return
  }
  func.func @transform_0(%arg0: i32) -> (i32, i32) {
    %c0_i32 = arith.constant 0 : i32
    %c0_i32_0 = arith.constant 0 : i32
    return %arg0, %c0_i32 : i32, i32
  }
  func.func @transform_1(%arg0: i32) -> (i32, i32) {
    %c0_i32 = arith.constant 0 : i32
    %c0_i32_0 = arith.constant 0 : i32
    return %arg0, %c0_i32 : i32, i32
  }
  func.func @transform_2(%arg0: i32) -> (i32, i32) {
    %c0_i32 = arith.constant 0 : i32
    %c0_i32_0 = arith.constant 0 : i32
    return %arg0, %c0_i32 : i32, i32
  }
  func.func @transform_3(%arg0: i32) -> (i32, i32) {
    %c0_i32 = arith.constant 0 : i32
    %c0_i32_0 = arith.constant 0 : i32
    %c0_i32_1 = arith.constant 0 : i32
    return %c0_i32, %c0_i32_0 : i32, i32
  }
  func.func @transform_4(%arg0: i32) -> (i32, i32) {
    %c0_i32 = arith.constant 0 : i32
    %c0_i32_0 = arith.constant 0 : i32
    %c0_i32_1 = arith.constant 0 : i32
    return %c0_i32, %c0_i32_0 : i32, i32
  }
  func.func @transform_5(%arg0: i32) -> (i32, i32) {
    %c0_i32 = arith.constant 0 : i32
    %c0_i32_0 = arith.constant 0 : i32
    %c0_i32_1 = arith.constant 0 : i32
    return %c0_i32, %c0_i32_0 : i32, i32
  }
  func.func @transform_6(%arg0: i32) -> (i32, i32) {
    %c0_i32 = arith.constant 0 : i32
    %c0_i32_0 = arith.constant 0 : i32
    %c0_i32_1 = arith.constant 0 : i32
    return %c0_i32, %c0_i32_0 : i32, i32
  }
  func.func @transform_7(%arg0: i32) -> (i32, i32) {
    %c0_i32 = arith.constant 0 : i32
    %c0_i32_0 = arith.constant 0 : i32
    %c0_i32_1 = arith.constant 0 : i32
    return %c0_i32, %c0_i32_0 : i32, i32
  }
  func.func @transform_8(%arg0: i32) -> (i32, i32) {
    %c0_i32 = arith.constant 0 : i32
    %c0_i32_0 = arith.constant 0 : i32
    %c0_i32_1 = arith.constant 0 : i32
    return %c0_i32, %c0_i32_0 : i32, i32
  }
  func.func @transform_9(%arg0: i32) -> (i32, i32) {
    %c0_i32 = arith.constant 0 : i32
    %c0_i32_0 = arith.constant 0 : i32
    %c0_i32_1 = arith.constant 0 : i32
    return %c0_i32, %c0_i32_0 : i32, i32
  }
  func.func @transform_10(%arg0: i32) -> (i32, i32) {
    %c0_i32 = arith.constant 0 : i32
    %c0_i32_0 = arith.constant 0 : i32
    %c0_i32_1 = arith.constant 0 : i32
    return %c0_i32, %c0_i32_0 : i32, i32
  }
  func.func @transform_11(%arg0: i32) -> (i32, i32) {
    %c0_i32 = arith.constant 0 : i32
    %c0_i32_0 = arith.constant 0 : i32
    %c0_i32_1 = arith.constant 0 : i32
    return %c0_i32, %c0_i32_0 : i32, i32
  }
  func.func @transform_12(%arg0: i32) -> (i32, i32) {
    %c0_i32 = arith.constant 0 : i32
    %c0_i32_0 = arith.constant 0 : i32
    %c0_i32_1 = arith.constant 0 : i32
    return %c0_i32, %c0_i32_0 : i32, i32
  }
  func.func @transform_13(%arg0: i32) -> (i32, i32) {
    %c0_i32 = arith.constant 0 : i32
    %c0_i32_0 = arith.constant 0 : i32
    return %arg0, %c0_i32 : i32, i32
  }
}

</mosaic_0001>

<llo_original>
// kernel: tpu_custom_call.1
$region0: #{tpu_custom_call.1}
  #allocation0 [shape = 'u32[]', space=smem, size = 0x4, offset = 0x4, fixed_abs, tag = 'smem constant byte address 0x4 - core index']
  #allocation1 [shape = 'u32[144,128]{1,0:T(1,128)}', space=vmem, size = 0x12000, scoped, tag = 'internal scratch']
  %s0 = inlined_call_operand.hbm [shape: s32[2,8], index: 0, kind: input, shape index: {}]
  %s1 = inlined_call_operand.hbm [shape: f32[2,8], index: 1, kind: input, shape index: {}]
  %s2 = inlined_call_operand.hbm [shape: f32[2,5], index: 2, kind: input, shape index: {}]
  %s3 = inlined_call_operand.hbm [shape: f32[1024,768], index: 3, kind: input, shape index: {}]
  %s4 = inlined_call_operand.hbm [shape: bf16[768,768], index: 4, kind: input, shape index: {}]
  %s5 = inlined_call_operand.hbm [shape: f32[1,768], index: 5, kind: input, shape index: {}]
  %s6 = inlined_call_operand.hbm [shape: f32[768,256], index: 6, kind: input, shape index: {}]
  %s7 = inlined_call_operand.hbm [shape: f32[1,256], index: 7, kind: input, shape index: {}]
  %s8 = inlined_call_operand.hbm [shape: f32[256,128], index: 8, kind: input, shape index: {}]
  %s9 = inlined_call_operand.hbm [shape: f32[5,128], index: 9, kind: input, shape index: {}]
  %s10 = inlined_call_operand.hbm [shape: f32[1,128], index: 10, kind: input, shape index: {}]
  %s11 = inlined_call_operand.hbm [shape: f32[128,128], index: 11, kind: input, shape index: {}]
  %s12 = inlined_call_operand.hbm [shape: f32[1,128], index: 12, kind: input, shape index: {}]
  %s13 = inlined_call_operand.hbm [shape: f32[2,128], index: 13, kind: output, shape index: {}]
  %s14 = sld [smem:[#allocation0]]
  $region114: #{tpu_custom_call.1} parent=0
    _
  %s16 = ssub.s32 1, %s14
  %s17 = scalar_select 0, %s16, %s14
  $region1: #{tpu_custom_call.1} parent=0
    #allocation2 [shape = 'u8[1024]{0}', space=vmem, size = 0x400, scoped, tag = 'input window, operand 0, single buffered']
    #allocation3 [shape = 's32[1]{0}', space=sflag, size = 0x4, scoped, tag = 'scoped memory for tpu_custom_call.1']
    #allocation4 [shape = 's32[1]{0}', space=sflag, size = 0x4, scoped, tag = 'scoped memory for tpu_custom_call.1']
    #allocation5 [shape = 'u8[1024]{0}', space=vmem, size = 0x400, scoped, tag = 'input window, operand 1, single buffered']
    #allocation6 [shape = 's32[1]{0}', space=sflag, size = 0x4, scoped, tag = 'scoped memory for tpu_custom_call.1']
    #allocation7 [shape = 'u8[1024]{0}', space=vmem, size = 0x400, scoped, tag = 'input window, operand 2, single buffered']
    #allocation8 [shape = 'u8[3145728]{0}', space=vmem, size = 0x300000, scoped, tag = 'input window, operand 3, single buffered']
    #allocation9 [shape = 's32[1]{0}', space=sflag, size = 0x4, scoped, tag = 'scoped memory for tpu_custom_call.1']
    #allocation10 [shape = 'u8[1179648]{0}', space=vmem, size = 0x120000, scoped, tag = 'input window, operand 4, single buffered']
    #allocation11 [shape = 'u8[3072]{0}', space=vmem, size = 0xc00, scoped, tag = 'input window, operand 5, single buffered']
    #allocation12 [shape = 's32[1]{0}', space=sflag, size = 0x4, scoped, tag = 'scoped memory for tpu_custom_call.1']
    #allocation13 [shape = 'u8[786432]{0}', space=vmem, size = 0xc0000, scoped, tag = 'input window, operand 6, single buffered']
    #allocation14 [shape = 'u8[1024]{0}', space=vmem, size = 0x400, scoped, tag = 'input window, operand 7, single buffered']
    #allocation15 [shape = 's32[1]{0}', space=sflag, size = 0x4, scoped, tag = 'scoped memory for tpu_custom_call.1']
    #allocation16 [shape = 'u8[131072]{0}', space=vmem, size = 0x20000, scoped, tag = 'input window, operand 8, single buffered']
    #allocation17 [shape = 'u8[4096]{0}', space=vmem, size = 0x1000, scoped, tag = 'input window, operand 9, single buffered']
    #allocation18 [shape = 's32[1]{0}', space=sflag, size = 0x4, scoped, tag = 'scoped memory for tpu_custom_call.1']
    #allocation19 [shape = 'u8[512]{0}', space=vmem, size = 0x400, scoped, tag = 'input window, operand 10, single buffered']
    #allocation20 [shape = 'u8[65536]{0}', space=vmem, size = 0x10000, scoped, tag = 'input window, operand 11, single buffered']
    #allocation21 [shape = 's32[1]{0}', space=sflag, size = 0x4, scoped, tag = 'scoped memory for tpu_custom_call.1']
    #allocation22 [shape = 'u8[512]{0}', space=vmem, size = 0x400, scoped, tag = 'input window, operand 12, single buffered']
    #allocation23 [shape = 'u8[1024]{0}', space=vmem, size = 0x400, scoped, tag = 'output window, operand 0, single buffered']
    %18 = vsyncpa [#allocation3], 0
    %19 = vsyncpa [#allocation6], 0
    %20 = vsyncpa [#allocation9], 0
    %21 = vsyncpa [#allocation12], 0
    %22 = vsyncpa [#allocation15], 0
    %23 = vsyncpa [#allocation18], 0
    %24 = vsyncpa [#allocation21], 0
    %25 = vsyncpa [#allocation4], 0
    // Predicated region
    $region2: #{tpu_custom_call.1} parent=1 // pred_check
      _
    $region3: #{tpu_custom_call.1} parent=1 // pred_check_branch
      %27 = sbr.rel (0) target = $region5
    $region4: #{tpu_custom_call.1} parent=1 // pred_region
      %s29 = ssub.s32 32, 32
      %30 = vsyncadd [#allocation3], %s29
      %s32 = sshll.u32 [#allocation2], 4
      %s33 = int_to_ptr.vmem [resolvable:$true] %s32
      %35 = dma.hbm_to_vmem [thread:$0]  %s0, 32, %s33, [#allocation3]
    $region5: #{tpu_custom_call.1} parent=1 // pred_fallthru
      _
    // Predicated region
    $region6: #{tpu_custom_call.1} parent=1 // pred_check
      _
    $region7: #{tpu_custom_call.1} parent=1 // pred_check_branch
      %37 = sbr.rel (0) target = $region9
    $region8: #{tpu_custom_call.1} parent=1 // pred_region
      %s39 = ssub.s32 32, 32
      %40 = vsyncadd [#allocation6], %s39
      %s42 = sshll.u32 [#allocation5], 4
      %s43 = int_to_ptr.vmem [resolvable:$true] %s42
      %45 = dma.hbm_to_vmem [thread:$0]  %s1, 32, %s43, [#allocation6]
    $region9: #{tpu_custom_call.1} parent=1 // pred_fallthru
      _
    // Predicated region
    $region10: #{tpu_custom_call.1} parent=1 // pred_check
      _
    $region11: #{tpu_custom_call.1} parent=1 // pred_check_branch
      %47 = sbr.rel (0) target = $region13
    $region12: #{tpu_custom_call.1} parent=1 // pred_region
      %s49 = ssub.s32 32, 32
      %50 = vsyncadd [#allocation6], %s49
      %s52 = sshll.u32 [#allocation7], 4
      %s53 = int_to_ptr.vmem [resolvable:$true] %s52
      %55 = dma.hbm_to_vmem [thread:$0]  %s2, 32, %s53, [#allocation6]
    $region13: #{tpu_custom_call.1} parent=1 // pred_fallthru
      _
    // Predicated region
    $region14: #{tpu_custom_call.1} parent=1 // pred_check
      _
    $region15: #{tpu_custom_call.1} parent=1 // pred_check_branch
      %57 = sbr.rel (0) target = $region17
    $region16: #{tpu_custom_call.1} parent=1 // pred_region
      %s59 = ssub.s32 98304, 98304
      %60 = vsyncadd [#allocation9], %s59
      %s61 = sshll.u32 [#allocation8], 4
      %s62 = int_to_ptr.vmem [resolvable:$true] %s61
      %67 = dma.hbm_to_vmem [thread:$0]  %s3, 98304, %s62, [#allocation9], 768, 768, 48
    $region17: #{tpu_custom_call.1} parent=1 // pred_fallthru
      _
    // Predicated region
    $region18: #{tpu_custom_call.1} parent=1 // pred_check
      _
    $region19: #{tpu_custom_call.1} parent=1 // pred_check_branch
      %69 = sbr.rel (0) target = $region21
    $region20: #{tpu_custom_call.1} parent=1 // pred_region
      %s71 = ssub.s32 36864, 36864
      %72 = vsyncadd [#allocation9], %s71
      %s73 = sshll.u32 [#allocation10], 4
      %s74 = int_to_ptr.vmem [resolvable:$true] %s73
      %79 = dma.hbm_to_vmem [thread:$0]  %s4, 36864, %s74, [#allocation9], 384, 384, 24
    $region21: #{tpu_custom_call.1} parent=1 // pred_fallthru
      _
    // Predicated region
    $region22: #{tpu_custom_call.1} parent=1 // pred_check
      _
    $region23: #{tpu_custom_call.1} parent=1 // pred_check_branch
      %81 = sbr.rel (0) target = $region25
    $region24: #{tpu_custom_call.1} parent=1 // pred_region
      %s83 = ssub.s32 96, 96
      %84 = vsyncadd [#allocation12], %s83
      %s86 = sshll.u32 [#allocation11], 4
      %s87 = int_to_ptr.vmem [resolvable:$true] %s86
      %89 = dma.hbm_to_vmem [thread:$0]  %s5, 96, %s87, [#allocation12]
    $region25: #{tpu_custom_call.1} parent=1 // pred_fallthru
      _
    // Predicated region
    $region26: #{tpu_custom_call.1} parent=1 // pred_check
      _
    $region27: #{tpu_custom_call.1} parent=1 // pred_check_branch
      %91 = sbr.rel (0) target = $region29
    $region28: #{tpu_custom_call.1} parent=1 // pred_region
      %s93 = ssub.s32 24576, 24576
      %94 = vsyncadd [#allocation12], %s93
      %s95 = sshll.u32 [#allocation13], 4
      %s96 = int_to_ptr.vmem [resolvable:$true] %s95
      %101 = dma.hbm_to_vmem [thread:$0]  %s6, 24576, %s96, [#allocation12], 256, 256, 16
    $region29: #{tpu_custom_call.1} parent=1 // pred_fallthru
      _
    // Predicated region
    $region30: #{tpu_custom_call.1} parent=1 // pred_check
      _
    $region31: #{tpu_custom_call.1} parent=1 // pred_check_branch
      %103 = sbr.rel (0) target = $region33
    $region32: #{tpu_custom_call.1} parent=1 // pred_region
      %s105 = ssub.s32 32, 32
      %106 = vsyncadd [#allocation15], %s105
      %s108 = sshll.u32 [#allocation14], 4
      %s109 = int_to_ptr.vmem [resolvable:$true] %s108
      %111 = dma.hbm_to_vmem [thread:$0]  %s7, 32, %s109, [#allocation15]
    $region33: #{tpu_custom_call.1} parent=1 // pred_fallthru
      _
    // Predicated region
    $region34: #{tpu_custom_call.1} parent=1 // pred_check
      _
    $region35: #{tpu_custom_call.1} parent=1 // pred_check_branch
      %113 = sbr.rel (0) target = $region37
    $region36: #{tpu_custom_call.1} parent=1 // pred_region
      %s115 = ssub.s32 4096, 4096
      %116 = vsyncadd [#allocation15], %s115
      %s117 = sshll.u32 [#allocation16], 4
      %s118 = int_to_ptr.vmem [resolvable:$true] %s117
      %123 = dma.hbm_to_vmem [thread:$0]  %s8, 4096, %s118, [#allocation15], 128, 128, 8
    $region37: #{tpu_custom_call.1} parent=1 // pred_fallthru
      _
    // Predicated region
    $region38: #{tpu_custom_call.1} parent=1 // pred_check
      _
    $region39: #{tpu_custom_call.1} parent=1 // pred_check_branch
      %125 = sbr.rel (0) target = $region41
    $region40: #{tpu_custom_call.1} parent=1 // pred_region
      %s127 = ssub.s32 128, 128
      %128 = vsyncadd [#allocation18], %s127
      %s130 = sshll.u32 [#allocation17], 4
      %s131 = int_to_ptr.vmem [resolvable:$true] %s130
      %133 = dma.hbm_to_vmem [thread:$0]  %s9, 128, %s131, [#allocation18]
    $region41: #{tpu_custom_call.1} parent=1 // pred_fallthru
      _
    // Predicated region
    $region42: #{tpu_custom_call.1} parent=1 // pred_check
      _
    $region43: #{tpu_custom_call.1} parent=1 // pred_check_branch
      %135 = sbr.rel (0) target = $region45
    $region44: #{tpu_custom_call.1} parent=1 // pred_region
      %s137 = ssub.s32 16, 16
      %138 = vsyncadd [#allocation18], %s137
      %s140 = sshll.u32 [#allocation19], 4
      %s141 = int_to_ptr.vmem [resolvable:$true] %s140
      %143 = dma.hbm_to_vmem [thread:$0]  %s10, 16, %s141, [#allocation18]
    $region45: #{tpu_custom_call.1} parent=1 // pred_fallthru
      _
    // Predicated region
    $region46: #{tpu_custom_call.1} parent=1 // pred_check
      _
    $region47: #{tpu_custom_call.1} parent=1 // pred_check_branch
      %145 = sbr.rel (0) target = $region49
    $region48: #{tpu_custom_call.1} parent=1 // pred_region
      %s147 = ssub.s32 2048, 2048
      %148 = vsyncadd [#allocation21], %s147
      %s149 = sshll.u32 [#allocation20], 4
      %s150 = int_to_ptr.vmem [resolvable:$true] %s149
      %155 = dma.hbm_to_vmem [thread:$0]  %s11, 2048, %s150, [#allocation21], 128, 128, 8
    $region49: #{tpu_custom_call.1} parent=1 // pred_fallthru
      _
    // Predicated region
    $region50: #{tpu_custom_call.1} parent=1 // pred_check
      _
    $region51: #{tpu_custom_call.1} parent=1 // pred_check_branch
      %157 = sbr.rel (0) target = $region53
    $region52: #{tpu_custom_call.1} parent=1 // pred_region
      %s159 = ssub.s32 16, 16
      %160 = vsyncadd [#allocation21], %s159
      %s162 = sshll.u32 [#allocation22], 4
      %s163 = int_to_ptr.vmem [resolvable:$true] %s162
      %165 = dma.hbm_to_vmem [thread:$0]  %s12, 16, %s163, [#allocation21]
    $region53: #{tpu_custom_call.1} parent=1 // pred_fallthru
      _
    // Predicated region
    $region54: #{tpu_custom_call.1} parent=1 // pred_check
      _
    $region55: #{tpu_custom_call.1} parent=1 // pred_check_branch
      %167 = sbr.rel (0) target = $region57
    $region56: #{tpu_custom_call.1} parent=1 // pred_region
      %168 = dma.done [#allocation3], 32
    $region57: #{tpu_custom_call.1} parent=1 // pred_fallthru
      _
    // Predicated region
    $region58: #{tpu_custom_call.1} parent=1 // pred_check
      _
    $region59: #{tpu_custom_call.1} parent=1 // pred_check_branch
      %170 = sbr.rel (0) target = $region61
    $region60: #{tpu_custom_call.1} parent=1 // pred_region
      %171 = dma.done [#allocation6], 32
    $region61: #{tpu_custom_call.1} parent=1 // pred_fallthru
      _
    // Predicated region
    $region62: #{tpu_custom_call.1} parent=1 // pred_check
      _
    $region63: #{tpu_custom_call.1} parent=1 // pred_check_branch
      %173 = sbr.rel (0) target = $region65
    $region64: #{tpu_custom_call.1} parent=1 // pred_region
      %174 = dma.done [#allocation6], 32
    $region65: #{tpu_custom_call.1} parent=1 // pred_fallthru
      _
    // Predicated region
    $region66: #{tpu_custom_call.1} parent=1 // pred_check
      _
    $region67: #{tpu_custom_call.1} parent=1 // pred_check_branch
      %176 = sbr.rel (0) target = $region69
    $region68: #{tpu_custom_call.1} parent=1 // pred_region
      %177 = dma.done [#allocation9], 98304
    $region69: #{tpu_custom_call.1} parent=1 // pred_fallthru
      _
    // Predicated region
    $region70: #{tpu_custom_call.1} parent=1 // pred_check
      _
    $region71: #{tpu_custom_call.1} parent=1 // pred_check_branch
      %179 = sbr.rel (0) target = $region73
    $region72: #{tpu_custom_call.1} parent=1 // pred_region
      %180 = dma.done [#allocation9], 36864
    $region73: #{tpu_custom_call.1} parent=1 // pred_fallthru
      _
    // Predicated region
    $region74: #{tpu_custom_call.1} parent=1 // pred_check
      _
    $region75: #{tpu_custom_call.1} parent=1 // pred_check_branch
      %182 = sbr.rel (0) target = $region77
    $region76: #{tpu_custom_call.1} parent=1 // pred_region
      %183 = dma.done [#allocation12], 96
    $region77: #{tpu_custom_call.1} parent=1 // pred_fallthru
      _
    // Predicated region
    $region78: #{tpu_custom_call.1} parent=1 // pred_check
      _
    $region79: #{tpu_custom_call.1} parent=1 // pred_check_branch
      %185 = sbr.rel (0) target = $region81
    $region80: #{tpu_custom_call.1} parent=1 // pred_region
      %186 = dma.done [#allocation12], 24576
    $region81: #{tpu_custom_call.1} parent=1 // pred_fallthru
      _
    // Predicated region
    $region82: #{tpu_custom_call.1} parent=1 // pred_check
      _
    $region83: #{tpu_custom_call.1} parent=1 // pred_check_branch
      %188 = sbr.rel (0) target = $region85
    $region84: #{tpu_custom_call.1} parent=1 // pred_region
      %189 = dma.done [#allocation15], 32
    $region85: #{tpu_custom_call.1} parent=1 // pred_fallthru
      _
    // Predicated region
    $region86: #{tpu_custom_call.1} parent=1 // pred_check
      _
    $region87: #{tpu_custom_call.1} parent=1 // pred_check_branch
      %191 = sbr.rel (0) target = $region89
    $region88: #{tpu_custom_call.1} parent=1 // pred_region
      %192 = dma.done [#allocation15], 4096
    $region89: #{tpu_custom_call.1} parent=1 // pred_fallthru
      _
    // Predicated region
    $region90: #{tpu_custom_call.1} parent=1 // pred_check
      _
    $region91: #{tpu_custom_call.1} parent=1 // pred_check_branch
      %194 = sbr.rel (0) target = $region93
    $region92: #{tpu_custom_call.1} parent=1 // pred_region
      %195 = dma.done [#allocation18], 128
    $region93: #{tpu_custom_call.1} parent=1 // pred_fallthru
      _
    // Predicated region
    $region94: #{tpu_custom_call.1} parent=1 // pred_check
      _
    $region95: #{tpu_custom_call.1} parent=1 // pred_check_branch
      %197 = sbr.rel (0) target = $region97
    $region96: #{tpu_custom_call.1} parent=1 // pred_region
      %198 = dma.done [#allocation18], 16
    $region97: #{tpu_custom_call.1} parent=1 // pred_fallthru
      _
    // Predicated region
    $region98: #{tpu_custom_call.1} parent=1 // pred_check
      _
    $region99: #{tpu_custom_call.1} parent=1 // pred_check_branch
      %200 = sbr.rel (0) target = $region101
    $region100: #{tpu_custom_call.1} parent=1 // pred_region
      %201 = dma.done [#allocation21], 2048
    $region101: #{tpu_custom_call.1} parent=1 // pred_fallthru
      _
    // Predicated region
    $region102: #{tpu_custom_call.1} parent=1 // pred_check
      _
    $region103: #{tpu_custom_call.1} parent=1 // pred_check_branch
      %203 = sbr.rel (0) target = $region105
    $region104: #{tpu_custom_call.1} parent=1 // pred_region
      %204 = dma.done [#allocation21], 16
    $region105: #{tpu_custom_call.1} parent=1 // pred_fallthru
      _
    %v205 = vld [vmem:[#allocation2] sm:$0x3]
    %v206 = vld [vmem:[#allocation5] sm:$0x3]
    %vm207 = vcmp.gt.f32.partialorder %v206, 0.5
    %v208 = vsel %vm207, %v205, 1000
    %v209 = vlaneseq
    %v210 = vand.u32 %v209, 127
    %v211 = vadd.s32 %v210, 128
    %v212 = vadd.s32 %v210, 256
    %v213 = vadd.s32 %v210, 384
    %v214 = vadd.s32 %v210, 512
    %v215 = vadd.s32 %v210, 640
    %v216 = vadd.s32 %v210, 768
    %v217 = vadd.s32 %v210, 896
    %v218 = vlaneseq
    %v219 = vshrl.u32 %v218, 7
    %v220 = vsub.s32 0, %v219
    %v221 = vrot.slane %v208, %v220
    %223 = vbcast.lane.b32.xlu0 %v221, 256
    %v224 = vpop.permute.xlu0 %223
    %v225 = vlaneseq
    %v226 = vshrl.u32 %v225, 7
    %v227 = vsub.s32 1, %v226
    %v228 = vrot.slane %v208, %v227
    %230 = vbcast.lane.b32.xlu0 %v228, 256
    %v231 = vpop.permute.xlu0 %230
    %vm232 = vcmp.eq.s32.totalorder %v224, %v210
    %vm233 = vcmp.eq.s32.totalorder %v224, %v211
    %vm234 = vcmp.eq.s32.totalorder %v224, %v212
    %vm235 = vcmp.eq.s32.totalorder %v224, %v213
    %vm236 = vcmp.eq.s32.totalorder %v224, %v214
    %vm237 = vcmp.eq.s32.totalorder %v224, %v215
    %vm238 = vcmp.eq.s32.totalorder %v224, %v216
    %vm239 = vcmp.eq.s32.totalorder %v224, %v217
    %vm240 = vcmp.eq.s32.totalorder %v231, %v210
    %vm241 = vcmp.eq.s32.totalorder %v231, %v211
    %vm242 = vcmp.eq.s32.totalorder %v231, %v212
    %vm243 = vcmp.eq.s32.totalorder %v231, %v213
    %vm244 = vcmp.eq.s32.totalorder %v231, %v214
    %vm245 = vcmp.eq.s32.totalorder %v231, %v215
    %vm246 = vcmp.eq.s32.totalorder %v231, %v216
    %vm247 = vcmp.eq.s32.totalorder %v231, %v217
    %v248 = vsel %vm232, 1, 0
    %v249 = vsel %vm233, 1, 0
    %v250 = vsel %vm234, 1, 0
    %v251 = vsel %vm235, 1, 0
    %v252 = vsel %vm236, 1, 0
    %v253 = vsel %vm237, 1, 0
    %v254 = vsel %vm238, 1, 0
    %v255 = vsel %vm239, 1, 0
    %v256 = vsel %vm240, 1, 0
    %v257 = vsel %vm241, 1, 0
    %v258 = vsel %vm242, 1, 0
    %v259 = vsel %vm243, 1, 0
    %v260 = vsel %vm244, 1, 0
    %v261 = vsel %vm245, 1, 0
    %v262 = vsel %vm246, 1, 0
    %v263 = vsel %vm247, 1, 0
    %v264 = vcvt.s32.f32 %v248
    %v265 = vcvt.s32.f32 %v249
    %v266 = vcvt.s32.f32 %v250
    %v267 = vcvt.s32.f32 %v251
    %v268 = vcvt.s32.f32 %v252
    %v269 = vcvt.s32.f32 %v253
    %v270 = vcvt.s32.f32 %v254
    %v271 = vcvt.s32.f32 %v255
    %v272 = vcvt.s32.f32 %v256
    %v273 = vcvt.s32.f32 %v257
    %v274 = vcvt.s32.f32 %v258
    %v275 = vcvt.s32.f32 %v259
    %v276 = vcvt.s32.f32 %v260
    %v277 = vcvt.s32.f32 %v261
    %v278 = vcvt.s32.f32 %v262
    %v279 = vcvt.s32.f32 %v263
    %v280 = vrot.slane %v264, 4
    %v281 = vadd.f32 %v264, %v280
    %v282 = vrot.slane %v281, 2
    %v283 = vadd.f32 %v281, %v282
    %v284 = vrot.slane %v283, 1
    %v285 = vadd.f32 %v283, %v284
    %v286 = vrot.slane %v265, 4
    %v287 = vadd.f32 %v265, %v286
    %v288 = vrot.slane %v287, 2
    %v289 = vadd.f32 %v287, %v288
    %v290 = vrot.slane %v289, 1
    %v291 = vadd.f32 %v289, %v290
    %v292 = vrot.slane %v266, 4
    %v293 = vadd.f32 %v266, %v292
    %v294 = vrot.slane %v293, 2
    %v295 = vadd.f32 %v293, %v294
    %v296 = vrot.slane %v295, 1
    %v297 = vadd.f32 %v295, %v296
    %v298 = vrot.slane %v267, 4
    %v299 = vadd.f32 %v267, %v298
    %v300 = vrot.slane %v299, 2
    %v301 = vadd.f32 %v299, %v300
    %v302 = vrot.slane %v301, 1
    %v303 = vadd.f32 %v301, %v302
    %v304 = vrot.slane %v268, 4
    %v305 = vadd.f32 %v268, %v304
    %v306 = vrot.slane %v305, 2
    %v307 = vadd.f32 %v305, %v306
    %v308 = vrot.slane %v307, 1
    %v309 = vadd.f32 %v307, %v308
    %v310 = vrot.slane %v269, 4
    %v311 = vadd.f32 %v269, %v310
    %v312 = vrot.slane %v311, 2
    %v313 = vadd.f32 %v311, %v312
    %v314 = vrot.slane %v313, 1
    %v315 = vadd.f32 %v313, %v314
    %v316 = vrot.slane %v270, 4
    %v317 = vadd.f32 %v270, %v316
    %v318 = vrot.slane %v317, 2
    %v319 = vadd.f32 %v317, %v318
    %v320 = vrot.slane %v319, 1
    %v321 = vadd.f32 %v319, %v320
    %v322 = vrot.slane %v271, 4
    %v323 = vadd.f32 %v271, %v322
    %v324 = vrot.slane %v323, 2
    %v325 = vadd.f32 %v323, %v324
    %v326 = vrot.slane %v325, 1
    %v327 = vadd.f32 %v325, %v326
    %v328 = vrot.slane %v272, 4
    %v329 = vadd.f32 %v272, %v328
    %v330 = vrot.slane %v329, 2
    %v331 = vadd.f32 %v329, %v330
    %v332 = vrot.slane %v331, 1
    %v333 = vadd.f32 %v331, %v332
    %v334 = vrot.slane %v273, 4
    %v335 = vadd.f32 %v273, %v334
    %v336 = vrot.slane %v335, 2
    %v337 = vadd.f32 %v335, %v336
    %v338 = vrot.slane %v337, 1
    %v339 = vadd.f32 %v337, %v338
    %v340 = vrot.slane %v274, 4
    %v341 = vadd.f32 %v274, %v340
    %v342 = vrot.slane %v341, 2
    %v343 = vadd.f32 %v341, %v342
    %v344 = vrot.slane %v343, 1
    %v345 = vadd.f32 %v343, %v344
    %v346 = vrot.slane %v275, 4
    %v347 = vadd.f32 %v275, %v346
    %v348 = vrot.slane %v347, 2
    %v349 = vadd.f32 %v347, %v348
    %v350 = vrot.slane %v349, 1
    %v351 = vadd.f32 %v349, %v350
    %v352 = vrot.slane %v276, 4
    %v353 = vadd.f32 %v276, %v352
    %v354 = vrot.slane %v353, 2
    %v355 = vadd.f32 %v353, %v354
    %v356 = vrot.slane %v355, 1
    %v357 = vadd.f32 %v355, %v356
    %v358 = vrot.slane %v277, 4
    %v359 = vadd.f32 %v277, %v358
    %v360 = vrot.slane %v359, 2
    %v361 = vadd.f32 %v359, %v360
    %v362 = vrot.slane %v361, 1
    %v363 = vadd.f32 %v361, %v362
    %v364 = vrot.slane %v278, 4
    %v365 = vadd.f32 %v278, %v364
    %v366 = vrot.slane %v365, 2
    %v367 = vadd.f32 %v365, %v366
    %v368 = vrot.slane %v367, 1
    %v369 = vadd.f32 %v367, %v368
    %v370 = vrot.slane %v279, 4
    %v371 = vadd.f32 %v279, %v370
    %v372 = vrot.slane %v371, 2
    %v373 = vadd.f32 %v371, %v372
    %v374 = vrot.slane %v373, 1
    %v375 = vadd.f32 %v373, %v374
    %v376 = vld [vmem:[#allocation8] sm:$0xff]
    %v377 = vld [vmem:[#allocation8 + $0x8] sm:$0xff]
    %v378 = vld [vmem:[#allocation8 + $0x10] sm:$0xff]
    %v379 = vld [vmem:[#allocation8 + $0x18] sm:$0xff]
    %v380 = vld [vmem:[#allocation8 + $0x20] sm:$0xff]
    %v381 = vld [vmem:[#allocation8 + $0x28] sm:$0xff]
    %v382 = vld [vmem:[#allocation8 + $0x30] sm:$0xff]
    %v383 = vld [vmem:[#allocation8 + $0x38] sm:$0xff]
    %v384 = vld [vmem:[#allocation8 + $0x40] sm:$0xff]
    %v385 = vld [vmem:[#allocation8 + $0x48] sm:$0xff]
    %v386 = vld [vmem:[#allocation8 + $0x50] sm:$0xff]
    %v387 = vld [vmem:[#allocation8 + $0x58] sm:$0xff]
    %v388 = vld [vmem:[#allocation8 + $0x60] sm:$0xff]
    %v389 = vld [vmem:[#allocation8 + $0x68] sm:$0xff]
    %v390 = vld [vmem:[#allocation8 + $0x70] sm:$0xff]
    %v391 = vld [vmem:[#allocation8 + $0x78] sm:$0xff]
    %v392 = vld [vmem:[#allocation8 + $0x80] sm:$0xff]
    %v393 = vld [vmem:[#allocation8 + $0x88] sm:$0xff]
    %v394 = vld [vmem:[#allocation8 + $0x90] sm:$0xff]
    %v395 = vld [vmem:[#allocation8 + $0x98] sm:$0xff]
    %v396 = vld [vmem:[#allocation8 + $0xa0] sm:$0xff]
    %v397 = vld [vmem:[#allocation8 + $0xa8] sm:$0xff]
    %v398 = vld [vmem:[#allocation8 + $0xb0] sm:$0xff]
    %v399 = vld [vmem:[#allocation8 + $0xb8] sm:$0xff]
    %v400 = vld [vmem:[#allocation8 + $0xc0] sm:$0xff]
    %v401 = vld [vmem:[#allocation8 + $0xc8] sm:$0xff]
    %v402 = vld [vmem:[#allocation8 + $0xd0] sm:$0xff]
    %v403 = vld [vmem:[#allocation8 + $0xd8] sm:$0xff]
    %v404 = vld [vmem:[#allocation8 + $0xe0] sm:$0xff]
    %v405 = vld [vmem:[#allocation8 + $0xe8] sm:$0xff]
    %v406 = vld [vmem:[#allocation8 + $0xf0] sm:$0xff]
    %v407 = vld [vmem:[#allocation8 + $0xf8] sm:$0xff]
    %v408 = vld [vmem:[#allocation8 + $0x100] sm:$0xff]
    %v409 = vld [vmem:[#allocation8 + $0x108] sm:$0xff]
    %v410 = vld [vmem:[#allocation8 + $0x110] sm:$0xff]
    %v411 = vld [vmem:[#allocation8 + $0x118] sm:$0xff]
    %v412 = vld [vmem:[#allocation8 + $0x120] sm:$0xff]
    %v413 = vld [vmem:[#allocation8 + $0x128] sm:$0xff]
    %v414 = vld [vmem:[#allocation8 + $0x130] sm:$0xff]
    %v415 = vld [vmem:[#allocation8 + $0x138] sm:$0xff]
    %v416 = vld [vmem:[#allocation8 + $0x140] sm:$0xff]
    %v417 = vld [vmem:[#allocation8 + $0x148] sm:$0xff]
    %v418 = vld [vmem:[#allocation8 + $0x150] sm:$0xff]
    %v419 = vld [vmem:[#allocation8 + $0x158] sm:$0xff]
    %v420 = vld [vmem:[#allocation8 + $0x160] sm:$0xff]
    %v421 = vld [vmem:[#allocation8 + $0x168] sm:$0xff]
    %v422 = vld [vmem:[#allocation8 + $0x170] sm:$0xff]
    %v423 = vld [vmem:[#allocation8 + $0x178] sm:$0xff]
    %v424 = vld [vmem:[#allocation8 + $0x180] sm:$0xff]
    %v425 = vld [vmem:[#allocation8 + $0x188] sm:$0xff]
    %v426 = vld [vmem:[#allocation8 + $0x190] sm:$0xff]
    %v427 = vld [vmem:[#allocation8 + $0x198] sm:$0xff]
    %v428 = vld [vmem:[#allocation8 + $0x1a0] sm:$0xff]
    %v429 = vld [vmem:[#allocation8 + $0x1a8] sm:$0xff]
    %v430 = vld [vmem:[#allocation8 + $0x1b0] sm:$0xff]
    %v431 = vld [vmem:[#allocation8 + $0x1b8] sm:$0xff]
    %v432 = vld [vmem:[#allocation8 + $0x1c0] sm:$0xff]
    %v433 = vld [vmem:[#allocation8 + $0x1c8] sm:$0xff]
    %v434 = vld [vmem:[#allocation8 + $0x1d0] sm:$0xff]
    %v435 = vld [vmem:[#allocation8 + $0x1d8] sm:$0xff]
    %v436 = vld [vmem:[#allocation8 + $0x1e0] sm:$0xff]
    %v437 = vld [vmem:[#allocation8 + $0x1e8] sm:$0xff]
    %v438 = vld [vmem:[#allocation8 + $0x1f0] sm:$0xff]
    %v439 = vld [vmem:[#allocation8 + $0x1f8] sm:$0xff]
    %v440 = vld [vmem:[#allocation8 + $0x200] sm:$0xff]
    %v441 = vld [vmem:[#allocation8 + $0x208] sm:$0xff]
    %v442 = vld [vmem:[#allocation8 + $0x210] sm:$0xff]
    %v443 = vld [vmem:[#allocation8 + $0x218] sm:$0xff]
    %v444 = vld [vmem:[#allocation8 + $0x220] sm:$0xff]
    %v445 = vld [vmem:[#allocation8 + $0x228] sm:$0xff]
    %v446 = vld [vmem:[#allocation8 + $0x230] sm:$0xff]
    %v447 = vld [vmem:[#allocation8 + $0x238] sm:$0xff]
    %v448 = vld [vmem:[#allocation8 + $0x240] sm:$0xff]
    %v449 = vld [vmem:[#allocation8 + $0x248] sm:$0xff]
    %v450 = vld [vmem:[#allocation8 + $0x250] sm:$0xff]
    %v451 = vld [vmem:[#allocation8 + $0x258] sm:$0xff]
    %v452 = vld [vmem:[#allocation8 + $0x260] sm:$0xff]
    %v453 = vld [vmem:[#allocation8 + $0x268] sm:$0xff]
    %v454 = vld [vmem:[#allocation8 + $0x270] sm:$0xff]
    %v455 = vld [vmem:[#allocation8 + $0x278] sm:$0xff]
    %v456 = vld [vmem:[#allocation8 + $0x280] sm:$0xff]
    %v457 = vld [vmem:[#allocation8 + $0x288] sm:$0xff]
    %v458 = vld [vmem:[#allocation8 + $0x290] sm:$0xff]
    %v459 = vld [vmem:[#allocation8 + $0x298] sm:$0xff]
    %v460 = vld [vmem:[#allocation8 + $0x2a0] sm:$0xff]
    %v461 = vld [vmem:[#allocation8 + $0x2a8] sm:$0xff]
    %v462 = vld [vmem:[#allocation8 + $0x2b0] sm:$0xff]
    %v463 = vld [vmem:[#allocation8 + $0x2b8] sm:$0xff]
    %v464 = vld [vmem:[#allocation8 + $0x2c0] sm:$0xff]
    %v465 = vld [vmem:[#allocation8 + $0x2c8] sm:$0xff]
    %v466 = vld [vmem:[#allocation8 + $0x2d0] sm:$0xff]
    %v467 = vld [vmem:[#allocation8 + $0x2d8] sm:$0xff]
    %v468 = vld [vmem:[#allocation8 + $0x2e0] sm:$0xff]
    %v469 = vld [vmem:[#allocation8 + $0x2e8] sm:$0xff]
    %v470 = vld [vmem:[#allocation8 + $0x2f0] sm:$0xff]
    %v471 = vld [vmem:[#allocation8 + $0x2f8] sm:$0xff]
    %v472 = vld [vmem:[#allocation8 + $0x300] sm:$0xff]
    %v473 = vld [vmem:[#allocation8 + $0x308] sm:$0xff]
    %v474 = vld [vmem:[#allocation8 + $0x310] sm:$0xff]
    %v475 = vld [vmem:[#allocation8 + $0x318] sm:$0xff]
    %v476 = vld [vmem:[#allocation8 + $0x320] sm:$0xff]
    %v477 = vld [vmem:[#allocation8 + $0x328] sm:$0xff]
    %v478 = vld [vmem:[#allocation8 + $0x330] sm:$0xff]
    %v479 = vld [vmem:[#allocation8 + $0x338] sm:$0xff]
    %v480 = vld [vmem:[#allocation8 + $0x340] sm:$0xff]
    %v481 = vld [vmem:[#allocation8 + $0x348] sm:$0xff]
    %v482 = vld [vmem:[#allocation8 + $0x350] sm:$0xff]
    %v483 = vld [vmem:[#allocation8 + $0x358] sm:$0xff]
    %v484 = vld [vmem:[#allocation8 + $0x360] sm:$0xff]
    %v485 = vld [vmem:[#allocation8 + $0x368] sm:$0xff]
    %v486 = vld [vmem:[#allocation8 + $0x370] sm:$0xff]
    %v487 = vld [vmem:[#allocation8 + $0x378] sm:$0xff]
    %v488 = vld [vmem:[#allocation8 + $0x380] sm:$0xff]
    %v489 = vld [vmem:[#allocation8 + $0x388] sm:$0xff]
    %v490 = vld [vmem:[#allocation8 + $0x390] sm:$0xff]
    %v491 = vld [vmem:[#allocation8 + $0x398] sm:$0xff]
    %v492 = vld [vmem:[#allocation8 + $0x3a0] sm:$0xff]
    %v493 = vld [vmem:[#allocation8 + $0x3a8] sm:$0xff]
    %v494 = vld [vmem:[#allocation8 + $0x3b0] sm:$0xff]
    %v495 = vld [vmem:[#allocation8 + $0x3b8] sm:$0xff]
    %v496 = vld [vmem:[#allocation8 + $0x3c0] sm:$0xff]
    %v497 = vld [vmem:[#allocation8 + $0x3c8] sm:$0xff]
    %v498 = vld [vmem:[#allocation8 + $0x3d0] sm:$0xff]
    %v499 = vld [vmem:[#allocation8 + $0x3d8] sm:$0xff]
    %v500 = vld [vmem:[#allocation8 + $0x3e0] sm:$0xff]
    %v501 = vld [vmem:[#allocation8 + $0x3e8] sm:$0xff]
    %v502 = vld [vmem:[#allocation8 + $0x3f0] sm:$0xff]
    %v503 = vld [vmem:[#allocation8 + $0x3f8] sm:$0xff]
    %v504 = vld [vmem:[#allocation8 + $0x400] sm:$0xff]
    %v505 = vld [vmem:[#allocation8 + $0x408] sm:$0xff]
    %v506 = vld [vmem:[#allocation8 + $0x410] sm:$0xff]
    %v507 = vld [vmem:[#allocation8 + $0x418] sm:$0xff]
    %v508 = vld [vmem:[#allocation8 + $0x420] sm:$0xff]
    %v509 = vld [vmem:[#allocation8 + $0x428] sm:$0xff]
    %v510 = vld [vmem:[#allocation8 + $0x430] sm:$0xff]
    %v511 = vld [vmem:[#allocation8 + $0x438] sm:$0xff]
    %v512 = vld [vmem:[#allocation8 + $0x440] sm:$0xff]
    %v513 = vld [vmem:[#allocation8 + $0x448] sm:$0xff]
    %v514 = vld [vmem:[#allocation8 + $0x450] sm:$0xff]
    %v515 = vld [vmem:[#allocation8 + $0x458] sm:$0xff]
    %v516 = vld [vmem:[#allocation8 + $0x460] sm:$0xff]
    %v517 = vld [vmem:[#allocation8 + $0x468] sm:$0xff]
    %v518 = vld [vmem:[#allocation8 + $0x470] sm:$0xff]
    %v519 = vld [vmem:[#allocation8 + $0x478] sm:$0xff]
    %v520 = vld [vmem:[#allocation8 + $0x480] sm:$0xff]
    %v521 = vld [vmem:[#allocation8 + $0x488] sm:$0xff]
    %v522 = vld [vmem:[#allocation8 + $0x490] sm:$0xff]
    %v523 = vld [vmem:[#allocation8 + $0x498] sm:$0xff]
    %v524 = vld [vmem:[#allocation8 + $0x4a0] sm:$0xff]
    %v525 = vld [vmem:[#allocation8 + $0x4a8] sm:$0xff]
    %v526 = vld [vmem:[#allocation8 + $0x4b0] sm:$0xff]
    %v527 = vld [vmem:[#allocation8 + $0x4b8] sm:$0xff]
    %v528 = vld [vmem:[#allocation8 + $0x4c0] sm:$0xff]
    %v529 = vld [vmem:[#allocation8 + $0x4c8] sm:$0xff]
    %v530 = vld [vmem:[#allocation8 + $0x4d0] sm:$0xff]
    %v531 = vld [vmem:[#allocation8 + $0x4d8] sm:$0xff]
    %v532 = vld [vmem:[#allocation8 + $0x4e0] sm:$0xff]
    %v533 = vld [vmem:[#allocation8 + $0x4e8] sm:$0xff]
    %v534 = vld [vmem:[#allocation8 + $0x4f0] sm:$0xff]
    %v535 = vld [vmem:[#allocation8 + $0x4f8] sm:$0xff]
    %v536 = vld [vmem:[#allocation8 + $0x500] sm:$0xff]
    %v537 = vld [vmem:[#allocation8 + $0x508] sm:$0xff]
    %v538 = vld [vmem:[#allocation8 + $0x510] sm:$0xff]
    %v539 = vld [vmem:[#allocation8 + $0x518] sm:$0xff]
    %v540 = vld [vmem:[#allocation8 + $0x520] sm:$0xff]
    %v541 = vld [vmem:[#allocation8 + $0x528] sm:$0xff]
    %v542 = vld [vmem:[#allocation8 + $0x530] sm:$0xff]
    %v543 = vld [vmem:[#allocation8 + $0x538] sm:$0xff]
    %v544 = vld [vmem:[#allocation8 + $0x540] sm:$0xff]
    %v545 = vld [vmem:[#allocation8 + $0x548] sm:$0xff]
    %v546 = vld [vmem:[#allocation8 + $0x550] sm:$0xff]
    %v547 = vld [vmem:[#allocation8 + $0x558] sm:$0xff]
    %v548 = vld [vmem:[#allocation8 + $0x560] sm:$0xff]
    %v549 = vld [vmem:[#allocation8 + $0x568] sm:$0xff]
    %v550 = vld [vmem:[#allocation8 + $0x570] sm:$0xff]
    %v551 = vld [vmem:[#allocation8 + $0x578] sm:$0xff]
    %v552 = vld [vmem:[#allocation8 + $0x580] sm:$0xff]
    %v553 = vld [vmem:[#allocation8 + $0x588] sm:$0xff]
    %v554 = vld [vmem:[#allocation8 + $0x590] sm:$0xff]
    %v555 = vld [vmem:[#allocation8 + $0x598] sm:$0xff]
    %v556 = vld [vmem:[#allocation8 + $0x5a0] sm:$0xff]
    %v557 = vld [vmem:[#allocation8 + $0x5a8] sm:$0xff]
    %v558 = vld [vmem:[#allocation8 + $0x5b0] sm:$0xff]
    %v559 = vld [vmem:[#allocation8 + $0x5b8] sm:$0xff]
    %v560 = vld [vmem:[#allocation8 + $0x5c0] sm:$0xff]
    %v561 = vld [vmem:[#allocation8 + $0x5c8] sm:$0xff]
    %v562 = vld [vmem:[#allocation8 + $0x5d0] sm:$0xff]
    %v563 = vld [vmem:[#allocation8 + $0x5d8] sm:$0xff]
    %v564 = vld [vmem:[#allocation8 + $0x5e0] sm:$0xff]
    %v565 = vld [vmem:[#allocation8 + $0x5e8] sm:$0xff]
    %v566 = vld [vmem:[#allocation8 + $0x5f0] sm:$0xff]
    %v567 = vld [vmem:[#allocation8 + $0x5f8] sm:$0xff]
    %v568 = vld [vmem:[#allocation8 + $0x600] sm:$0xff]
    %v569 = vld [vmem:[#allocation8 + $0x608] sm:$0xff]
    %v570 = vld [vmem:[#allocation8 + $0x610] sm:$0xff]
    %v571 = vld [vmem:[#allocation8 + $0x618] sm:$0xff]
    %v572 = vld [vmem:[#allocation8 + $0x620] sm:$0xff]
    %v573 = vld [vmem:[#allocation8 + $0x628] sm:$0xff]
    %v574 = vld [vmem:[#allocation8 + $0x630] sm:$0xff]
    %v575 = vld [vmem:[#allocation8 + $0x638] sm:$0xff]
    %v576 = vld [vmem:[#allocation8 + $0x640] sm:$0xff]
    %v577 = vld [vmem:[#allocation8 + $0x648] sm:$0xff]
    %v578 = vld [vmem:[#allocation8 + $0x650] sm:$0xff]
    %v579 = vld [vmem:[#allocation8 + $0x658] sm:$0xff]
    %v580 = vld [vmem:[#allocation8 + $0x660] sm:$0xff]
    %v581 = vld [vmem:[#allocation8 + $0x668] sm:$0xff]
    %v582 = vld [vmem:[#allocation8 + $0x670] sm:$0xff]
    %v583 = vld [vmem:[#allocation8 + $0x678] sm:$0xff]
    %v584 = vld [vmem:[#allocation8 + $0x680] sm:$0xff]
    %v585 = vld [vmem:[#allocation8 + $0x688] sm:$0xff]
    %v586 = vld [vmem:[#allocation8 + $0x690] sm:$0xff]
    %v587 = vld [vmem:[#allocation8 + $0x698] sm:$0xff]
    %v588 = vld [vmem:[#allocation8 + $0x6a0] sm:$0xff]
    %v589 = vld [vmem:[#allocation8 + $0x6a8] sm:$0xff]
    %v590 = vld [vmem:[#allocation8 + $0x6b0] sm:$0xff]
    %v591 = vld [vmem:[#allocation8 + $0x6b8] sm:$0xff]
    %v592 = vld [vmem:[#allocation8 + $0x6c0] sm:$0xff]
    %v593 = vld [vmem:[#allocation8 + $0x6c8] sm:$0xff]
    %v594 = vld [vmem:[#allocation8 + $0x6d0] sm:$0xff]
    %v595 = vld [vmem:[#allocation8 + $0x6d8] sm:$0xff]
    %v596 = vld [vmem:[#allocation8 + $0x6e0] sm:$0xff]
    %v597 = vld [vmem:[#allocation8 + $0x6e8] sm:$0xff]
    %v598 = vld [vmem:[#allocation8 + $0x6f0] sm:$0xff]
    %v599 = vld [vmem:[#allocation8 + $0x6f8] sm:$0xff]
    %v600 = vld [vmem:[#allocation8 + $0x700] sm:$0xff]
    %v601 = vld [vmem:[#allocation8 + $0x708] sm:$0xff]
    %v602 = vld [vmem:[#allocation8 + $0x710] sm:$0xff]
    %v603 = vld [vmem:[#allocation8 + $0x718] sm:$0xff]
    %v604 = vld [vmem:[#allocation8 + $0x720] sm:$0xff]
    %v605 = vld [vmem:[#allocation8 + $0x728] sm:$0xff]
    %v606 = vld [vmem:[#allocation8 + $0x730] sm:$0xff]
    %v607 = vld [vmem:[#allocation8 + $0x738] sm:$0xff]
    %v608 = vld [vmem:[#allocation8 + $0x740] sm:$0xff]
    %v609 = vld [vmem:[#allocation8 + $0x748] sm:$0xff]
    %v610 = vld [vmem:[#allocation8 + $0x750] sm:$0xff]
    %v611 = vld [vmem:[#allocation8 + $0x758] sm:$0xff]
    %v612 = vld [vmem:[#allocation8 + $0x760] sm:$0xff]
    %v613 = vld [vmem:[#allocation8 + $0x768] sm:$0xff]
    %v614 = vld [vmem:[#allocation8 + $0x770] sm:$0xff]
    %v615 = vld [vmem:[#allocation8 + $0x778] sm:$0xff]
    %v616 = vld [vmem:[#allocation8 + $0x780] sm:$0xff]
    %v617 = vld [vmem:[#allocation8 + $0x788] sm:$0xff]
    %v618 = vld [vmem:[#allocation8 + $0x790] sm:$0xff]
    %v619 = vld [vmem:[#allocation8 + $0x798] sm:$0xff]
    %v620 = vld [vmem:[#allocation8 + $0x7a0] sm:$0xff]
    %v621 = vld [vmem:[#allocation8 + $0x7a8] sm:$0xff]
    %v622 = vld [vmem:[#allocation8 + $0x7b0] sm:$0xff]
    %v623 = vld [vmem:[#allocation8 + $0x7b8] sm:$0xff]
    %v624 = vld [vmem:[#allocation8 + $0x7c0] sm:$0xff]
    %v625 = vld [vmem:[#allocation8 + $0x7c8] sm:$0xff]
    %v626 = vld [vmem:[#allocation8 + $0x7d0] sm:$0xff]
    %v627 = vld [vmem:[#allocation8 + $0x7d8] sm:$0xff]
    %v628 = vld [vmem:[#allocation8 + $0x7e0] sm:$0xff]
    %v629 = vld [vmem:[#allocation8 + $0x7e8] sm:$0xff]
    %v630 = vld [vmem:[#allocation8 + $0x7f0] sm:$0xff]
    %v631 = vld [vmem:[#allocation8 + $0x7f8] sm:$0xff]
    %v632 = vld [vmem:[#allocation8 + $0x800] sm:$0xff]
    %v633 = vld [vmem:[#allocation8 + $0x808] sm:$0xff]
    %v634 = vld [vmem:[#allocation8 + $0x810] sm:$0xff]
    %v635 = vld [vmem:[#allocation8 + $0x818] sm:$0xff]
    %v636 = vld [vmem:[#allocation8 + $0x820] sm:$0xff]
    %v637 = vld [vmem:[#allocation8 + $0x828] sm:$0xff]
    %v638 = vld [vmem:[#allocation8 + $0x830] sm:$0xff]
    %v639 = vld [vmem:[#allocation8 + $0x838] sm:$0xff]
    %v640 = vld [vmem:[#allocation8 + $0x840] sm:$0xff]
    %v641 = vld [vmem:[#allocation8 + $0x848] sm:$0xff]
    %v642 = vld [vmem:[#allocation8 + $0x850] sm:$0xff]
    %v643 = vld [vmem:[#allocation8 + $0x858] sm:$0xff]
    %v644 = vld [vmem:[#allocation8 + $0x860] sm:$0xff]
    %v645 = vld [vmem:[#allocation8 + $0x868] sm:$0xff]
    %v646 = vld [vmem:[#allocation8 + $0x870] sm:$0xff]
    %v647 = vld [vmem:[#allocation8 + $0x878] sm:$0xff]
    %v648 = vld [vmem:[#allocation8 + $0x880] sm:$0xff]
    %v649 = vld [vmem:[#allocation8 + $0x888] sm:$0xff]
    %v650 = vld [vmem:[#allocation8 + $0x890] sm:$0xff]
    %v651 = vld [vmem:[#allocation8 + $0x898] sm:$0xff]
    %v652 = vld [vmem:[#allocation8 + $0x8a0] sm:$0xff]
    %v653 = vld [vmem:[#allocation8 + $0x8a8] sm:$0xff]
    %v654 = vld [vmem:[#allocation8 + $0x8b0] sm:$0xff]
    %v655 = vld [vmem:[#allocation8 + $0x8b8] sm:$0xff]
    %v656 = vld [vmem:[#allocation8 + $0x8c0] sm:$0xff]
    %v657 = vld [vmem:[#allocation8 + $0x8c8] sm:$0xff]
    %v658 = vld [vmem:[#allocation8 + $0x8d0] sm:$0xff]
    %v659 = vld [vmem:[#allocation8 + $0x8d8] sm:$0xff]
    %v660 = vld [vmem:[#allocation8 + $0x8e0] sm:$0xff]
    %v661 = vld [vmem:[#allocation8 + $0x8e8] sm:$0xff]
    %v662 = vld [vmem:[#allocation8 + $0x8f0] sm:$0xff]
    %v663 = vld [vmem:[#allocation8 + $0x8f8] sm:$0xff]
    %v664 = vld [vmem:[#allocation8 + $0x900] sm:$0xff]
    %v665 = vld [vmem:[#allocation8 + $0x908] sm:$0xff]
    %v666 = vld [vmem:[#allocation8 + $0x910] sm:$0xff]
    %v667 = vld [vmem:[#allocation8 + $0x918] sm:$0xff]
    %v668 = vld [vmem:[#allocation8 + $0x920] sm:$0xff]
    %v669 = vld [vmem:[#allocation8 + $0x928] sm:$0xff]
    %v670 = vld [vmem:[#allocation8 + $0x930] sm:$0xff]
    %v671 = vld [vmem:[#allocation8 + $0x938] sm:$0xff]
    %v672 = vld [vmem:[#allocation8 + $0x940] sm:$0xff]
    %v673 = vld [vmem:[#allocation8 + $0x948] sm:$0xff]
    %v674 = vld [vmem:[#allocation8 + $0x950] sm:$0xff]
    %v675 = vld [vmem:[#allocation8 + $0x958] sm:$0xff]
    %v676 = vld [vmem:[#allocation8 + $0x960] sm:$0xff]
    %v677 = vld [vmem:[#allocation8 + $0x968] sm:$0xff]
    %v678 = vld [vmem:[#allocation8 + $0x970] sm:$0xff]
    %v679 = vld [vmem:[#allocation8 + $0x978] sm:$0xff]
    %v680 = vld [vmem:[#allocation8 + $0x980] sm:$0xff]
    %v681 = vld [vmem:[#allocation8 + $0x988] sm:$0xff]
    %v682 = vld [vmem:[#allocation8 + $0x990] sm:$0xff]
    %v683 = vld [vmem:[#allocation8 + $0x998] sm:$0xff]
    %v684 = vld [vmem:[#allocation8 + $0x9a0] sm:$0xff]
    %v685 = vld [vmem:[#allocation8 + $0x9a8] sm:$0xff]
    %v686 = vld [vmem:[#allocation8 + $0x9b0] sm:$0xff]
    %v687 = vld [vmem:[#allocation8 + $0x9b8] sm:$0xff]
    %v688 = vld [vmem:[#allocation8 + $0x9c0] sm:$0xff]
    %v689 = vld [vmem:[#allocation8 + $0x9c8] sm:$0xff]
    %v690 = vld [vmem:[#allocation8 + $0x9d0] sm:$0xff]
    %v691 = vld [vmem:[#allocation8 + $0x9d8] sm:$0xff]
    %v692 = vld [vmem:[#allocation8 + $0x9e0] sm:$0xff]
    %v693 = vld [vmem:[#allocation8 + $0x9e8] sm:$0xff]
    %v694 = vld [vmem:[#allocation8 + $0x9f0] sm:$0xff]
    %v695 = vld [vmem:[#allocation8 + $0x9f8] sm:$0xff]
    %v696 = vld [vmem:[#allocation8 + $0xa00] sm:$0xff]
    %v697 = vld [vmem:[#allocation8 + $0xa08] sm:$0xff]
    %v698 = vld [vmem:[#allocation8 + $0xa10] sm:$0xff]
    %v699 = vld [vmem:[#allocation8 + $0xa18] sm:$0xff]
    %v700 = vld [vmem:[#allocation8 + $0xa20] sm:$0xff]
    %v701 = vld [vmem:[#allocation8 + $0xa28] sm:$0xff]
    %v702 = vld [vmem:[#allocation8 + $0xa30] sm:$0xff]
    %v703 = vld [vmem:[#allocation8 + $0xa38] sm:$0xff]
    %v704 = vld [vmem:[#allocation8 + $0xa40] sm:$0xff]
    %v705 = vld [vmem:[#allocation8 + $0xa48] sm:$0xff]
    %v706 = vld [vmem:[#allocation8 + $0xa50] sm:$0xff]
    %v707 = vld [vmem:[#allocation8 + $0xa58] sm:$0xff]
    %v708 = vld [vmem:[#allocation8 + $0xa60] sm:$0xff]
    %v709 = vld [vmem:[#allocation8 + $0xa68] sm:$0xff]
    %v710 = vld [vmem:[#allocation8 + $0xa70] sm:$0xff]
    %v711 = vld [vmem:[#allocation8 + $0xa78] sm:$0xff]
    %v712 = vld [vmem:[#allocation8 + $0xa80] sm:$0xff]
    %v713 = vld [vmem:[#allocation8 + $0xa88] sm:$0xff]
    %v714 = vld [vmem:[#allocation8 + $0xa90] sm:$0xff]
    %v715 = vld [vmem:[#allocation8 + $0xa98] sm:$0xff]
    %v716 = vld [vmem:[#allocation8 + $0xaa0] sm:$0xff]
    %v717 = vld [vmem:[#allocation8 + $0xaa8] sm:$0xff]
    %v718 = vld [vmem:[#allocation8 + $0xab0] sm:$0xff]
    %v719 = vld [vmem:[#allocation8 + $0xab8] sm:$0xff]
    %v720 = vld [vmem:[#allocation8 + $0xac0] sm:$0xff]
    %v721 = vld [vmem:[#allocation8 + $0xac8] sm:$0xff]
    %v722 = vld [vmem:[#allocation8 + $0xad0] sm:$0xff]
    %v723 = vld [vmem:[#allocation8 + $0xad8] sm:$0xff]
    %v724 = vld [vmem:[#allocation8 + $0xae0] sm:$0xff]
    %v725 = vld [vmem:[#allocation8 + $0xae8] sm:$0xff]
    %v726 = vld [vmem:[#allocation8 + $0xaf0] sm:$0xff]
    %v727 = vld [vmem:[#allocation8 + $0xaf8] sm:$0xff]
    %v728 = vld [vmem:[#allocation8 + $0xb00] sm:$0xff]
    %v729 = vld [vmem:[#allocation8 + $0xb08] sm:$0xff]
    %v730 = vld [vmem:[#allocation8 + $0xb10] sm:$0xff]
    %v731 = vld [vmem:[#allocation8 + $0xb18] sm:$0xff]
    %v732 = vld [vmem:[#allocation8 + $0xb20] sm:$0xff]
    %v733 = vld [vmem:[#allocation8 + $0xb28] sm:$0xff]
    %v734 = vld [vmem:[#allocation8 + $0xb30] sm:$0xff]
    %v735 = vld [vmem:[#allocation8 + $0xb38] sm:$0xff]
    %v736 = vld [vmem:[#allocation8 + $0xb40] sm:$0xff]
    %v737 = vld [vmem:[#allocation8 + $0xb48] sm:$0xff]
    %v738 = vld [vmem:[#allocation8 + $0xb50] sm:$0xff]
    %v739 = vld [vmem:[#allocation8 + $0xb58] sm:$0xff]
    %v740 = vld [vmem:[#allocation8 + $0xb60] sm:$0xff]
    %v741 = vld [vmem:[#allocation8 + $0xb68] sm:$0xff]
    %v742 = vld [vmem:[#allocation8 + $0xb70] sm:$0xff]
    %v743 = vld [vmem:[#allocation8 + $0xb78] sm:$0xff]
    %v744 = vld [vmem:[#allocation8 + $0xb80] sm:$0xff]
    %v745 = vld [vmem:[#allocation8 + $0xb88] sm:$0xff]
    %v746 = vld [vmem:[#allocation8 + $0xb90] sm:$0xff]
    %v747 = vld [vmem:[#allocation8 + $0xb98] sm:$0xff]
    %v748 = vld [vmem:[#allocation8 + $0xba0] sm:$0xff]
    %v749 = vld [vmem:[#allocation8 + $0xba8] sm:$0xff]
    %v750 = vld [vmem:[#allocation8 + $0xbb0] sm:$0xff]
    %v751 = vld [vmem:[#allocation8 + $0xbb8] sm:$0xff]
    %v752 = vld [vmem:[#allocation8 + $0xbc0] sm:$0xff]
    %v753 = vld [vmem:[#allocation8 + $0xbc8] sm:$0xff]
    %v754 = vld [vmem:[#allocation8 + $0xbd0] sm:$0xff]
    %v755 = vld [vmem:[#allocation8 + $0xbd8] sm:$0xff]
    %v756 = vld [vmem:[#allocation8 + $0xbe0] sm:$0xff]
    %v757 = vld [vmem:[#allocation8 + $0xbe8] sm:$0xff]
    %v758 = vld [vmem:[#allocation8 + $0xbf0] sm:$0xff]
    %v759 = vld [vmem:[#allocation8 + $0xbf8] sm:$0xff]
    %v760 = vld [vmem:[#allocation8 + $0xc00] sm:$0xff]
    %v761 = vld [vmem:[#allocation8 + $0xc08] sm:$0xff]
    %v762 = vld [vmem:[#allocation8 + $0xc10] sm:$0xff]
    %v763 = vld [vmem:[#allocation8 + $0xc18] sm:$0xff]
    %v764 = vld [vmem:[#allocation8 + $0xc20] sm:$0xff]
    %v765 = vld [vmem:[#allocation8 + $0xc28] sm:$0xff]
    %v766 = vld [vmem:[#allocation8 + $0xc30] sm:$0xff]
    %v767 = vld [vmem:[#allocation8 + $0xc38] sm:$0xff]
    %v768 = vld [vmem:[#allocation8 + $0xc40] sm:$0xff]
    %v769 = vld [vmem:[#allocation8 + $0xc48] sm:$0xff]
    %v770 = vld [vmem:[#allocation8 + $0xc50] sm:$0xff]
    %v771 = vld [vmem:[#allocation8 + $0xc58] sm:$0xff]
    %v772 = vld [vmem:[#allocation8 + $0xc60] sm:$0xff]
    %v773 = vld [vmem:[#allocation8 + $0xc68] sm:$0xff]
    %v774 = vld [vmem:[#allocation8 + $0xc70] sm:$0xff]
    %v775 = vld [vmem:[#allocation8 + $0xc78] sm:$0xff]
    %v776 = vld [vmem:[#allocation8 + $0xc80] sm:$0xff]
    %v777 = vld [vmem:[#allocation8 + $0xc88] sm:$0xff]
    %v778 = vld [vmem:[#allocation8 + $0xc90] sm:$0xff]
    %v779 = vld [vmem:[#allocation8 + $0xc98] sm:$0xff]
    %v780 = vld [vmem:[#allocation8 + $0xca0] sm:$0xff]
    %v781 = vld [vmem:[#allocation8 + $0xca8] sm:$0xff]
    %v782 = vld [vmem:[#allocation8 + $0xcb0] sm:$0xff]
    %v783 = vld [vmem:[#allocation8 + $0xcb8] sm:$0xff]
    %v784 = vld [vmem:[#allocation8 + $0xcc0] sm:$0xff]
    %v785 = vld [vmem:[#allocation8 + $0xcc8] sm:$0xff]
    %v786 = vld [vmem:[#allocation8 + $0xcd0] sm:$0xff]
    %v787 = vld [vmem:[#allocation8 + $0xcd8] sm:$0xff]
    %v788 = vld [vmem:[#allocation8 + $0xce0] sm:$0xff]
    %v789 = vld [vmem:[#allocation8 + $0xce8] sm:$0xff]
    %v790 = vld [vmem:[#allocation8 + $0xcf0] sm:$0xff]
    %v791 = vld [vmem:[#allocation8 + $0xcf8] sm:$0xff]
    %v792 = vld [vmem:[#allocation8 + $0xd00] sm:$0xff]
    %v793 = vld [vmem:[#allocation8 + $0xd08] sm:$0xff]
    %v794 = vld [vmem:[#allocation8 + $0xd10] sm:$0xff]
    %v795 = vld [vmem:[#allocation8 + $0xd18] sm:$0xff]
    %v796 = vld [vmem:[#allocation8 + $0xd20] sm:$0xff]
    %v797 = vld [vmem:[#allocation8 + $0xd28] sm:$0xff]
    %v798 = vld [vmem:[#allocation8 + $0xd30] sm:$0xff]
    %v799 = vld [vmem:[#allocation8 + $0xd38] sm:$0xff]
    %v800 = vld [vmem:[#allocation8 + $0xd40] sm:$0xff]
    %v801 = vld [vmem:[#allocation8 + $0xd48] sm:$0xff]
    %v802 = vld [vmem:[#allocation8 + $0xd50] sm:$0xff]
    %v803 = vld [vmem:[#allocation8 + $0xd58] sm:$0xff]
    %v804 = vld [vmem:[#allocation8 + $0xd60] sm:$0xff]
    %v805 = vld [vmem:[#allocation8 + $0xd68] sm:$0xff]
    %v806 = vld [vmem:[#allocation8 + $0xd70] sm:$0xff]
    %v807 = vld [vmem:[#allocation8 + $0xd78] sm:$0xff]
    %v808 = vld [vmem:[#allocation8 + $0xd80] sm:$0xff]
    %v809 = vld [vmem:[#allocation8 + $0xd88] sm:$0xff]
    %v810 = vld [vmem:[#allocation8 + $0xd90] sm:$0xff]
    %v811 = vld [vmem:[#allocation8 + $0xd98] sm:$0xff]
    %v812 = vld [vmem:[#allocation8 + $0xda0] sm:$0xff]
    %v813 = vld [vmem:[#allocation8 + $0xda8] sm:$0xff]
    %v814 = vld [vmem:[#allocation8 + $0xdb0] sm:$0xff]
    %v815 = vld [vmem:[#allocation8 + $0xdb8] sm:$0xff]
    %v816 = vld [vmem:[#allocation8 + $0xdc0] sm:$0xff]
    %v817 = vld [vmem:[#allocation8 + $0xdc8] sm:$0xff]
    %v818 = vld [vmem:[#allocation8 + $0xdd0] sm:$0xff]
    %v819 = vld [vmem:[#allocation8 + $0xdd8] sm:$0xff]
    %v820 = vld [vmem:[#allocation8 + $0xde0] sm:$0xff]
    %v821 = vld [vmem:[#allocation8 + $0xde8] sm:$0xff]
    %v822 = vld [vmem:[#allocation8 + $0xdf0] sm:$0xff]
    %v823 = vld [vmem:[#allocation8 + $0xdf8] sm:$0xff]
    %v824 = vld [vmem:[#allocation8 + $0xe00] sm:$0xff]
    %v825 = vld [vmem:[#allocation8 + $0xe08] sm:$0xff]
    %v826 = vld [vmem:[#allocation8 + $0xe10] sm:$0xff]
    %v827 = vld [vmem:[#allocation8 + $0xe18] sm:$0xff]
    %v828 = vld [vmem:[#allocation8 + $0xe20] sm:$0xff]
    %v829 = vld [vmem:[#allocation8 + $0xe28] sm:$0xff]
    %v830 = vld [vmem:[#allocation8 + $0xe30] sm:$0xff]
    %v831 = vld [vmem:[#allocation8 + $0xe38] sm:$0xff]
    %v832 = vld [vmem:[#allocation8 + $0xe40] sm:$0xff]
    %v833 = vld [vmem:[#allocation8 + $0xe48] sm:$0xff]
    %v834 = vld [vmem:[#allocation8 + $0xe50] sm:$0xff]
    %v835 = vld [vmem:[#allocation8 + $0xe58] sm:$0xff]
    %v836 = vld [vmem:[#allocation8 + $0xe60] sm:$0xff]
    %v837 = vld [vmem:[#allocation8 + $0xe68] sm:$0xff]
    %v838 = vld [vmem:[#allocation8 + $0xe70] sm:$0xff]
    %v839 = vld [vmem:[#allocation8 + $0xe78] sm:$0xff]
    %v840 = vld [vmem:[#allocation8 + $0xe80] sm:$0xff]
    %v841 = vld [vmem:[#allocation8 + $0xe88] sm:$0xff]
    %v842 = vld [vmem:[#allocation8 + $0xe90] sm:$0xff]
    %v843 = vld [vmem:[#allocation8 + $0xe98] sm:$0xff]
    %v844 = vld [vmem:[#allocation8 + $0xea0] sm:$0xff]
    %v845 = vld [vmem:[#allocation8 + $0xea8] sm:$0xff]
    %v846 = vld [vmem:[#allocation8 + $0xeb0] sm:$0xff]
    %v847 = vld [vmem:[#allocation8 + $0xeb8] sm:$0xff]
    %v848 = vld [vmem:[#allocation8 + $0xec0] sm:$0xff]
    %v849 = vld [vmem:[#allocation8 + $0xec8] sm:$0xff]
    %v850 = vld [vmem:[#allocation8 + $0xed0] sm:$0xff]
    %v851 = vld [vmem:[#allocation8 + $0xed8] sm:$0xff]
    %v852 = vld [vmem:[#allocation8 + $0xee0] sm:$0xff]
    %v853 = vld [vmem:[#allocation8 + $0xee8] sm:$0xff]
    %v854 = vld [vmem:[#allocation8 + $0xef0] sm:$0xff]
    %v855 = vld [vmem:[#allocation8 + $0xef8] sm:$0xff]
    %v856 = vld [vmem:[#allocation8 + $0xf00] sm:$0xff]
    %v857 = vld [vmem:[#allocation8 + $0xf08] sm:$0xff]
    %v858 = vld [vmem:[#allocation8 + $0xf10] sm:$0xff]
    %v859 = vld [vmem:[#allocation8 + $0xf18] sm:$0xff]
    %v860 = vld [vmem:[#allocation8 + $0xf20] sm:$0xff]
    %v861 = vld [vmem:[#allocation8 + $0xf28] sm:$0xff]
    %v862 = vld [vmem:[#allocation8 + $0xf30] sm:$0xff]
    %v863 = vld [vmem:[#allocation8 + $0xf38] sm:$0xff]
    %v864 = vld [vmem:[#allocation8 + $0xf40] sm:$0xff]
    %v865 = vld [vmem:[#allocation8 + $0xf48] sm:$0xff]
    %v866 = vld [vmem:[#allocation8 + $0xf50] sm:$0xff]
    %v867 = vld [vmem:[#allocation8 + $0xf58] sm:$0xff]
    %v868 = vld [vmem:[#allocation8 + $0xf60] sm:$0xff]
    %v869 = vld [vmem:[#allocation8 + $0xf68] sm:$0xff]
    %v870 = vld [vmem:[#allocation8 + $0xf70] sm:$0xff]
    %v871 = vld [vmem:[#allocation8 + $0xf78] sm:$0xff]
    %v872 = vld [vmem:[#allocation8 + $0xf80] sm:$0xff]
    %v873 = vld [vmem:[#allocation8 + $0xf88] sm:$0xff]
    %v874 = vld [vmem:[#allocation8 + $0xf90] sm:$0xff]
    %v875 = vld [vmem:[#allocation8 + $0xf98] sm:$0xff]
    %v876 = vld [vmem:[#allocation8 + $0xfa0] sm:$0xff]
    %v877 = vld [vmem:[#allocation8 + $0xfa8] sm:$0xff]
    %v878 = vld [vmem:[#allocation8 + $0xfb0] sm:$0xff]
    %v879 = vld [vmem:[#allocation8 + $0xfb8] sm:$0xff]
    %v880 = vld [vmem:[#allocation8 + $0xfc0] sm:$0xff]
    %v881 = vld [vmem:[#allocation8 + $0xfc8] sm:$0xff]
    %v882 = vld [vmem:[#allocation8 + $0xfd0] sm:$0xff]
    %v883 = vld [vmem:[#allocation8 + $0xfd8] sm:$0xff]
    %v884 = vld [vmem:[#allocation8 + $0xfe0] sm:$0xff]
    %v885 = vld [vmem:[#allocation8 + $0xfe8] sm:$0xff]
    %v886 = vld [vmem:[#allocation8 + $0xff0] sm:$0xff]
    %v887 = vld [vmem:[#allocation8 + $0xff8] sm:$0xff]
    %v888 = vld [vmem:[#allocation8 + $0x1000] sm:$0xff]
    %v889 = vld [vmem:[#allocation8 + $0x1008] sm:$0xff]
    %v890 = vld [vmem:[#allocation8 + $0x1010] sm:$0xff]
    %v891 = vld [vmem:[#allocation8 + $0x1018] sm:$0xff]
    %v892 = vld [vmem:[#allocation8 + $0x1020] sm:$0xff]
    %v893 = vld [vmem:[#allocation8 + $0x1028] sm:$0xff]
    %v894 = vld [vmem:[#allocation8 + $0x1030] sm:$0xff]
    %v895 = vld [vmem:[#allocation8 + $0x1038] sm:$0xff]
    %v896 = vld [vmem:[#allocation8 + $0x1040] sm:$0xff]
    %v897 = vld [vmem:[#allocation8 + $0x1048] sm:$0xff]
    %v898 = vld [vmem:[#allocation8 + $0x1050] sm:$0xff]
    %v899 = vld [vmem:[#allocation8 + $0x1058] sm:$0xff]
    %v900 = vld [vmem:[#allocation8 + $0x1060] sm:$0xff]
    %v901 = vld [vmem:[#allocation8 + $0x1068] sm:$0xff]
    %v902 = vld [vmem:[#allocation8 + $0x1070] sm:$0xff]
    %v903 = vld [vmem:[#allocation8 + $0x1078] sm:$0xff]
    %v904 = vld [vmem:[#allocation8 + $0x1080] sm:$0xff]
    %v905 = vld [vmem:[#allocation8 + $0x1088] sm:$0xff]
    %v906 = vld [vmem:[#allocation8 + $0x1090] sm:$0xff]
    %v907 = vld [vmem:[#allocation8 + $0x1098] sm:$0xff]
    %v908 = vld [vmem:[#allocation8 + $0x10a0] sm:$0xff]
    %v909 = vld [vmem:[#allocation8 + $0x10a8] sm:$0xff]
    %v910 = vld [vmem:[#allocation8 + $0x10b0] sm:$0xff]
    %v911 = vld [vmem:[#allocation8 + $0x10b8] sm:$0xff]
    %v912 = vld [vmem:[#allocation8 + $0x10c0] sm:$0xff]
    %v913 = vld [vmem:[#allocation8 + $0x10c8] sm:$0xff]
    %v914 = vld [vmem:[#allocation8 + $0x10d0] sm:$0xff]
    %v915 = vld [vmem:[#allocation8 + $0x10d8] sm:$0xff]
    %v916 = vld [vmem:[#allocation8 + $0x10e0] sm:$0xff]
    %v917 = vld [vmem:[#allocation8 + $0x10e8] sm:$0xff]
    %v918 = vld [vmem:[#allocation8 + $0x10f0] sm:$0xff]
    %v919 = vld [vmem:[#allocation8 + $0x10f8] sm:$0xff]
    %v920 = vld [vmem:[#allocation8 + $0x1100] sm:$0xff]
    %v921 = vld [vmem:[#allocation8 + $0x1108] sm:$0xff]
    %v922 = vld [vmem:[#allocation8 + $0x1110] sm:$0xff]
    %v923 = vld [vmem:[#allocation8 + $0x1118] sm:$0xff]
    %v924 = vld [vmem:[#allocation8 + $0x1120] sm:$0xff]
    %v925 = vld [vmem:[#allocation8 + $0x1128] sm:$0xff]
    %v926 = vld [vmem:[#allocation8 + $0x1130] sm:$0xff]
    %v927 = vld [vmem:[#allocation8 + $0x1138] sm:$0xff]
    %v928 = vld [vmem:[#allocation8 + $0x1140] sm:$0xff]
    %v929 = vld [vmem:[#allocation8 + $0x1148] sm:$0xff]
    %v930 = vld [vmem:[#allocation8 + $0x1150] sm:$0xff]
    %v931 = vld [vmem:[#allocation8 + $0x1158] sm:$0xff]
    %v932 = vld [vmem:[#allocation8 + $0x1160] sm:$0xff]
    %v933 = vld [vmem:[#allocation8 + $0x1168] sm:$0xff]
    %v934 = vld [vmem:[#allocation8 + $0x1170] sm:$0xff]
    %v935 = vld [vmem:[#allocation8 + $0x1178] sm:$0xff]
    %v936 = vld [vmem:[#allocation8 + $0x1180] sm:$0xff]
    %v937 = vld [vmem:[#allocation8 + $0x1188] sm:$0xff]
    %v938 = vld [vmem:[#allocation8 + $0x1190] sm:$0xff]
    %v939 = vld [vmem:[#allocation8 + $0x1198] sm:$0xff]
    %v940 = vld [vmem:[#allocation8 + $0x11a0] sm:$0xff]
    %v941 = vld [vmem:[#allocation8 + $0x11a8] sm:$0xff]
    %v942 = vld [vmem:[#allocation8 + $0x11b0] sm:$0xff]
    %v943 = vld [vmem:[#allocation8 + $0x11b8] sm:$0xff]
    %v944 = vld [vmem:[#allocation8 + $0x11c0] sm:$0xff]
    %v945 = vld [vmem:[#allocation8 + $0x11c8] sm:$0xff]
    %v946 = vld [vmem:[#allocation8 + $0x11d0] sm:$0xff]
    %v947 = vld [vmem:[#allocation8 + $0x11d8] sm:$0xff]
    %v948 = vld [vmem:[#allocation8 + $0x11e0] sm:$0xff]
    %v949 = vld [vmem:[#allocation8 + $0x11e8] sm:$0xff]
    %v950 = vld [vmem:[#allocation8 + $0x11f0] sm:$0xff]
    %v951 = vld [vmem:[#allocation8 + $0x11f8] sm:$0xff]
    %v952 = vld [vmem:[#allocation8 + $0x1200] sm:$0xff]
    %v953 = vld [vmem:[#allocation8 + $0x1208] sm:$0xff]
    %v954 = vld [vmem:[#allocation8 + $0x1210] sm:$0xff]
    %v955 = vld [vmem:[#allocation8 + $0x1218] sm:$0xff]
    %v956 = vld [vmem:[#allocation8 + $0x1220] sm:$0xff]
    %v957 = vld [vmem:[#allocation8 + $0x1228] sm:$0xff]
    %v958 = vld [vmem:[#allocation8 + $0x1230] sm:$0xff]
    %v959 = vld [vmem:[#allocation8 + $0x1238] sm:$0xff]
    %v960 = vld [vmem:[#allocation8 + $0x1240] sm:$0xff]
    %v961 = vld [vmem:[#allocation8 + $0x1248] sm:$0xff]
    %v962 = vld [vmem:[#allocation8 + $0x1250] sm:$0xff]
    %v963 = vld [vmem:[#allocation8 + $0x1258] sm:$0xff]
    %v964 = vld [vmem:[#allocation8 + $0x1260] sm:$0xff]
    %v965 = vld [vmem:[#allocation8 + $0x1268] sm:$0xff]
    %v966 = vld [vmem:[#allocation8 + $0x1270] sm:$0xff]
    %v967 = vld [vmem:[#allocation8 + $0x1278] sm:$0xff]
    %v968 = vld [vmem:[#allocation8 + $0x1280] sm:$0xff]
    %v969 = vld [vmem:[#allocation8 + $0x1288] sm:$0xff]
    %v970 = vld [vmem:[#allocation8 + $0x1290] sm:$0xff]
    %v971 = vld [vmem:[#allocation8 + $0x1298] sm:$0xff]
    %v972 = vld [vmem:[#allocation8 + $0x12a0] sm:$0xff]
    %v973 = vld [vmem:[#allocation8 + $0x12a8] sm:$0xff]
    %v974 = vld [vmem:[#allocation8 + $0x12b0] sm:$0xff]
    %v975 = vld [vmem:[#allocation8 + $0x12b8] sm:$0xff]
    %v976 = vld [vmem:[#allocation8 + $0x12c0] sm:$0xff]
    %v977 = vld [vmem:[#allocation8 + $0x12c8] sm:$0xff]
    %v978 = vld [vmem:[#allocation8 + $0x12d0] sm:$0xff]
    %v979 = vld [vmem:[#allocation8 + $0x12d8] sm:$0xff]
    %v980 = vld [vmem:[#allocation8 + $0x12e0] sm:$0xff]
    %v981 = vld [vmem:[#allocation8 + $0x12e8] sm:$0xff]
    %v982 = vld [vmem:[#allocation8 + $0x12f0] sm:$0xff]
    %v983 = vld [vmem:[#allocation8 + $0x12f8] sm:$0xff]
    %v984 = vld [vmem:[#allocation8 + $0x1300] sm:$0xff]
    %v985 = vld [vmem:[#allocation8 + $0x1308] sm:$0xff]
    %v986 = vld [vmem:[#allocation8 + $0x1310] sm:$0xff]
    %v987 = vld [vmem:[#allocation8 + $0x1318] sm:$0xff]
    %v988 = vld [vmem:[#allocation8 + $0x1320] sm:$0xff]
    %v989 = vld [vmem:[#allocation8 + $0x1328] sm:$0xff]
    %v990 = vld [vmem:[#allocation8 + $0x1330] sm:$0xff]
    %v991 = vld [vmem:[#allocation8 + $0x1338] sm:$0xff]
    %v992 = vld [vmem:[#allocation8 + $0x1340] sm:$0xff]
    %v993 = vld [vmem:[#allocation8 + $0x1348] sm:$0xff]
    %v994 = vld [vmem:[#allocation8 + $0x1350] sm:$0xff]
    %v995 = vld [vmem:[#allocation8 + $0x1358] sm:$0xff]
    %v996 = vld [vmem:[#allocation8 + $0x1360] sm:$0xff]
    %v997 = vld [vmem:[#allocation8 + $0x1368] sm:$0xff]
    %v998 = vld [vmem:[#allocation8 + $0x1370] sm:$0xff]
    %v999 = vld [vmem:[#allocation8 + $0x1378] sm:$0xff]
    %v1000 = vld [vmem:[#allocation8 + $0x1380] sm:$0xff]
    %v1001 = vld [vmem:[#allocation8 + $0x1388] sm:$0xff]
    %v1002 = vld [vmem:[#allocation8 + $0x1390] sm:$0xff]
    %v1003 = vld [vmem:[#allocation8 + $0x1398] sm:$0xff]
    %v1004 = vld [vmem:[#allocation8 + $0x13a0] sm:$0xff]
    %v1005 = vld [vmem:[#allocation8 + $0x13a8] sm:$0xff]
    %v1006 = vld [vmem:[#allocation8 + $0x13b0] sm:$0xff]
    %v1007 = vld [vmem:[#allocation8 + $0x13b8] sm:$0xff]
    %v1008 = vld [vmem:[#allocation8 + $0x13c0] sm:$0xff]
    %v1009 = vld [vmem:[#allocation8 + $0x13c8] sm:$0xff]
    %v1010 = vld [vmem:[#allocation8 + $0x13d0] sm:$0xff]
    %v1011 = vld [vmem:[#allocation8 + $0x13d8] sm:$0xff]
    %v1012 = vld [vmem:[#allocation8 + $0x13e0] sm:$0xff]
    %v1013 = vld [vmem:[#allocation8 + $0x13e8] sm:$0xff]
    %v1014 = vld [vmem:[#allocation8 + $0x13f0] sm:$0xff]
    %v1015 = vld [vmem:[#allocation8 + $0x13f8] sm:$0xff]
    %v1016 = vld [vmem:[#allocation8 + $0x1400] sm:$0xff]
    %v1017 = vld [vmem:[#allocation8 + $0x1408] sm:$0xff]
    %v1018 = vld [vmem:[#allocation8 + $0x1410] sm:$0xff]
    %v1019 = vld [vmem:[#allocation8 + $0x1418] sm:$0xff]
    %v1020 = vld [vmem:[#allocation8 + $0x1420] sm:$0xff]
    %v1021 = vld [vmem:[#allocation8 + $0x1428] sm:$0xff]
    %v1022 = vld [vmem:[#allocation8 + $0x1430] sm:$0xff]
    %v1023 = vld [vmem:[#allocation8 + $0x1438] sm:$0xff]
    %v1024 = vld [vmem:[#allocation8 + $0x1440] sm:$0xff]
    %v1025 = vld [vmem:[#allocation8 + $0x1448] sm:$0xff]
    %v1026 = vld [vmem:[#allocation8 + $0x1450] sm:$0xff]
    %v1027 = vld [vmem:[#allocation8 + $0x1458] sm:$0xff]
    %v1028 = vld [vmem:[#allocation8 + $0x1460] sm:$0xff]
    %v1029 = vld [vmem:[#allocation8 + $0x1468] sm:$0xff]
    %v1030 = vld [vmem:[#allocation8 + $0x1470] sm:$0xff]
    %v1031 = vld [vmem:[#allocation8 + $0x1478] sm:$0xff]
    %v1032 = vld [vmem:[#allocation8 + $0x1480] sm:$0xff]
    %v1033 = vld [vmem:[#allocation8 + $0x1488] sm:$0xff]
    %v1034 = vld [vmem:[#allocation8 + $0x1490] sm:$0xff]
    %v1035 = vld [vmem:[#allocation8 + $0x1498] sm:$0xff]
    %v1036 = vld [vmem:[#allocation8 + $0x14a0] sm:$0xff]
    %v1037 = vld [vmem:[#allocation8 + $0x14a8] sm:$0xff]
    %v1038 = vld [vmem:[#allocation8 + $0x14b0] sm:$0xff]
    %v1039 = vld [vmem:[#allocation8 + $0x14b8] sm:$0xff]
    %v1040 = vld [vmem:[#allocation8 + $0x14c0] sm:$0xff]
    %v1041 = vld [vmem:[#allocation8 + $0x14c8] sm:$0xff]
    %v1042 = vld [vmem:[#allocation8 + $0x14d0] sm:$0xff]
    %v1043 = vld [vmem:[#allocation8 + $0x14d8] sm:$0xff]
    %v1044 = vld [vmem:[#allocation8 + $0x14e0] sm:$0xff]
    %v1045 = vld [vmem:[#allocation8 + $0x14e8] sm:$0xff]
    %v1046 = vld [vmem:[#allocation8 + $0x14f0] sm:$0xff]
    %v1047 = vld [vmem:[#allocation8 + $0x14f8] sm:$0xff]
    %v1048 = vld [vmem:[#allocation8 + $0x1500] sm:$0xff]
    %v1049 = vld [vmem:[#allocation8 + $0x1508] sm:$0xff]
    %v1050 = vld [vmem:[#allocation8 + $0x1510] sm:$0xff]
    %v1051 = vld [vmem:[#allocation8 + $0x1518] sm:$0xff]
    %v1052 = vld [vmem:[#allocation8 + $0x1520] sm:$0xff]
    %v1053 = vld [vmem:[#allocation8 + $0x1528] sm:$0xff]
    %v1054 = vld [vmem:[#allocation8 + $0x1530] sm:$0xff]
    %v1055 = vld [vmem:[#allocation8 + $0x1538] sm:$0xff]
    %v1056 = vld [vmem:[#allocation8 + $0x1540] sm:$0xff]
    %v1057 = vld [vmem:[#allocation8 + $0x1548] sm:$0xff]
    %v1058 = vld [vmem:[#allocation8 + $0x1550] sm:$0xff]
    %v1059 = vld [vmem:[#allocation8 + $0x1558] sm:$0xff]
    %v1060 = vld [vmem:[#allocation8 + $0x1560] sm:$0xff]
    %v1061 = vld [vmem:[#allocation8 + $0x1568] sm:$0xff]
    %v1062 = vld [vmem:[#allocation8 + $0x1570] sm:$0xff]
    %v1063 = vld [vmem:[#allocation8 + $0x1578] sm:$0xff]
    %v1064 = vld [vmem:[#allocation8 + $0x1580] sm:$0xff]
    %v1065 = vld [vmem:[#allocation8 + $0x1588] sm:$0xff]
    %v1066 = vld [vmem:[#allocation8 + $0x1590] sm:$0xff]
    %v1067 = vld [vmem:[#allocation8 + $0x1598] sm:$0xff]
    %v1068 = vld [vmem:[#allocation8 + $0x15a0] sm:$0xff]
    %v1069 = vld [vmem:[#allocation8 + $0x15a8] sm:$0xff]
    %v1070 = vld [vmem:[#allocation8 + $0x15b0] sm:$0xff]
    %v1071 = vld [vmem:[#allocation8 + $0x15b8] sm:$0xff]
    %v1072 = vld [vmem:[#allocation8 + $0x15c0] sm:$0xff]
    %v1073 = vld [vmem:[#allocation8 + $0x15c8] sm:$0xff]
    %v1074 = vld [vmem:[#allocation8 + $0x15d0] sm:$0xff]
    %v1075 = vld [vmem:[#allocation8 + $0x15d8] sm:$0xff]
    %v1076 = vld [vmem:[#allocation8 + $0x15e0] sm:$0xff]
    %v1077 = vld [vmem:[#allocation8 + $0x15e8] sm:$0xff]
    %v1078 = vld [vmem:[#allocation8 + $0x15f0] sm:$0xff]
    %v1079 = vld [vmem:[#allocation8 + $0x15f8] sm:$0xff]
    %v1080 = vld [vmem:[#allocation8 + $0x1600] sm:$0xff]
    %v1081 = vld [vmem:[#allocation8 + $0x1608] sm:$0xff]
    %v1082 = vld [vmem:[#allocation8 + $0x1610] sm:$0xff]
    %v1083 = vld [vmem:[#allocation8 + $0x1618] sm:$0xff]
    %v1084 = vld [vmem:[#allocation8 + $0x1620] sm:$0xff]
    %v1085 = vld [vmem:[#allocation8 + $0x1628] sm:$0xff]
    %v1086 = vld [vmem:[#allocation8 + $0x1630] sm:$0xff]
    %v1087 = vld [vmem:[#allocation8 + $0x1638] sm:$0xff]
    %v1088 = vld [vmem:[#allocation8 + $0x1640] sm:$0xff]
    %v1089 = vld [vmem:[#allocation8 + $0x1648] sm:$0xff]
    %v1090 = vld [vmem:[#allocation8 + $0x1650] sm:$0xff]
    %v1091 = vld [vmem:[#allocation8 + $0x1658] sm:$0xff]
    %v1092 = vld [vmem:[#allocation8 + $0x1660] sm:$0xff]
    %v1093 = vld [vmem:[#allocation8 + $0x1668] sm:$0xff]
    %v1094 = vld [vmem:[#allocation8 + $0x1670] sm:$0xff]
    %v1095 = vld [vmem:[#allocation8 + $0x1678] sm:$0xff]
    %v1096 = vld [vmem:[#allocation8 + $0x1680] sm:$0xff]
    %v1097 = vld [vmem:[#allocation8 + $0x1688] sm:$0xff]
    %v1098 = vld [vmem:[#allocation8 + $0x1690] sm:$0xff]
    %v1099 = vld [vmem:[#allocation8 + $0x1698] sm:$0xff]
    %v1100 = vld [vmem:[#allocation8 + $0x16a0] sm:$0xff]
    %v1101 = vld [vmem:[#allocation8 + $0x16a8] sm:$0xff]
    %v1102 = vld [vmem:[#allocation8 + $0x16b0] sm:$0xff]
    %v1103 = vld [vmem:[#allocation8 + $0x16b8] sm:$0xff]
    %v1104 = vld [vmem:[#allocation8 + $0x16c0] sm:$0xff]
    %v1105 = vld [vmem:[#allocation8 + $0x16c8] sm:$0xff]
    %v1106 = vld [vmem:[#allocation8 + $0x16d0] sm:$0xff]
    %v1107 = vld [vmem:[#allocation8 + $0x16d8] sm:$0xff]
    %v1108 = vld [vmem:[#allocation8 + $0x16e0] sm:$0xff]
    %v1109 = vld [vmem:[#allocation8 + $0x16e8] sm:$0xff]
    %v1110 = vld [vmem:[#allocation8 + $0x16f0] sm:$0xff]
    %v1111 = vld [vmem:[#allocation8 + $0x16f8] sm:$0xff]
    %v1112 = vld [vmem:[#allocation8 + $0x1700] sm:$0xff]
    %v1113 = vld [vmem:[#allocation8 + $0x1708] sm:$0xff]
    %v1114 = vld [vmem:[#allocation8 + $0x1710] sm:$0xff]
    %v1115 = vld [vmem:[#allocation8 + $0x1718] sm:$0xff]
    %v1116 = vld [vmem:[#allocation8 + $0x1720] sm:$0xff]
    %v1117 = vld [vmem:[#allocation8 + $0x1728] sm:$0xff]
    %v1118 = vld [vmem:[#allocation8 + $0x1730] sm:$0xff]
    %v1119 = vld [vmem:[#allocation8 + $0x1738] sm:$0xff]
    %v1120 = vld [vmem:[#allocation8 + $0x1740] sm:$0xff]
    %v1121 = vld [vmem:[#allocation8 + $0x1748] sm:$0xff]
    %v1122 = vld [vmem:[#allocation8 + $0x1750] sm:$0xff]
    %v1123 = vld [vmem:[#allocation8 + $0x1758] sm:$0xff]
    %v1124 = vld [vmem:[#allocation8 + $0x1760] sm:$0xff]
    %v1125 = vld [vmem:[#allocation8 + $0x1768] sm:$0xff]
    %v1126 = vld [vmem:[#allocation8 + $0x1770] sm:$0xff]
    %v1127 = vld [vmem:[#allocation8 + $0x1778] sm:$0xff]
    %v1128 = vld [vmem:[#allocation8 + $0x1780] sm:$0xff]
    %v1129 = vld [vmem:[#allocation8 + $0x1788] sm:$0xff]
    %v1130 = vld [vmem:[#allocation8 + $0x1790] sm:$0xff]
    %v1131 = vld [vmem:[#allocation8 + $0x1798] sm:$0xff]
    %v1132 = vld [vmem:[#allocation8 + $0x17a0] sm:$0xff]
    %v1133 = vld [vmem:[#allocation8 + $0x17a8] sm:$0xff]
    %v1134 = vld [vmem:[#allocation8 + $0x17b0] sm:$0xff]
    %v1135 = vld [vmem:[#allocation8 + $0x17b8] sm:$0xff]
    %v1136 = vld [vmem:[#allocation8 + $0x17c0] sm:$0xff]
    %v1137 = vld [vmem:[#allocation8 + $0x17c8] sm:$0xff]
    %v1138 = vld [vmem:[#allocation8 + $0x17d0] sm:$0xff]
    %v1139 = vld [vmem:[#allocation8 + $0x17d8] sm:$0xff]
    %v1140 = vld [vmem:[#allocation8 + $0x17e0] sm:$0xff]
    %v1141 = vld [vmem:[#allocation8 + $0x17e8] sm:$0xff]
    %v1142 = vld [vmem:[#allocation8 + $0x17f0] sm:$0xff]
    %v1143 = vld [vmem:[#allocation8 + $0x17f8] sm:$0xff]
    %vm1160 = vcmask 1041409
    %v1161 = vsel %vm1160, %v333, %v285
    %v1162 = vsel %vm1160, %v339, %v291
    %v1163 = vsel %vm1160, %v345, %v297
    %v1164 = vsel %vm1160, %v351, %v303
    %v1165 = vsel %vm1160, %v357, %v309
    %v1166 = vsel %vm1160, %v363, %v315
    %v1167 = vsel %vm1160, %v369, %v321
    %v1168 = vsel %vm1160, %v375, %v327
    %1177 = vmatprep.subr.mxu0 %v467
    %1178 = vmatpush1.msra.mxu0 %v466
    %1179 = vmatprep.subr.mxu0 %v461
    %1180 = vmatpush1.msra.mxu0 %v460
    %1181 = vmatprep.subr.mxu0 %v455
    %1182 = vmatpush1.msra.mxu0 %v454
    %1183 = vmatprep.subr.mxu0 %v449
    %1184 = vmatpush1.msra.mxu0 %v448
    %1185 = vmatprep.subr.mxu0 %v443
    %1186 = vmatpush1.msra.mxu0 %v442
    %1187 = vmatprep.subr.mxu0 %v437
    %1188 = vmatpush1.msra.mxu0 %v436
    %1189 = vmatprep.subr.mxu0 %v431
    %1190 = vmatpush1.msra.mxu0 %v430
    %1191 = vmatprep.subr.mxu0 %v425
    %1192 = vmatpush1.msra.mxu0 %v424
    %1193 = vmatprep.subr.mxu0 %v419
    %1194 = vmatpush1.msra.mxu0 %v418
    %1195 = vmatprep.subr.mxu0 %v413
    %1196 = vmatpush1.msra.mxu0 %v412
    %1197 = vmatprep.subr.mxu0 %v407
    %1198 = vmatpush1.msra.mxu0 %v406
    %1199 = vmatprep.subr.mxu0 %v401
    %1200 = vmatpush1.msra.mxu0 %v400
    %1201 = vmatprep.subr.mxu0 %v395
    %1202 = vmatpush1.msra.mxu0 %v394
    %1203 = vmatprep.subr.mxu0 %v389
    %1204 = vmatpush1.msra.mxu0 %v388
    %1205 = vmatprep.subr.mxu0 %v383
    %1206 = vmatpush1.msra.mxu0 %v382
    %1207 = vmatprep.subr.mxu0 %v377
    %1208 = vmatpush1.msra.mxu0 %v376
    %1209 = vmatprep.subr.mxu0 %v563
    %1210 = vmatpush2.msra.mxu0 %v562
    %1211 = vmatprep.subr.mxu0 %v557
    %1212 = vmatpush2.msra.mxu0 %v556
    %1213 = vmatprep.subr.mxu0 %v551
    %1214 = vmatpush2.msra.mxu0 %v550
    %1215 = vmatprep.subr.mxu0 %v545
    %1216 = vmatpush2.msra.mxu0 %v544
    %1217 = vmatprep.subr.mxu0 %v539
    %1218 = vmatpush2.msra.mxu0 %v538
    %1219 = vmatprep.subr.mxu0 %v533
    %1220 = vmatpush2.msra.mxu0 %v532
    %1221 = vmatprep.subr.mxu0 %v527
    %1222 = vmatpush2.msra.mxu0 %v526
    %1223 = vmatprep.subr.mxu0 %v521
    %1224 = vmatpush2.msra.mxu0 %v520
    %1225 = vmatprep.subr.mxu0 %v515
    %1226 = vmatpush2.msra.mxu0 %v514
    %1227 = vmatprep.subr.mxu0 %v509
    %1228 = vmatpush2.msra.mxu0 %v508
    %1229 = vmatprep.subr.mxu0 %v503
    %1230 = vmatpush2.msra.mxu0 %v502
    %1231 = vmatprep.subr.mxu0 %v497
    %1232 = vmatpush2.msra.mxu0 %v496
    %1233 = vmatprep.subr.mxu0 %v491
    %1234 = vmatpush2.msra.mxu0 %v490
    %1235 = vmatprep.subr.mxu0 %v485
    %1236 = vmatpush2.msra.mxu0 %v484
    %1237 = vmatprep.subr.mxu0 %v479
    %1238 = vmatpush2.msra.mxu0 %v478
    %1239 = vmatprep.subr.mxu0 %v473
    %1240 = vmatpush2.msra.mxu0 %v472
    %1241 = vmatprep.mubr.f32.mxu0 %v1162
    %1242 = vmatmul.mubr.f32.gmra.mxu0 %v1161
    %v1243 = vpop.f32.mrf.mxu0
    %v1244 = vadd.f32 0.0, %v1243
    %v1245 = vpop.f32.mrf.mxu0
    %v1246 = vadd.f32 0.0, %v1245
    %1247 = vdwg.mxu0
    %1248 = vmatprep.subr.mxu0 %v659
    %1249 = vmatpush1.msra.mxu0 %v658
    %1250 = vmatprep.subr.mxu0 %v653
    %1251 = vmatpush1.msra.mxu0 %v652
    %1252 = vmatprep.subr.mxu0 %v647
    %1253 = vmatpush1.msra.mxu0 %v646
    %1254 = vmatprep.subr.mxu0 %v641
    %1255 = vmatpush1.msra.mxu0 %v640
    %1256 = vmatprep.subr.mxu0 %v635
    %1257 = vmatpush1.msra.mxu0 %v634
    %1258 = vmatprep.subr.mxu0 %v629
    %1259 = vmatpush1.msra.mxu0 %v628
    %1260 = vmatprep.subr.mxu0 %v623
    %1261 = vmatpush1.msra.mxu0 %v622
    %1262 = vmatprep.subr.mxu0 %v617
    %1263 = vmatpush1.msra.mxu0 %v616
    %1264 = vmatprep.subr.mxu0 %v611
    %1265 = vmatpush1.msra.mxu0 %v610
    %1266 = vmatprep.subr.mxu0 %v605
    %1267 = vmatpush1.msra.mxu0 %v604
    %1268 = vmatprep.subr.mxu0 %v599
    %1269 = vmatpush1.msra.mxu0 %v598
    %1270 = vmatprep.subr.mxu0 %v593
    %1271 = vmatpush1.msra.mxu0 %v592
    %1272 = vmatprep.subr.mxu0 %v587
    %1273 = vmatpush1.msra.mxu0 %v586
    %1274 = vmatprep.subr.mxu0 %v581
    %1275 = vmatpush1.msra.mxu0 %v580
    %1276 = vmatprep.subr.mxu0 %v575
    %1277 = vmatpush1.msra.mxu0 %v574
    %1278 = vmatprep.subr.mxu0 %v569
    %1279 = vmatpush1.msra.mxu0 %v568
    %1280 = vmatprep.subr.mxu0 %v755
    %1281 = vmatpush2.msra.mxu0 %v754
    %1282 = vmatprep.subr.mxu0 %v749
    %1283 = vmatpush2.msra.mxu0 %v748
    %1284 = vmatprep.subr.mxu0 %v743
    %1285 = vmatpush2.msra.mxu0 %v742
    %1286 = vmatprep.subr.mxu0 %v737
    %1287 = vmatpush2.msra.mxu0 %v736
    %1288 = vmatprep.subr.mxu0 %v731
    %1289 = vmatpush2.msra.mxu0 %v730
    %1290 = vmatprep.subr.mxu0 %v725
    %1291 = vmatpush2.msra.mxu0 %v724
    %1292 = vmatprep.subr.mxu0 %v719
    %1293 = vmatpush2.msra.mxu0 %v718
    %1294 = vmatprep.subr.mxu0 %v713
    %1295 = vmatpush2.msra.mxu0 %v712
    %1296 = vmatprep.subr.mxu0 %v707
    %1297 = vmatpush2.msra.mxu0 %v706
    %1298 = vmatprep.subr.mxu0 %v701
    %1299 = vmatpush2.msra.mxu0 %v700
    %1300 = vmatprep.subr.mxu0 %v695
    %1301 = vmatpush2.msra.mxu0 %v694
    %1302 = vmatprep.subr.mxu0 %v689
    %1303 = vmatpush2.msra.mxu0 %v688
    %1304 = vmatprep.subr.mxu0 %v683
    %1305 = vmatpush2.msra.mxu0 %v682
    %1306 = vmatprep.subr.mxu0 %v677
    %1307 = vmatpush2.msra.mxu0 %v676
    %1308 = vmatprep.subr.mxu0 %v671
    %1309 = vmatpush2.msra.mxu0 %v670
    %1310 = vmatprep.subr.mxu0 %v665
    %1311 = vmatpush2.msra.mxu0 %v664
    %1312 = vmatprep.mubr.f32.mxu0 %v1164
    %1313 = vmatmul.mubr.f32.gmra.mxu0 %v1163
    %v1314 = vpop.f32.mrf.mxu0
    %v1315 = vadd.f32 %v1244, %v1314
    %v1316 = vpop.f32.mrf.mxu0
    %v1317 = vadd.f32 %v1246, %v1316
    %1318 = vdwg.mxu0
    %1319 = vmatprep.subr.mxu0 %v851
    %1320 = vmatpush1.msra.mxu0 %v850
    %1321 = vmatprep.subr.mxu0 %v845
    %1322 = vmatpush1.msra.mxu0 %v844
    %1323 = vmatprep.subr.mxu0 %v839
    %1324 = vmatpush1.msra.mxu0 %v838
    %1325 = vmatprep.subr.mxu0 %v833
    %1326 = vmatpush1.msra.mxu0 %v832
    %1327 = vmatprep.subr.mxu0 %v827
    %1328 = vmatpush1.msra.mxu0 %v826
    %1329 = vmatprep.subr.mxu0 %v821
    %1330 = vmatpush1.msra.mxu0 %v820
    %1331 = vmatprep.subr.mxu0 %v815
    %1332 = vmatpush1.msra.mxu0 %v814
    %1333 = vmatprep.subr.mxu0 %v809
    %1334 = vmatpush1.msra.mxu0 %v808
    %1335 = vmatprep.subr.mxu0 %v803
    %1336 = vmatpush1.msra.mxu0 %v802
    %1337 = vmatprep.subr.mxu0 %v797
    %1338 = vmatpush1.msra.mxu0 %v796
    %1339 = vmatprep.subr.mxu0 %v791
    %1340 = vmatpush1.msra.mxu0 %v790
    %1341 = vmatprep.subr.mxu0 %v785
    %1342 = vmatpush1.msra.mxu0 %v784
    %1343 = vmatprep.subr.mxu0 %v779
    %1344 = vmatpush1.msra.mxu0 %v778
    %1345 = vmatprep.subr.mxu0 %v773
    %1346 = vmatpush1.msra.mxu0 %v772
    %1347 = vmatprep.subr.mxu0 %v767
    %1348 = vmatpush1.msra.mxu0 %v766
    %1349 = vmatprep.subr.mxu0 %v761
    %1350 = vmatpush1.msra.mxu0 %v760
    %1351 = vmatprep.subr.mxu0 %v947
    %1352 = vmatpush2.msra.mxu0 %v946
    %1353 = vmatprep.subr.mxu0 %v941
    %1354 = vmatpush2.msra.mxu0 %v940
    %1355 = vmatprep.subr.mxu0 %v935
    %1356 = vmatpush2.msra.mxu0 %v934
    %1357 = vmatprep.subr.mxu0 %v929
    %1358 = vmatpush2.msra.mxu0 %v928
    %1359 = vmatprep.subr.mxu0 %v923
    %1360 = vmatpush2.msra.mxu0 %v922
    %1361 = vmatprep.subr.mxu0 %v917
    %1362 = vmatpush2.msra.mxu0 %v916
    %1363 = vmatprep.subr.mxu0 %v911
    %1364 = vmatpush2.msra.mxu0 %v910
    %1365 = vmatprep.subr.mxu0 %v905
    %1366 = vmatpush2.msra.mxu0 %v904
    %1367 = vmatprep.subr.mxu0 %v899
    %1368 = vmatpush2.msra.mxu0 %v898
    %1369 = vmatprep.subr.mxu0 %v893
    %1370 = vmatpush2.msra.mxu0 %v892
    %1371 = vmatprep.subr.mxu0 %v887
    %1372 = vmatpush2.msra.mxu0 %v886
    %1373 = vmatprep.subr.mxu0 %v881
    %1374 = vmatpush2.msra.mxu0 %v880
    %1375 = vmatprep.subr.mxu0 %v875
    %1376 = vmatpush2.msra.mxu0 %v874
    %1377 = vmatprep.subr.mxu0 %v869
    %1378 = vmatpush2.msra.mxu0 %v868
    %1379 = vmatprep.subr.mxu0 %v863
    %1380 = vmatpush2.msra.mxu0 %v862
    %1381 = vmatprep.subr.mxu0 %v857
    %1382 = vmatpush2.msra.mxu0 %v856
    %1383 = vmatprep.mubr.f32.mxu0 %v1166
    %1384 = vmatmul.mubr.f32.gmra.mxu0 %v1165
    %v1385 = vpop.f32.mrf.mxu0
    %v1386 = vadd.f32 %v1315, %v1385
    %v1387 = vpop.f32.mrf.mxu0
    %v1388 = vadd.f32 %v1317, %v1387
    %1389 = vdwg.mxu0
    %1390 = vmatprep.subr.mxu0 %v1043
    %1391 = vmatpush1.msra.mxu0 %v1042
    %1392 = vmatprep.subr.mxu0 %v1037
    %1393 = vmatpush1.msra.mxu0 %v1036
    %1394 = vmatprep.subr.mxu0 %v1031
    %1395 = vmatpush1.msra.mxu0 %v1030
    %1396 = vmatprep.subr.mxu0 %v1025
    %1397 = vmatpush1.msra.mxu0 %v1024
    %1398 = vmatprep.subr.mxu0 %v1019
    %1399 = vmatpush1.msra.mxu0 %v1018
    %1400 = vmatprep.subr.mxu0 %v1013
    %1401 = vmatpush1.msra.mxu0 %v1012
    %1402 = vmatprep.subr.mxu0 %v1007
    %1403 = vmatpush1.msra.mxu0 %v1006
    %1404 = vmatprep.subr.mxu0 %v1001
    %1405 = vmatpush1.msra.mxu0 %v1000
    %1406 = vmatprep.subr.mxu0 %v995
    %1407 = vmatpush1.msra.mxu0 %v994
    %1408 = vmatprep.subr.mxu0 %v989
    %1409 = vmatpush1.msra.mxu0 %v988
    %1410 = vmatprep.subr.mxu0 %v983
    %1411 = vmatpush1.msra.mxu0 %v982
    %1412 = vmatprep.subr.mxu0 %v977
    %1413 = vmatpush1.msra.mxu0 %v976
    %1414 = vmatprep.subr.mxu0 %v971
    %1415 = vmatpush1.msra.mxu0 %v970
    %1416 = vmatprep.subr.mxu0 %v965
    %1417 = vmatpush1.msra.mxu0 %v964
    %1418 = vmatprep.subr.mxu0 %v959
    %1419 = vmatpush1.msra.mxu0 %v958
    %1420 = vmatprep.subr.mxu0 %v953
    %1421 = vmatpush1.msra.mxu0 %v952
    %1422 = vmatprep.subr.mxu0 %v1139
    %1423 = vmatpush2.msra.mxu0 %v1138
    %1424 = vmatprep.subr.mxu0 %v1133
    %1425 = vmatpush2.msra.mxu0 %v1132
    %1426 = vmatprep.subr.mxu0 %v1127
    %1427 = vmatpush2.msra.mxu0 %v1126
    %1428 = vmatprep.subr.mxu0 %v1121
    %1429 = vmatpush2.msra.mxu0 %v1120
    %1430 = vmatprep.subr.mxu0 %v1115
    %1431 = vmatpush2.msra.mxu0 %v1114
    %1432 = vmatprep.subr.mxu0 %v1109
    %1433 = vmatpush2.msra.mxu0 %v1108
    %1434 = vmatprep.subr.mxu0 %v1103
    %1435 = vmatpush2.msra.mxu0 %v1102
    %1436 = vmatprep.subr.mxu0 %v1097
    %1437 = vmatpush2.msra.mxu0 %v1096
    %1438 = vmatprep.subr.mxu0 %v1091
    %1439 = vmatpush2.msra.mxu0 %v1090
    %1440 = vmatprep.subr.mxu0 %v1085
    %1441 = vmatpush2.msra.mxu0 %v1084
    %1442 = vmatprep.subr.mxu0 %v1079
    %1443 = vmatpush2.msra.mxu0 %v1078
    %1444 = vmatprep.subr.mxu0 %v1073
    %1445 = vmatpush2.msra.mxu0 %v1072
    %1446 = vmatprep.subr.mxu0 %v1067
    %1447 = vmatpush2.msra.mxu0 %v1066
    %1448 = vmatprep.subr.mxu0 %v1061
    %1449 = vmatpush2.msra.mxu0 %v1060
    %1450 = vmatprep.subr.mxu0 %v1055
    %1451 = vmatpush2.msra.mxu0 %v1054
    %1452 = vmatprep.subr.mxu0 %v1049
    %1453 = vmatpush2.msra.mxu0 %v1048
    %1454 = vmatprep.mubr.f32.mxu0 %v1168
    %1455 = vmatmul.mubr.f32.gmra.mxu0 %v1167
    %v1456 = vpop.f32.mrf.mxu0
    %v1457 = vadd.f32 %v1386, %v1456
    %v1458 = vpop.f32.mrf.mxu0
    %v1459 = vadd.f32 %v1388, %v1458
    %1460 = vdwg.mxu0
    %1461 = vmatprep.subr.mxu0 %v469
    %1462 = vmatpush1.msra.mxu0 %v468
    %1463 = vmatprep.subr.mxu0 %v463
    %1464 = vmatpush1.msra.mxu0 %v462
    %1465 = vmatprep.subr.mxu0 %v457
    %1466 = vmatpush1.msra.mxu0 %v456
    %1467 = vmatprep.subr.mxu0 %v451
    %1468 = vmatpush1.msra.mxu0 %v450
    %1469 = vmatprep.subr.mxu0 %v445
    %1470 = vmatpush1.msra.mxu0 %v444
    %1471 = vmatprep.subr.mxu0 %v439
    %1472 = vmatpush1.msra.mxu0 %v438
    %1473 = vmatprep.subr.mxu0 %v433
    %1474 = vmatpush1.msra.mxu0 %v432
    %1475 = vmatprep.subr.mxu0 %v427
    %1476 = vmatpush1.msra.mxu0 %v426
    %1477 = vmatprep.subr.mxu0 %v421
    %1478 = vmatpush1.msra.mxu0 %v420
    %1479 = vmatprep.subr.mxu0 %v415
    %1480 = vmatpush1.msra.mxu0 %v414
    %1481 = vmatprep.subr.mxu0 %v409
    %1482 = vmatpush1.msra.mxu0 %v408
    %1483 = vmatprep.subr.mxu0 %v403
    %1484 = vmatpush1.msra.mxu0 %v402
    %1485 = vmatprep.subr.mxu0 %v397
    %1486 = vmatpush1.msra.mxu0 %v396
    %1487 = vmatprep.subr.mxu0 %v391
    %1488 = vmatpush1.msra.mxu0 %v390
    %1489 = vmatprep.subr.mxu0 %v385
    %1490 = vmatpush1.msra.mxu0 %v384
    %1491 = vmatprep.subr.mxu0 %v379
    %1492 = vmatpush1.msra.mxu0 %v378
    %1493 = vmatprep.subr.mxu0 %v565
    %1494 = vmatpush2.msra.mxu0 %v564
    %1495 = vmatprep.subr.mxu0 %v559
    %1496 = vmatpush2.msra.mxu0 %v558
    %1497 = vmatprep.subr.mxu0 %v553
    %1498 = vmatpush2.msra.mxu0 %v552
    %1499 = vmatprep.subr.mxu0 %v547
    %1500 = vmatpush2.msra.mxu0 %v546
    %1501 = vmatprep.subr.mxu0 %v541
    %1502 = vmatpush2.msra.mxu0 %v540
    %1503 = vmatprep.subr.mxu0 %v535
    %1504 = vmatpush2.msra.mxu0 %v534
    %1505 = vmatprep.subr.mxu0 %v529
    %1506 = vmatpush2.msra.mxu0 %v528
    %1507 = vmatprep.subr.mxu0 %v523
    %1508 = vmatpush2.msra.mxu0 %v522
    %1509 = vmatprep.subr.mxu0 %v517
    %1510 = vmatpush2.msra.mxu0 %v516
    %1511 = vmatprep.subr.mxu0 %v511
    %1512 = vmatpush2.msra.mxu0 %v510
    %1513 = vmatprep.subr.mxu0 %v505
    %1514 = vmatpush2.msra.mxu0 %v504
    %1515 = vmatprep.subr.mxu0 %v499
    %1516 = vmatpush2.msra.mxu0 %v498
    %1517 = vmatprep.subr.mxu0 %v493
    %1518 = vmatpush2.msra.mxu0 %v492
    %1519 = vmatprep.subr.mxu0 %v487
    %1520 = vmatpush2.msra.mxu0 %v486
    %1521 = vmatprep.subr.mxu0 %v481
    %1522 = vmatpush2.msra.mxu0 %v480
    %1523 = vmatprep.subr.mxu0 %v475
    %1524 = vmatpush2.msra.mxu0 %v474
    %1525 = vmatprep.mubr.f32.mxu0 %v1162
    %1526 = vmatmul.mubr.f32.gmra.mxu0 %v1161
    %v1527 = vpop.f32.mrf.mxu0
    %v1528 = vadd.f32 0.0, %v1527
    %v1529 = vpop.f32.mrf.mxu0
    %v1530 = vadd.f32 0.0, %v1529
    %1531 = vdwg.mxu0
    %1532 = vmatprep.subr.mxu0 %v661
    %1533 = vmatpush1.msra.mxu0 %v660
    %1534 = vmatprep.subr.mxu0 %v655
    %1535 = vmatpush1.msra.mxu0 %v654
    %1536 = vmatprep.subr.mxu0 %v649
    %1537 = vmatpush1.msra.mxu0 %v648
    %1538 = vmatprep.subr.mxu0 %v643
    %1539 = vmatpush1.msra.mxu0 %v642
    %1540 = vmatprep.subr.mxu0 %v637
    %1541 = vmatpush1.msra.mxu0 %v636
    %1542 = vmatprep.subr.mxu0 %v631
    %1543 = vmatpush1.msra.mxu0 %v630
    %1544 = vmatprep.subr.mxu0 %v625
    %1545 = vmatpush1.msra.mxu0 %v624
    %1546 = vmatprep.subr.mxu0 %v619
    %1547 = vmatpush1.msra.mxu0 %v618
    %1548 = vmatprep.subr.mxu0 %v613
    %1549 = vmatpush1.msra.mxu0 %v612
    %1550 = vmatprep.subr.mxu0 %v607
    %1551 = vmatpush1.msra.mxu0 %v606
    %1552 = vmatprep.subr.mxu0 %v601
    %1553 = vmatpush1.msra.mxu0 %v600
    %1554 = vmatprep.subr.mxu0 %v595
    %1555 = vmatpush1.msra.mxu0 %v594
    %1556 = vmatprep.subr.mxu0 %v589
    %1557 = vmatpush1.msra.mxu0 %v588
    %1558 = vmatprep.subr.mxu0 %v583
    %1559 = vmatpush1.msra.mxu0 %v582
    %1560 = vmatprep.subr.mxu0 %v577
    %1561 = vmatpush1.msra.mxu0 %v576
    %1562 = vmatprep.subr.mxu0 %v571
    %1563 = vmatpush1.msra.mxu0 %v570
    %1564 = vmatprep.subr.mxu0 %v757
    %1565 = vmatpush2.msra.mxu0 %v756
    %1566 = vmatprep.subr.mxu0 %v751
    %1567 = vmatpush2.msra.mxu0 %v750
    %1568 = vmatprep.subr.mxu0 %v745
    %1569 = vmatpush2.msra.mxu0 %v744
    %1570 = vmatprep.subr.mxu0 %v739
    %1571 = vmatpush2.msra.mxu0 %v738
    %1572 = vmatprep.subr.mxu0 %v733
    %1573 = vmatpush2.msra.mxu0 %v732
    %1574 = vmatprep.subr.mxu0 %v727
    %1575 = vmatpush2.msra.mxu0 %v726
    %1576 = vmatprep.subr.mxu0 %v721
    %1577 = vmatpush2.msra.mxu0 %v720
    %1578 = vmatprep.subr.mxu0 %v715
    %1579 = vmatpush2.msra.mxu0 %v714
    %1580 = vmatprep.subr.mxu0 %v709
    %1581 = vmatpush2.msra.mxu0 %v708
    %1582 = vmatprep.subr.mxu0 %v703
    %1583 = vmatpush2.msra.mxu0 %v702
    %1584 = vmatprep.subr.mxu0 %v697
    %1585 = vmatpush2.msra.mxu0 %v696
    %1586 = vmatprep.subr.mxu0 %v691
    %1587 = vmatpush2.msra.mxu0 %v690
    %1588 = vmatprep.subr.mxu0 %v685
    %1589 = vmatpush2.msra.mxu0 %v684
    %1590 = vmatprep.subr.mxu0 %v679
    %1591 = vmatpush2.msra.mxu0 %v678
    %1592 = vmatprep.subr.mxu0 %v673
    %1593 = vmatpush2.msra.mxu0 %v672
    %1594 = vmatprep.subr.mxu0 %v667
    %1595 = vmatpush2.msra.mxu0 %v666
    %1596 = vmatprep.mubr.f32.mxu0 %v1164
    %1597 = vmatmul.mubr.f32.gmra.mxu0 %v1163
    %v1598 = vpop.f32.mrf.mxu0
    %v1599 = vadd.f32 %v1528, %v1598
    %v1600 = vpop.f32.mrf.mxu0
    %v1601 = vadd.f32 %v1530, %v1600
    %1602 = vdwg.mxu0
    %1603 = vmatprep.subr.mxu0 %v853
    %1604 = vmatpush1.msra.mxu0 %v852
    %1605 = vmatprep.subr.mxu0 %v847
    %1606 = vmatpush1.msra.mxu0 %v846
    %1607 = vmatprep.subr.mxu0 %v841
    %1608 = vmatpush1.msra.mxu0 %v840
    %1609 = vmatprep.subr.mxu0 %v835
    %1610 = vmatpush1.msra.mxu0 %v834
    %1611 = vmatprep.subr.mxu0 %v829
    %1612 = vmatpush1.msra.mxu0 %v828
    %1613 = vmatprep.subr.mxu0 %v823
    %1614 = vmatpush1.msra.mxu0 %v822
    %1615 = vmatprep.subr.mxu0 %v817
    %1616 = vmatpush1.msra.mxu0 %v816
    %1617 = vmatprep.subr.mxu0 %v811
    %1618 = vmatpush1.msra.mxu0 %v810
    %1619 = vmatprep.subr.mxu0 %v805
    %1620 = vmatpush1.msra.mxu0 %v804
    %1621 = vmatprep.subr.mxu0 %v799
    %1622 = vmatpush1.msra.mxu0 %v798
    %1623 = vmatprep.subr.mxu0 %v793
    %1624 = vmatpush1.msra.mxu0 %v792
    %1625 = vmatprep.subr.mxu0 %v787
    %1626 = vmatpush1.msra.mxu0 %v786
    %1627 = vmatprep.subr.mxu0 %v781
    %1628 = vmatpush1.msra.mxu0 %v780
    %1629 = vmatprep.subr.mxu0 %v775
    %1630 = vmatpush1.msra.mxu0 %v774
    %1631 = vmatprep.subr.mxu0 %v769
    %1632 = vmatpush1.msra.mxu0 %v768
    %1633 = vmatprep.subr.mxu0 %v763
    %1634 = vmatpush1.msra.mxu0 %v762
    %1635 = vmatprep.subr.mxu0 %v949
    %1636 = vmatpush2.msra.mxu0 %v948
    %1637 = vmatprep.subr.mxu0 %v943
    %1638 = vmatpush2.msra.mxu0 %v942
    %1639 = vmatprep.subr.mxu0 %v937
    %1640 = vmatpush2.msra.mxu0 %v936
    %1641 = vmatprep.subr.mxu0 %v931
    %1642 = vmatpush2.msra.mxu0 %v930
    %1643 = vmatprep.subr.mxu0 %v925
    %1644 = vmatpush2.msra.mxu0 %v924
    %1645 = vmatprep.subr.mxu0 %v919
    %1646 = vmatpush2.msra.mxu0 %v918
    %1647 = vmatprep.subr.mxu0 %v913
    %1648 = vmatpush2.msra.mxu0 %v912
    %1649 = vmatprep.subr.mxu0 %v907
    %1650 = vmatpush2.msra.mxu0 %v906
    %1651 = vmatprep.subr.mxu0 %v901
    %1652 = vmatpush2.msra.mxu0 %v900
    %1653 = vmatprep.subr.mxu0 %v895
    %1654 = vmatpush2.msra.mxu0 %v894
    %1655 = vmatprep.subr.mxu0 %v889
    %1656 = vmatpush2.msra.mxu0 %v888
    %1657 = vmatprep.subr.mxu0 %v883
    %1658 = vmatpush2.msra.mxu0 %v882
    %1659 = vmatprep.subr.mxu0 %v877
    %1660 = vmatpush2.msra.mxu0 %v876
    %1661 = vmatprep.subr.mxu0 %v871
    %1662 = vmatpush2.msra.mxu0 %v870
    %1663 = vmatprep.subr.mxu0 %v865
    %1664 = vmatpush2.msra.mxu0 %v864
    %1665 = vmatprep.subr.mxu0 %v859
    %1666 = vmatpush2.msra.mxu0 %v858
    %1667 = vmatprep.mubr.f32.mxu0 %v1166
    %1668 = vmatmul.mubr.f32.gmra.mxu0 %v1165
    %v1669 = vpop.f32.mrf.mxu0
    %v1670 = vadd.f32 %v1599, %v1669
    %v1671 = vpop.f32.mrf.mxu0
    %v1672 = vadd.f32 %v1601, %v1671
    %1673 = vdwg.mxu0
    %1674 = vmatprep.subr.mxu0 %v1045
    %1675 = vmatpush1.msra.mxu0 %v1044
    %1676 = vmatprep.subr.mxu0 %v1039
    %1677 = vmatpush1.msra.mxu0 %v1038
    %1678 = vmatprep.subr.mxu0 %v1033
    %1679 = vmatpush1.msra.mxu0 %v1032
    %1680 = vmatprep.subr.mxu0 %v1027
    %1681 = vmatpush1.msra.mxu0 %v1026
    %1682 = vmatprep.subr.mxu0 %v1021
    %1683 = vmatpush1.msra.mxu0 %v1020
    %1684 = vmatprep.subr.mxu0 %v1015
    %1685 = vmatpush1.msra.mxu0 %v1014
    %1686 = vmatprep.subr.mxu0 %v1009
    %1687 = vmatpush1.msra.mxu0 %v1008
    %1688 = vmatprep.subr.mxu0 %v1003
    %1689 = vmatpush1.msra.mxu0 %v1002
    %1690 = vmatprep.subr.mxu0 %v997
    %1691 = vmatpush1.msra.mxu0 %v996
    %1692 = vmatprep.subr.mxu0 %v991
    %1693 = vmatpush1.msra.mxu0 %v990
    %1694 = vmatprep.subr.mxu0 %v985
    %1695 = vmatpush1.msra.mxu0 %v984
    %1696 = vmatprep.subr.mxu0 %v979
    %1697 = vmatpush1.msra.mxu0 %v978
    %1698 = vmatprep.subr.mxu0 %v973
    %1699 = vmatpush1.msra.mxu0 %v972
    %1700 = vmatprep.subr.mxu0 %v967
    %1701 = vmatpush1.msra.mxu0 %v966
    %1702 = vmatprep.subr.mxu0 %v961
    %1703 = vmatpush1.msra.mxu0 %v960
    %1704 = vmatprep.subr.mxu0 %v955
    %1705 = vmatpush1.msra.mxu0 %v954
    %1706 = vmatprep.subr.mxu0 %v1141
    %1707 = vmatpush2.msra.mxu0 %v1140
    %1708 = vmatprep.subr.mxu0 %v1135
    %1709 = vmatpush2.msra.mxu0 %v1134
    %1710 = vmatprep.subr.mxu0 %v1129
    %1711 = vmatpush2.msra.mxu0 %v1128
    %1712 = vmatprep.subr.mxu0 %v1123
    %1713 = vmatpush2.msra.mxu0 %v1122
    %1714 = vmatprep.subr.mxu0 %v1117
    %1715 = vmatpush2.msra.mxu0 %v1116
    %1716 = vmatprep.subr.mxu0 %v1111
    %1717 = vmatpush2.msra.mxu0 %v1110
    %1718 = vmatprep.subr.mxu0 %v1105
    %1719 = vmatpush2.msra.mxu0 %v1104
    %1720 = vmatprep.subr.mxu0 %v1099
    %1721 = vmatpush2.msra.mxu0 %v1098
    %1722 = vmatprep.subr.mxu0 %v1093
    %1723 = vmatpush2.msra.mxu0 %v1092
    %1724 = vmatprep.subr.mxu0 %v1087
    %1725 = vmatpush2.msra.mxu0 %v1086
    %1726 = vmatprep.subr.mxu0 %v1081
    %1727 = vmatpush2.msra.mxu0 %v1080
    %1728 = vmatprep.subr.mxu0 %v1075
    %1729 = vmatpush2.msra.mxu0 %v1074
    %1730 = vmatprep.subr.mxu0 %v1069
    %1731 = vmatpush2.msra.mxu0 %v1068
    %1732 = vmatprep.subr.mxu0 %v1063
    %1733 = vmatpush2.msra.mxu0 %v1062
    %1734 = vmatprep.subr.mxu0 %v1057
    %1735 = vmatpush2.msra.mxu0 %v1056
    %1736 = vmatprep.subr.mxu0 %v1051
    %1737 = vmatpush2.msra.mxu0 %v1050
    %1738 = vmatprep.mubr.f32.mxu0 %v1168
    %1739 = vmatmul.mubr.f32.gmra.mxu0 %v1167
    %v1740 = vpop.f32.mrf.mxu0
    %v1741 = vadd.f32 %v1670, %v1740
    %v1742 = vpop.f32.mrf.mxu0
    %v1743 = vadd.f32 %v1672, %v1742
    %1744 = vdwg.mxu0
    %1745 = vmatprep.subr.mxu0 %v471
    %1746 = vmatpush1.msra.mxu0 %v470
    %1747 = vmatprep.subr.mxu0 %v465
    %1748 = vmatpush1.msra.mxu0 %v464
    %1749 = vmatprep.subr.mxu0 %v459
    %1750 = vmatpush1.msra.mxu0 %v458
    %1751 = vmatprep.subr.mxu0 %v453
    %1752 = vmatpush1.msra.mxu0 %v452
    %1753 = vmatprep.subr.mxu0 %v447
    %1754 = vmatpush1.msra.mxu0 %v446
    %1755 = vmatprep.subr.mxu0 %v441
    %1756 = vmatpush1.msra.mxu0 %v440
    %1757 = vmatprep.subr.mxu0 %v435
    %1758 = vmatpush1.msra.mxu0 %v434
    %1759 = vmatprep.subr.mxu0 %v429
    %1760 = vmatpush1.msra.mxu0 %v428
    %1761 = vmatprep.subr.mxu0 %v423
    %1762 = vmatpush1.msra.mxu0 %v422
    %1763 = vmatprep.subr.mxu0 %v417
    %1764 = vmatpush1.msra.mxu0 %v416
    %1765 = vmatprep.subr.mxu0 %v411
    %1766 = vmatpush1.msra.mxu0 %v410
    %1767 = vmatprep.subr.mxu0 %v405
    %1768 = vmatpush1.msra.mxu0 %v404
    %1769 = vmatprep.subr.mxu0 %v399
    %1770 = vmatpush1.msra.mxu0 %v398
    %1771 = vmatprep.subr.mxu0 %v393
    %1772 = vmatpush1.msra.mxu0 %v392
    %1773 = vmatprep.subr.mxu0 %v387
    %1774 = vmatpush1.msra.mxu0 %v386
    %1775 = vmatprep.subr.mxu0 %v381
    %1776 = vmatpush1.msra.mxu0 %v380
    %1777 = vmatprep.subr.mxu0 %v567
    %1778 = vmatpush2.msra.mxu0 %v566
    %1779 = vmatprep.subr.mxu0 %v561
    %1780 = vmatpush2.msra.mxu0 %v560
    %1781 = vmatprep.subr.mxu0 %v555
    %1782 = vmatpush2.msra.mxu0 %v554
    %1783 = vmatprep.subr.mxu0 %v549
    %1784 = vmatpush2.msra.mxu0 %v548
    %1785 = vmatprep.subr.mxu0 %v543
    %1786 = vmatpush2.msra.mxu0 %v542
    %1787 = vmatprep.subr.mxu0 %v537
    %1788 = vmatpush2.msra.mxu0 %v536
    %1789 = vmatprep.subr.mxu0 %v531
    %1790 = vmatpush2.msra.mxu0 %v530
    %1791 = vmatprep.subr.mxu0 %v525
    %1792 = vmatpush2.msra.mxu0 %v524
    %1793 = vmatprep.subr.mxu0 %v519
    %1794 = vmatpush2.msra.mxu0 %v518
    %1795 = vmatprep.subr.mxu0 %v513
    %1796 = vmatpush2.msra.mxu0 %v512
    %1797 = vmatprep.subr.mxu0 %v507
    %1798 = vmatpush2.msra.mxu0 %v506
    %1799 = vmatprep.subr.mxu0 %v501
    %1800 = vmatpush2.msra.mxu0 %v500
    %1801 = vmatprep.subr.mxu0 %v495
    %1802 = vmatpush2.msra.mxu0 %v494
    %1803 = vmatprep.subr.mxu0 %v489
    %1804 = vmatpush2.msra.mxu0 %v488
    %1805 = vmatprep.subr.mxu0 %v483
    %1806 = vmatpush2.msra.mxu0 %v482
    %1807 = vmatprep.subr.mxu0 %v477
    %1808 = vmatpush2.msra.mxu0 %v476
    %1809 = vmatprep.mubr.f32.mxu0 %v1162
    %1810 = vmatmul.mubr.f32.gmra.mxu0 %v1161
    %v1811 = vpop.f32.mrf.mxu0
    %v1812 = vadd.f32 0.0, %v1811
    %v1813 = vpop.f32.mrf.mxu0
    %v1814 = vadd.f32 0.0, %v1813
    %1815 = vdwg.mxu0
    %1816 = vmatprep.subr.mxu0 %v663
    %1817 = vmatpush1.msra.mxu0 %v662
    %1818 = vmatprep.subr.mxu0 %v657
    %1819 = vmatpush1.msra.mxu0 %v656
    %1820 = vmatprep.subr.mxu0 %v651
    %1821 = vmatpush1.msra.mxu0 %v650
    %1822 = vmatprep.subr.mxu0 %v645
    %1823 = vmatpush1.msra.mxu0 %v644
    %1824 = vmatprep.subr.mxu0 %v639
    %1825 = vmatpush1.msra.mxu0 %v638
    %1826 = vmatprep.subr.mxu0 %v633
    %1827 = vmatpush1.msra.mxu0 %v632
    %1828 = vmatprep.subr.mxu0 %v627
    %1829 = vmatpush1.msra.mxu0 %v626
    %1830 = vmatprep.subr.mxu0 %v621
    %1831 = vmatpush1.msra.mxu0 %v620
    %1832 = vmatprep.subr.mxu0 %v615
    %1833 = vmatpush1.msra.mxu0 %v614
    %1834 = vmatprep.subr.mxu0 %v609
    %1835 = vmatpush1.msra.mxu0 %v608
    %1836 = vmatprep.subr.mxu0 %v603
    %1837 = vmatpush1.msra.mxu0 %v602
    %1838 = vmatprep.subr.mxu0 %v597
    %1839 = vmatpush1.msra.mxu0 %v596
    %1840 = vmatprep.subr.mxu0 %v591
    %1841 = vmatpush1.msra.mxu0 %v590
    %1842 = vmatprep.subr.mxu0 %v585
    %1843 = vmatpush1.msra.mxu0 %v584
    %1844 = vmatprep.subr.mxu0 %v579
    %1845 = vmatpush1.msra.mxu0 %v578
    %1846 = vmatprep.subr.mxu0 %v573
    %1847 = vmatpush1.msra.mxu0 %v572
    %1848 = vmatprep.subr.mxu0 %v759
    %1849 = vmatpush2.msra.mxu0 %v758
    %1850 = vmatprep.subr.mxu0 %v753
    %1851 = vmatpush2.msra.mxu0 %v752
    %1852 = vmatprep.subr.mxu0 %v747
    %1853 = vmatpush2.msra.mxu0 %v746
    %1854 = vmatprep.subr.mxu0 %v741
    %1855 = vmatpush2.msra.mxu0 %v740
    %1856 = vmatprep.subr.mxu0 %v735
    %1857 = vmatpush2.msra.mxu0 %v734
    %1858 = vmatprep.subr.mxu0 %v729
    %1859 = vmatpush2.msra.mxu0 %v728
    %1860 = vmatprep.subr.mxu0 %v723
    %1861 = vmatpush2.msra.mxu0 %v722
    %1862 = vmatprep.subr.mxu0 %v717
    %1863 = vmatpush2.msra.mxu0 %v716
    %1864 = vmatprep.subr.mxu0 %v711
    %1865 = vmatpush2.msra.mxu0 %v710
    %1866 = vmatprep.subr.mxu0 %v705
    %1867 = vmatpush2.msra.mxu0 %v704
    %1868 = vmatprep.subr.mxu0 %v699
    %1869 = vmatpush2.msra.mxu0 %v698
    %1870 = vmatprep.subr.mxu0 %v693
    %1871 = vmatpush2.msra.mxu0 %v692
    %1872 = vmatprep.subr.mxu0 %v687
    %1873 = vmatpush2.msra.mxu0 %v686
    %1874 = vmatprep.subr.mxu0 %v681
    %1875 = vmatpush2.msra.mxu0 %v680
    %1876 = vmatprep.subr.mxu0 %v675
    %1877 = vmatpush2.msra.mxu0 %v674
    %1878 = vmatprep.subr.mxu0 %v669
    %1879 = vmatpush2.msra.mxu0 %v668
    %1880 = vmatprep.mubr.f32.mxu0 %v1164
    %1881 = vmatmul.mubr.f32.gmra.mxu0 %v1163
    %v1882 = vpop.f32.mrf.mxu0
    %v1883 = vadd.f32 %v1812, %v1882
    %v1884 = vpop.f32.mrf.mxu0
    %v1885 = vadd.f32 %v1814, %v1884
    %1886 = vdwg.mxu0
    %1887 = vmatprep.subr.mxu0 %v855
    %1888 = vmatpush1.msra.mxu0 %v854
    %1889 = vmatprep.subr.mxu0 %v849
    %1890 = vmatpush1.msra.mxu0 %v848
    %1891 = vmatprep.subr.mxu0 %v843
    %1892 = vmatpush1.msra.mxu0 %v842
    %1893 = vmatprep.subr.mxu0 %v837
    %1894 = vmatpush1.msra.mxu0 %v836
    %1895 = vmatprep.subr.mxu0 %v831
    %1896 = vmatpush1.msra.mxu0 %v830
    %1897 = vmatprep.subr.mxu0 %v825
    %1898 = vmatpush1.msra.mxu0 %v824
    %1899 = vmatprep.subr.mxu0 %v819
    %1900 = vmatpush1.msra.mxu0 %v818
    %1901 = vmatprep.subr.mxu0 %v813
    %1902 = vmatpush1.msra.mxu0 %v812
    %1903 = vmatprep.subr.mxu0 %v807
    %1904 = vmatpush1.msra.mxu0 %v806
    %1905 = vmatprep.subr.mxu0 %v801
    %1906 = vmatpush1.msra.mxu0 %v800
    %1907 = vmatprep.subr.mxu0 %v795
    %1908 = vmatpush1.msra.mxu0 %v794
    %1909 = vmatprep.subr.mxu0 %v789
    %1910 = vmatpush1.msra.mxu0 %v788
    %1911 = vmatprep.subr.mxu0 %v783
    %1912 = vmatpush1.msra.mxu0 %v782
    %1913 = vmatprep.subr.mxu0 %v777
    %1914 = vmatpush1.msra.mxu0 %v776
    %1915 = vmatprep.subr.mxu0 %v771
    %1916 = vmatpush1.msra.mxu0 %v770
    %1917 = vmatprep.subr.mxu0 %v765
    %1918 = vmatpush1.msra.mxu0 %v764
    %1919 = vmatprep.subr.mxu0 %v951
    %1920 = vmatpush2.msra.mxu0 %v950
    %1921 = vmatprep.subr.mxu0 %v945
    %1922 = vmatpush2.msra.mxu0 %v944
    %1923 = vmatprep.subr.mxu0 %v939
    %1924 = vmatpush2.msra.mxu0 %v938
    %1925 = vmatprep.subr.mxu0 %v933
    %1926 = vmatpush2.msra.mxu0 %v932
    %1927 = vmatprep.subr.mxu0 %v927
    %1928 = vmatpush2.msra.mxu0 %v926
    %1929 = vmatprep.subr.mxu0 %v921
    %1930 = vmatpush2.msra.mxu0 %v920
    %1931 = vmatprep.subr.mxu0 %v915
    %1932 = vmatpush2.msra.mxu0 %v914
    %1933 = vmatprep.subr.mxu0 %v909
    %1934 = vmatpush2.msra.mxu0 %v908
    %1935 = vmatprep.subr.mxu0 %v903
    %1936 = vmatpush2.msra.mxu0 %v902
    %1937 = vmatprep.subr.mxu0 %v897
    %1938 = vmatpush2.msra.mxu0 %v896
    %1939 = vmatprep.subr.mxu0 %v891
    %1940 = vmatpush2.msra.mxu0 %v890
    %1941 = vmatprep.subr.mxu0 %v885
    %1942 = vmatpush2.msra.mxu0 %v884
    %1943 = vmatprep.subr.mxu0 %v879
    %1944 = vmatpush2.msra.mxu0 %v878
    %1945 = vmatprep.subr.mxu0 %v873
    %1946 = vmatpush2.msra.mxu0 %v872
    %1947 = vmatprep.subr.mxu0 %v867
    %1948 = vmatpush2.msra.mxu0 %v866
    %1949 = vmatprep.subr.mxu0 %v861
    %1950 = vmatpush2.msra.mxu0 %v860
    %1951 = vmatprep.mubr.f32.mxu0 %v1166
    %1952 = vmatmul.mubr.f32.gmra.mxu0 %v1165
    %v1953 = vpop.f32.mrf.mxu0
    %v1954 = vadd.f32 %v1883, %v1953
    %v1955 = vpop.f32.mrf.mxu0
    %v1956 = vadd.f32 %v1885, %v1955
    %1957 = vdwg.mxu0
    %1958 = vmatprep.subr.mxu0 %v1047
    %1959 = vmatpush1.msra.mxu0 %v1046
    %1960 = vmatprep.subr.mxu0 %v1041
    %1961 = vmatpush1.msra.mxu0 %v1040
    %1962 = vmatprep.subr.mxu0 %v1035
    %1963 = vmatpush1.msra.mxu0 %v1034
    %1964 = vmatprep.subr.mxu0 %v1029
    %1965 = vmatpush1.msra.mxu0 %v1028
    %1966 = vmatprep.subr.mxu0 %v1023
    %1967 = vmatpush1.msra.mxu0 %v1022
    %1968 = vmatprep.subr.mxu0 %v1017
    %1969 = vmatpush1.msra.mxu0 %v1016
    %1970 = vmatprep.subr.mxu0 %v1011
    %1971 = vmatpush1.msra.mxu0 %v1010
    %1972 = vmatprep.subr.mxu0 %v1005
    %1973 = vmatpush1.msra.mxu0 %v1004
    %1974 = vmatprep.subr.mxu0 %v999
    %1975 = vmatpush1.msra.mxu0 %v998
    %1976 = vmatprep.subr.mxu0 %v993
    %1977 = vmatpush1.msra.mxu0 %v992
    %1978 = vmatprep.subr.mxu0 %v987
    %1979 = vmatpush1.msra.mxu0 %v986
    %1980 = vmatprep.subr.mxu0 %v981
    %1981 = vmatpush1.msra.mxu0 %v980
    %1982 = vmatprep.subr.mxu0 %v975
    %1983 = vmatpush1.msra.mxu0 %v974
    %1984 = vmatprep.subr.mxu0 %v969
    %1985 = vmatpush1.msra.mxu0 %v968
    %1986 = vmatprep.subr.mxu0 %v963
    %1987 = vmatpush1.msra.mxu0 %v962
    %1988 = vmatprep.subr.mxu0 %v957
    %1989 = vmatpush1.msra.mxu0 %v956
    %1990 = vmatprep.subr.mxu0 %v1143
    %1991 = vmatpush2.msra.mxu0 %v1142
    %1992 = vmatprep.subr.mxu0 %v1137
    %1993 = vmatpush2.msra.mxu0 %v1136
    %1994 = vmatprep.subr.mxu0 %v1131
    %1995 = vmatpush2.msra.mxu0 %v1130
    %1996 = vmatprep.subr.mxu0 %v1125
    %1997 = vmatpush2.msra.mxu0 %v1124
    %1998 = vmatprep.subr.mxu0 %v1119
    %1999 = vmatpush2.msra.mxu0 %v1118
    %2000 = vmatprep.subr.mxu0 %v1113
    %2001 = vmatpush2.msra.mxu0 %v1112
    %2002 = vmatprep.subr.mxu0 %v1107
    %2003 = vmatpush2.msra.mxu0 %v1106
    %2004 = vmatprep.subr.mxu0 %v1101
    %2005 = vmatpush2.msra.mxu0 %v1100
    %2006 = vmatprep.subr.mxu0 %v1095
    %2007 = vmatpush2.msra.mxu0 %v1094
    %2008 = vmatprep.subr.mxu0 %v1089
    %2009 = vmatpush2.msra.mxu0 %v1088
    %2010 = vmatprep.subr.mxu0 %v1083
    %2011 = vmatpush2.msra.mxu0 %v1082
    %2012 = vmatprep.subr.mxu0 %v1077
    %2013 = vmatpush2.msra.mxu0 %v1076
    %2014 = vmatprep.subr.mxu0 %v1071
    %2015 = vmatpush2.msra.mxu0 %v1070
    %2016 = vmatprep.subr.mxu0 %v1065
    %2017 = vmatpush2.msra.mxu0 %v1064
    %2018 = vmatprep.subr.mxu0 %v1059
    %2019 = vmatpush2.msra.mxu0 %v1058
    %2020 = vmatprep.subr.mxu0 %v1053
    %2021 = vmatpush2.msra.mxu0 %v1052
    %2022 = vmatprep.mubr.f32.mxu0 %v1168
    %2023 = vmatmul.mubr.f32.gmra.mxu0 %v1167
    %v2024 = vpop.f32.mrf.mxu0
    %v2025 = vadd.f32 %v1954, %v2024
    %v2026 = vpop.f32.mrf.mxu0
    %v2027 = vadd.f32 %v1956, %v2026
    %2028 = vdwg.mxu0
    %vm2029 = vcmask 58368
    %v2030 = vsel %vm2029, %v206, 0.0
    %2031 = vadd.xlane.f32.xlu0 %v2030
    %v2032 = vpop.xlane.xlu0 %2031
    %v2033 = vmax.f32 %v2032, 1.0
    %v2034 = vrcp.pop %v2033
    %v2035 = vmul.f32 %v1457, %v2034
    %v2036 = vmul.f32 %v1459, %v2034
    %v2037 = vmul.f32 %v1741, %v2034
    %v2038 = vmul.f32 %v1743, %v2034
    %v2039 = vmul.f32 %v2025, %v2034
    %v2040 = vmul.f32 %v2027, %v2034
    %v2041 = vpack.c.bf16 %v2035, %v2035
    %v2042 = vpack.c.bf16 %v2036, %v2036
    %v2043 = vpack.c.bf16 %v2037, %v2037
    %v2044 = vpack.c.bf16 %v2038, %v2038
    %v2045 = vpack.c.bf16 %v2039, %v2039
    %v2046 = vpack.c.bf16 %v2040, %v2040
    %v2047 = vld [vmem:[#allocation10] sm:$0xff]
    %v2048 = vld [vmem:[#allocation10 + $0x8] sm:$0xff]
    %v2049 = vld [vmem:[#allocation10 + $0x10] sm:$0xff]
    %v2050 = vld [vmem:[#allocation10 + $0x18] sm:$0xff]
    %v2051 = vld [vmem:[#allocation10 + $0x20] sm:$0xff]
    %v2052 = vld [vmem:[#allocation10 + $0x28] sm:$0xff]
    %v2053 = vld [vmem:[#allocation10 + $0x30] sm:$0xff]
    %v2054 = vld [vmem:[#allocation10 + $0x38] sm:$0xff]
    %v2055 = vld [vmem:[#allocation10 + $0x40] sm:$0xff]
    %v2056 = vld [vmem:[#allocation10 + $0x48] sm:$0xff]
    %v2057 = vld [vmem:[#allocation10 + $0x50] sm:$0xff]
    %v2058 = vld [vmem:[#allocation10 + $0x58] sm:$0xff]
    %v2059 = vld [vmem:[#allocation10 + $0x60] sm:$0xff]
    %v2060 = vld [vmem:[#allocation10 + $0x68] sm:$0xff]
    %v2061 = vld [vmem:[#allocation10 + $0x70] sm:$0xff]
    %v2062 = vld [vmem:[#allocation10 + $0x78] sm:$0xff]
    %v2063 = vld [vmem:[#allocation10 + $0x80] sm:$0xff]
    %v2064 = vld [vmem:[#allocation10 + $0x88] sm:$0xff]
    %v2065 = vld [vmem:[#allocation10 + $0x90] sm:$0xff]
    %v2066 = vld [vmem:[#allocation10 + $0x98] sm:$0xff]
    %v2067 = vld [vmem:[#allocation10 + $0xa0] sm:$0xff]
    %v2068 = vld [vmem:[#allocation10 + $0xa8] sm:$0xff]
    %v2069 = vld [vmem:[#allocation10 + $0xb0] sm:$0xff]
    %v2070 = vld [vmem:[#allocation10 + $0xb8] sm:$0xff]
    %v2071 = vld [vmem:[#allocation10 + $0xc0] sm:$0xff]
    %v2072 = vld [vmem:[#allocation10 + $0xc8] sm:$0xff]
    %v2073 = vld [vmem:[#allocation10 + $0xd0] sm:$0xff]
    %v2074 = vld [vmem:[#allocation10 + $0xd8] sm:$0xff]
    %v2075 = vld [vmem:[#allocation10 + $0xe0] sm:$0xff]
    %v2076 = vld [vmem:[#allocation10 + $0xe8] sm:$0xff]
    %v2077 = vld [vmem:[#allocation10 + $0xf0] sm:$0xff]
    %v2078 = vld [vmem:[#allocation10 + $0xf8] sm:$0xff]
    %v2079 = vld [vmem:[#allocation10 + $0x100] sm:$0xff]
    %v2080 = vld [vmem:[#allocation10 + $0x108] sm:$0xff]
    %v2081 = vld [vmem:[#allocation10 + $0x110] sm:$0xff]
    %v2082 = vld [vmem:[#allocation10 + $0x118] sm:$0xff]
    %v2083 = vld [vmem:[#allocation10 + $0x120] sm:$0xff]
    %v2084 = vld [vmem:[#allocation10 + $0x128] sm:$0xff]
    %v2085 = vld [vmem:[#allocation10 + $0x130] sm:$0xff]
    %v2086 = vld [vmem:[#allocation10 + $0x138] sm:$0xff]
    %v2087 = vld [vmem:[#allocation10 + $0x140] sm:$0xff]
    %v2088 = vld [vmem:[#allocation10 + $0x148] sm:$0xff]
    %v2089 = vld [vmem:[#allocation10 + $0x150] sm:$0xff]
    %v2090 = vld [vmem:[#allocation10 + $0x158] sm:$0xff]
    %v2091 = vld [vmem:[#allocation10 + $0x160] sm:$0xff]
    %v2092 = vld [vmem:[#allocation10 + $0x168] sm:$0xff]
    %v2093 = vld [vmem:[#allocation10 + $0x170] sm:$0xff]
    %v2094 = vld [vmem:[#allocation10 + $0x178] sm:$0xff]
    %v2095 = vld [vmem:[#allocation10 + $0x180] sm:$0xff]
    %v2096 = vld [vmem:[#allocation10 + $0x188] sm:$0xff]
    %v2097 = vld [vmem:[#allocation10 + $0x190] sm:$0xff]
    %v2098 = vld [vmem:[#allocation10 + $0x198] sm:$0xff]
    %v2099 = vld [vmem:[#allocation10 + $0x1a0] sm:$0xff]
    %v2100 = vld [vmem:[#allocation10 + $0x1a8] sm:$0xff]
    %v2101 = vld [vmem:[#allocation10 + $0x1b0] sm:$0xff]
    %v2102 = vld [vmem:[#allocation10 + $0x1b8] sm:$0xff]
    %v2103 = vld [vmem:[#allocation10 + $0x1c0] sm:$0xff]
    %v2104 = vld [vmem:[#allocation10 + $0x1c8] sm:$0xff]
    %v2105 = vld [vmem:[#allocation10 + $0x1d0] sm:$0xff]
    %v2106 = vld [vmem:[#allocation10 + $0x1d8] sm:$0xff]
    %v2107 = vld [vmem:[#allocation10 + $0x1e0] sm:$0xff]
    %v2108 = vld [vmem:[#allocation10 + $0x1e8] sm:$0xff]
    %v2109 = vld [vmem:[#allocation10 + $0x1f0] sm:$0xff]
    %v2110 = vld [vmem:[#allocation10 + $0x1f8] sm:$0xff]
    %v2111 = vld [vmem:[#allocation10 + $0x200] sm:$0xff]
    %v2112 = vld [vmem:[#allocation10 + $0x208] sm:$0xff]
    %v2113 = vld [vmem:[#allocation10 + $0x210] sm:$0xff]
    %v2114 = vld [vmem:[#allocation10 + $0x218] sm:$0xff]
    %v2115 = vld [vmem:[#allocation10 + $0x220] sm:$0xff]
    %v2116 = vld [vmem:[#allocation10 + $0x228] sm:$0xff]
    %v2117 = vld [vmem:[#allocation10 + $0x230] sm:$0xff]
    %v2118 = vld [vmem:[#allocation10 + $0x238] sm:$0xff]
    %v2119 = vld [vmem:[#allocation10 + $0x240] sm:$0xff]
    %v2120 = vld [vmem:[#allocation10 + $0x248] sm:$0xff]
    %v2121 = vld [vmem:[#allocation10 + $0x250] sm:$0xff]
    %v2122 = vld [vmem:[#allocation10 + $0x258] sm:$0xff]
    %v2123 = vld [vmem:[#allocation10 + $0x260] sm:$0xff]
    %v2124 = vld [vmem:[#allocation10 + $0x268] sm:$0xff]
    %v2125 = vld [vmem:[#allocation10 + $0x270] sm:$0xff]
    %v2126 = vld [vmem:[#allocation10 + $0x278] sm:$0xff]
    %v2127 = vld [vmem:[#allocation10 + $0x280] sm:$0xff]
    %v2128 = vld [vmem:[#allocation10 + $0x288] sm:$0xff]
    %v2129 = vld [vmem:[#allocation10 + $0x290] sm:$0xff]
    %v2130 = vld [vmem:[#allocation10 + $0x298] sm:$0xff]
    %v2131 = vld [vmem:[#allocation10 + $0x2a0] sm:$0xff]
    %v2132 = vld [vmem:[#allocation10 + $0x2a8] sm:$0xff]
    %v2133 = vld [vmem:[#allocation10 + $0x2b0] sm:$0xff]
    %v2134 = vld [vmem:[#allocation10 + $0x2b8] sm:$0xff]
    %v2135 = vld [vmem:[#allocation10 + $0x2c0] sm:$0xff]
    %v2136 = vld [vmem:[#allocation10 + $0x2c8] sm:$0xff]
    %v2137 = vld [vmem:[#allocation10 + $0x2d0] sm:$0xff]
    %v2138 = vld [vmem:[#allocation10 + $0x2d8] sm:$0xff]
    %v2139 = vld [vmem:[#allocation10 + $0x2e0] sm:$0xff]
    %v2140 = vld [vmem:[#allocation10 + $0x2e8] sm:$0xff]
    %v2141 = vld [vmem:[#allocation10 + $0x2f0] sm:$0xff]
    %v2142 = vld [vmem:[#allocation10 + $0x2f8] sm:$0xff]
    %v2143 = vld [vmem:[#allocation10 + $0x300] sm:$0xff]
    %v2144 = vld [vmem:[#allocation10 + $0x308] sm:$0xff]
    %v2145 = vld [vmem:[#allocation10 + $0x310] sm:$0xff]
    %v2146 = vld [vmem:[#allocation10 + $0x318] sm:$0xff]
    %v2147 = vld [vmem:[#allocation10 + $0x320] sm:$0xff]
    %v2148 = vld [vmem:[#allocation10 + $0x328] sm:$0xff]
    %v2149 = vld [vmem:[#allocation10 + $0x330] sm:$0xff]
    %v2150 = vld [vmem:[#allocation10 + $0x338] sm:$0xff]
    %v2151 = vld [vmem:[#allocation10 + $0x340] sm:$0xff]
    %v2152 = vld [vmem:[#allocation10 + $0x348] sm:$0xff]
    %v2153 = vld [vmem:[#allocation10 + $0x350] sm:$0xff]
    %v2154 = vld [vmem:[#allocation10 + $0x358] sm:$0xff]
    %v2155 = vld [vmem:[#allocation10 + $0x360] sm:$0xff]
    %v2156 = vld [vmem:[#allocation10 + $0x368] sm:$0xff]
    %v2157 = vld [vmem:[#allocation10 + $0x370] sm:$0xff]
    %v2158 = vld [vmem:[#allocation10 + $0x378] sm:$0xff]
    %v2159 = vld [vmem:[#allocation10 + $0x380] sm:$0xff]
    %v2160 = vld [vmem:[#allocation10 + $0x388] sm:$0xff]
    %v2161 = vld [vmem:[#allocation10 + $0x390] sm:$0xff]
    %v2162 = vld [vmem:[#allocation10 + $0x398] sm:$0xff]
    %v2163 = vld [vmem:[#allocation10 + $0x3a0] sm:$0xff]
    %v2164 = vld [vmem:[#allocation10 + $0x3a8] sm:$0xff]
    %v2165 = vld [vmem:[#allocation10 + $0x3b0] sm:$0xff]
    %v2166 = vld [vmem:[#allocation10 + $0x3b8] sm:$0xff]
    %v2167 = vld [vmem:[#allocation10 + $0x3c0] sm:$0xff]
    %v2168 = vld [vmem:[#allocation10 + $0x3c8] sm:$0xff]
    %v2169 = vld [vmem:[#allocation10 + $0x3d0] sm:$0xff]
    %v2170 = vld [vmem:[#allocation10 + $0x3d8] sm:$0xff]
    %v2171 = vld [vmem:[#allocation10 + $0x3e0] sm:$0xff]
    %v2172 = vld [vmem:[#allocation10 + $0x3e8] sm:$0xff]
    %v2173 = vld [vmem:[#allocation10 + $0x3f0] sm:$0xff]
    %v2174 = vld [vmem:[#allocation10 + $0x3f8] sm:$0xff]
    %v2175 = vld [vmem:[#allocation10 + $0x400] sm:$0xff]
    %v2176 = vld [vmem:[#allocation10 + $0x408] sm:$0xff]
    %v2177 = vld [vmem:[#allocation10 + $0x410] sm:$0xff]
    %v2178 = vld [vmem:[#allocation10 + $0x418] sm:$0xff]
    %v2179 = vld [vmem:[#allocation10 + $0x420] sm:$0xff]
    %v2180 = vld [vmem:[#allocation10 + $0x428] sm:$0xff]
    %v2181 = vld [vmem:[#allocation10 + $0x430] sm:$0xff]
    %v2182 = vld [vmem:[#allocation10 + $0x438] sm:$0xff]
    %v2183 = vld [vmem:[#allocation10 + $0x440] sm:$0xff]
    %v2184 = vld [vmem:[#allocation10 + $0x448] sm:$0xff]
    %v2185 = vld [vmem:[#allocation10 + $0x450] sm:$0xff]
    %v2186 = vld [vmem:[#allocation10 + $0x458] sm:$0xff]
    %v2187 = vld [vmem:[#allocation10 + $0x460] sm:$0xff]
    %v2188 = vld [vmem:[#allocation10 + $0x468] sm:$0xff]
    %v2189 = vld [vmem:[#allocation10 + $0x470] sm:$0xff]
    %v2190 = vld [vmem:[#allocation10 + $0x478] sm:$0xff]
    %v2191 = vld [vmem:[#allocation10 + $0x480] sm:$0xff]
    %v2192 = vld [vmem:[#allocation10 + $0x488] sm:$0xff]
    %v2193 = vld [vmem:[#allocation10 + $0x490] sm:$0xff]
    %v2194 = vld [vmem:[#allocation10 + $0x498] sm:$0xff]
    %v2195 = vld [vmem:[#allocation10 + $0x4a0] sm:$0xff]
    %v2196 = vld [vmem:[#allocation10 + $0x4a8] sm:$0xff]
    %v2197 = vld [vmem:[#allocation10 + $0x4b0] sm:$0xff]
    %v2198 = vld [vmem:[#allocation10 + $0x4b8] sm:$0xff]
    %v2199 = vld [vmem:[#allocation10 + $0x4c0] sm:$0xff]
    %v2200 = vld [vmem:[#allocation10 + $0x4c8] sm:$0xff]
    %v2201 = vld [vmem:[#allocation10 + $0x4d0] sm:$0xff]
    %v2202 = vld [vmem:[#allocation10 + $0x4d8] sm:$0xff]
    %v2203 = vld [vmem:[#allocation10 + $0x4e0] sm:$0xff]
    %v2204 = vld [vmem:[#allocation10 + $0x4e8] sm:$0xff]
    %v2205 = vld [vmem:[#allocation10 + $0x4f0] sm:$0xff]
    %v2206 = vld [vmem:[#allocation10 + $0x4f8] sm:$0xff]
    %v2207 = vld [vmem:[#allocation10 + $0x500] sm:$0xff]
    %v2208 = vld [vmem:[#allocation10 + $0x508] sm:$0xff]
    %v2209 = vld [vmem:[#allocation10 + $0x510] sm:$0xff]
    %v2210 = vld [vmem:[#allocation10 + $0x518] sm:$0xff]
    %v2211 = vld [vmem:[#allocation10 + $0x520] sm:$0xff]
    %v2212 = vld [vmem:[#allocation10 + $0x528] sm:$0xff]
    %v2213 = vld [vmem:[#allocation10 + $0x530] sm:$0xff]
    %v2214 = vld [vmem:[#allocation10 + $0x538] sm:$0xff]
    %v2215 = vld [vmem:[#allocation10 + $0x540] sm:$0xff]
    %v2216 = vld [vmem:[#allocation10 + $0x548] sm:$0xff]
    %v2217 = vld [vmem:[#allocation10 + $0x550] sm:$0xff]
    %v2218 = vld [vmem:[#allocation10 + $0x558] sm:$0xff]
    %v2219 = vld [vmem:[#allocation10 + $0x560] sm:$0xff]
    %v2220 = vld [vmem:[#allocation10 + $0x568] sm:$0xff]
    %v2221 = vld [vmem:[#allocation10 + $0x570] sm:$0xff]
    %v2222 = vld [vmem:[#allocation10 + $0x578] sm:$0xff]
    %v2223 = vld [vmem:[#allocation10 + $0x580] sm:$0xff]
    %v2224 = vld [vmem:[#allocation10 + $0x588] sm:$0xff]
    %v2225 = vld [vmem:[#allocation10 + $0x590] sm:$0xff]
    %v2226 = vld [vmem:[#allocation10 + $0x598] sm:$0xff]
    %v2227 = vld [vmem:[#allocation10 + $0x5a0] sm:$0xff]
    %v2228 = vld [vmem:[#allocation10 + $0x5a8] sm:$0xff]
    %v2229 = vld [vmem:[#allocation10 + $0x5b0] sm:$0xff]
    %v2230 = vld [vmem:[#allocation10 + $0x5b8] sm:$0xff]
    %v2231 = vld [vmem:[#allocation10 + $0x5c0] sm:$0xff]
    %v2232 = vld [vmem:[#allocation10 + $0x5c8] sm:$0xff]
    %v2233 = vld [vmem:[#allocation10 + $0x5d0] sm:$0xff]
    %v2234 = vld [vmem:[#allocation10 + $0x5d8] sm:$0xff]
    %v2235 = vld [vmem:[#allocation10 + $0x5e0] sm:$0xff]
    %v2236 = vld [vmem:[#allocation10 + $0x5e8] sm:$0xff]
    %v2237 = vld [vmem:[#allocation10 + $0x5f0] sm:$0xff]
    %v2238 = vld [vmem:[#allocation10 + $0x5f8] sm:$0xff]
    %v2239 = vld [vmem:[#allocation10 + $0x600] sm:$0xff]
    %v2240 = vld [vmem:[#allocation10 + $0x608] sm:$0xff]
    %v2241 = vld [vmem:[#allocation10 + $0x610] sm:$0xff]
    %v2242 = vld [vmem:[#allocation10 + $0x618] sm:$0xff]
    %v2243 = vld [vmem:[#allocation10 + $0x620] sm:$0xff]
    %v2244 = vld [vmem:[#allocation10 + $0x628] sm:$0xff]
    %v2245 = vld [vmem:[#allocation10 + $0x630] sm:$0xff]
    %v2246 = vld [vmem:[#allocation10 + $0x638] sm:$0xff]
    %v2247 = vld [vmem:[#allocation10 + $0x640] sm:$0xff]
    %v2248 = vld [vmem:[#allocation10 + $0x648] sm:$0xff]
    %v2249 = vld [vmem:[#allocation10 + $0x650] sm:$0xff]
    %v2250 = vld [vmem:[#allocation10 + $0x658] sm:$0xff]
    %v2251 = vld [vmem:[#allocation10 + $0x660] sm:$0xff]
    %v2252 = vld [vmem:[#allocation10 + $0x668] sm:$0xff]
    %v2253 = vld [vmem:[#allocation10 + $0x670] sm:$0xff]
    %v2254 = vld [vmem:[#allocation10 + $0x678] sm:$0xff]
    %v2255 = vld [vmem:[#allocation10 + $0x680] sm:$0xff]
    %v2256 = vld [vmem:[#allocation10 + $0x688] sm:$0xff]
    %v2257 = vld [vmem:[#allocation10 + $0x690] sm:$0xff]
    %v2258 = vld [vmem:[#allocation10 + $0x698] sm:$0xff]
    %v2259 = vld [vmem:[#allocation10 + $0x6a0] sm:$0xff]
    %v2260 = vld [vmem:[#allocation10 + $0x6a8] sm:$0xff]
    %v2261 = vld [vmem:[#allocation10 + $0x6b0] sm:$0xff]
    %v2262 = vld [vmem:[#allocation10 + $0x6b8] sm:$0xff]
    %v2263 = vld [vmem:[#allocation10 + $0x6c0] sm:$0xff]
    %v2264 = vld [vmem:[#allocation10 + $0x6c8] sm:$0xff]
    %v2265 = vld [vmem:[#allocation10 + $0x6d0] sm:$0xff]
    %v2266 = vld [vmem:[#allocation10 + $0x6d8] sm:$0xff]
    %v2267 = vld [vmem:[#allocation10 + $0x6e0] sm:$0xff]
    %v2268 = vld [vmem:[#allocation10 + $0x6e8] sm:$0xff]
    %v2269 = vld [vmem:[#allocation10 + $0x6f0] sm:$0xff]
    %v2270 = vld [vmem:[#allocation10 + $0x6f8] sm:$0xff]
    %v2271 = vld [vmem:[#allocation10 + $0x700] sm:$0xff]
    %v2272 = vld [vmem:[#allocation10 + $0x708] sm:$0xff]
    %v2273 = vld [vmem:[#allocation10 + $0x710] sm:$0xff]
    %v2274 = vld [vmem:[#allocation10 + $0x718] sm:$0xff]
    %v2275 = vld [vmem:[#allocation10 + $0x720] sm:$0xff]
    %v2276 = vld [vmem:[#allocation10 + $0x728] sm:$0xff]
    %v2277 = vld [vmem:[#allocation10 + $0x730] sm:$0xff]
    %v2278 = vld [vmem:[#allocation10 + $0x738] sm:$0xff]
    %v2279 = vld [vmem:[#allocation10 + $0x740] sm:$0xff]
    %v2280 = vld [vmem:[#allocation10 + $0x748] sm:$0xff]
    %v2281 = vld [vmem:[#allocation10 + $0x750] sm:$0xff]
    %v2282 = vld [vmem:[#allocation10 + $0x758] sm:$0xff]
    %v2283 = vld [vmem:[#allocation10 + $0x760] sm:$0xff]
    %v2284 = vld [vmem:[#allocation10 + $0x768] sm:$0xff]
    %v2285 = vld [vmem:[#allocation10 + $0x770] sm:$0xff]
    %v2286 = vld [vmem:[#allocation10 + $0x778] sm:$0xff]
    %v2287 = vld [vmem:[#allocation10 + $0x780] sm:$0xff]
    %v2288 = vld [vmem:[#allocation10 + $0x788] sm:$0xff]
    %v2289 = vld [vmem:[#allocation10 + $0x790] sm:$0xff]
    %v2290 = vld [vmem:[#allocation10 + $0x798] sm:$0xff]
    %v2291 = vld [vmem:[#allocation10 + $0x7a0] sm:$0xff]
    %v2292 = vld [vmem:[#allocation10 + $0x7a8] sm:$0xff]
    %v2293 = vld [vmem:[#allocation10 + $0x7b0] sm:$0xff]
    %v2294 = vld [vmem:[#allocation10 + $0x7b8] sm:$0xff]
    %v2295 = vld [vmem:[#allocation10 + $0x7c0] sm:$0xff]
    %v2296 = vld [vmem:[#allocation10 + $0x7c8] sm:$0xff]
    %v2297 = vld [vmem:[#allocation10 + $0x7d0] sm:$0xff]
    %v2298 = vld [vmem:[#allocation10 + $0x7d8] sm:$0xff]
    %v2299 = vld [vmem:[#allocation10 + $0x7e0] sm:$0xff]
    %v2300 = vld [vmem:[#allocation10 + $0x7e8] sm:$0xff]
    %v2301 = vld [vmem:[#allocation10 + $0x7f0] sm:$0xff]
    %v2302 = vld [vmem:[#allocation10 + $0x7f8] sm:$0xff]
    %v2303 = vld [vmem:[#allocation10 + $0x800] sm:$0xff]
    %v2304 = vld [vmem:[#allocation10 + $0x808] sm:$0xff]
    %v2305 = vld [vmem:[#allocation10 + $0x810] sm:$0xff]
    %v2306 = vld [vmem:[#allocation10 + $0x818] sm:$0xff]
    %v2307 = vld [vmem:[#allocation10 + $0x820] sm:$0xff]
    %v2308 = vld [vmem:[#allocation10 + $0x828] sm:$0xff]
    %v2309 = vld [vmem:[#allocation10 + $0x830] sm:$0xff]
    %v2310 = vld [vmem:[#allocation10 + $0x838] sm:$0xff]
    %v2311 = vld [vmem:[#allocation10 + $0x840] sm:$0xff]
    %v2312 = vld [vmem:[#allocation10 + $0x848] sm:$0xff]
    %v2313 = vld [vmem:[#allocation10 + $0x850] sm:$0xff]
    %v2314 = vld [vmem:[#allocation10 + $0x858] sm:$0xff]
    %v2315 = vld [vmem:[#allocation10 + $0x860] sm:$0xff]
    %v2316 = vld [vmem:[#allocation10 + $0x868] sm:$0xff]
    %v2317 = vld [vmem:[#allocation10 + $0x870] sm:$0xff]
    %v2318 = vld [vmem:[#allocation10 + $0x878] sm:$0xff]
    %v2319 = vld [vmem:[#allocation10 + $0x880] sm:$0xff]
    %v2320 = vld [vmem:[#allocation10 + $0x888] sm:$0xff]
    %v2321 = vld [vmem:[#allocation10 + $0x890] sm:$0xff]
    %v2322 = vld [vmem:[#allocation10 + $0x898] sm:$0xff]
    %v2323 = vld [vmem:[#allocation10 + $0x8a0] sm:$0xff]
    %v2324 = vld [vmem:[#allocation10 + $0x8a8] sm:$0xff]
    %v2325 = vld [vmem:[#allocation10 + $0x8b0] sm:$0xff]
    %v2326 = vld [vmem:[#allocation10 + $0x8b8] sm:$0xff]
    %v2327 = vld [vmem:[#allocation10 + $0x8c0] sm:$0xff]
    %v2328 = vld [vmem:[#allocation10 + $0x8c8] sm:$0xff]
    %v2329 = vld [vmem:[#allocation10 + $0x8d0] sm:$0xff]
    %v2330 = vld [vmem:[#allocation10 + $0x8d8] sm:$0xff]
    %v2331 = vld [vmem:[#allocation10 + $0x8e0] sm:$0xff]
    %v2332 = vld [vmem:[#allocation10 + $0x8e8] sm:$0xff]
    %v2333 = vld [vmem:[#allocation10 + $0x8f0] sm:$0xff]
    %v2334 = vld [vmem:[#allocation10 + $0x8f8] sm:$0xff]
    %v2335 = vld [vmem:[#allocation11] sm:$0x3f]
    %v2337 = vlaneseq
    %v2338 = vshrl.u32 %v2337, 7
    %v2339 = vsub.s32 0, %v2338
    %v2340 = vrot.slane %v2335, %v2339
    %v2341 = vlaneseq
    %v2342 = vshrl.u32 %v2341, 7
    %v2343 = vsub.s32 1, %v2342
    %v2344 = vrot.slane %v2335, %v2343
    %v2345 = vlaneseq
    %v2346 = vshrl.u32 %v2345, 7
    %v2347 = vsub.s32 2, %v2346
    %v2348 = vrot.slane %v2335, %v2347
    %v2349 = vlaneseq
    %v2350 = vshrl.u32 %v2349, 7
    %v2351 = vsub.s32 3, %v2350
    %v2352 = vrot.slane %v2335, %v2351
    %v2353 = vlaneseq
    %v2354 = vshrl.u32 %v2353, 7
    %v2355 = vsub.s32 4, %v2354
    %v2356 = vrot.slane %v2335, %v2355
    %v2357 = vlaneseq
    %v2358 = vshrl.u32 %v2357, 7
    %v2359 = vsub.s32 5, %v2358
    %v2360 = vrot.slane %v2335, %v2359
    %v2655 = vunpack.c.l.b16 %v2047
    %v2656 = vunpack.c.h.b16 %v2047
    %v2657 = vunpack.c.l.b16 %v2048
    %v2658 = vunpack.c.h.b16 %v2048
    %v2659 = vunpack.c.l.b16 %v2049
    %v2660 = vunpack.c.h.b16 %v2049
    %v2661 = vunpack.c.l.b16 %v2050
    %v2662 = vunpack.c.h.b16 %v2050
    %v2663 = vunpack.c.l.b16 %v2051
    %v2664 = vunpack.c.h.b16 %v2051
    %v2665 = vunpack.c.l.b16 %v2052
    %v2666 = vunpack.c.h.b16 %v2052
    %v2667 = vunpack.c.l.b16 %v2053
    %v2668 = vunpack.c.h.b16 %v2053
    %v2669 = vunpack.c.l.b16 %v2054
    %v2670 = vunpack.c.h.b16 %v2054
    %v2671 = vunpack.c.l.b16 %v2055
    %v2672 = vunpack.c.h.b16 %v2055
    %v2673 = vunpack.c.l.b16 %v2056
    %v2674 = vunpack.c.h.b16 %v2056
    %v2675 = vunpack.c.l.b16 %v2057
    %v2676 = vunpack.c.h.b16 %v2057
    %v2677 = vunpack.c.l.b16 %v2058
    %v2678 = vunpack.c.h.b16 %v2058
    %v2679 = vunpack.c.l.b16 %v2059
    %v2680 = vunpack.c.h.b16 %v2059
    %v2681 = vunpack.c.l.b16 %v2060
    %v2682 = vunpack.c.h.b16 %v2060
    %v2683 = vunpack.c.l.b16 %v2061
    %v2684 = vunpack.c.h.b16 %v2061
    %v2685 = vunpack.c.l.b16 %v2062
    %v2686 = vunpack.c.h.b16 %v2062
    %v2687 = vunpack.c.l.b16 %v2063
    %v2688 = vunpack.c.h.b16 %v2063
    %v2689 = vunpack.c.l.b16 %v2064
    %v2690 = vunpack.c.h.b16 %v2064
    %v2691 = vunpack.c.l.b16 %v2065
    %v2692 = vunpack.c.h.b16 %v2065
    %v2693 = vunpack.c.l.b16 %v2066
    %v2694 = vunpack.c.h.b16 %v2066
    %v2695 = vunpack.c.l.b16 %v2067
    %v2696 = vunpack.c.h.b16 %v2067
    %v2697 = vunpack.c.l.b16 %v2068
    %v2698 = vunpack.c.h.b16 %v2068
    %v2699 = vunpack.c.l.b16 %v2069
    %v2700 = vunpack.c.h.b16 %v2069
    %v2701 = vunpack.c.l.b16 %v2070
    %v2702 = vunpack.c.h.b16 %v2070
    %v2703 = vunpack.c.l.b16 %v2071
    %v2704 = vunpack.c.h.b16 %v2071
    %v2705 = vunpack.c.l.b16 %v2072
    %v2706 = vunpack.c.h.b16 %v2072
    %v2707 = vunpack.c.l.b16 %v2073
    %v2708 = vunpack.c.h.b16 %v2073
    %v2709 = vunpack.c.l.b16 %v2074
    %v2710 = vunpack.c.h.b16 %v2074
    %v2711 = vunpack.c.l.b16 %v2075
    %v2712 = vunpack.c.h.b16 %v2075
    %v2713 = vunpack.c.l.b16 %v2076
    %v2714 = vunpack.c.h.b16 %v2076
    %v2715 = vunpack.c.l.b16 %v2077
    %v2716 = vunpack.c.h.b16 %v2077
    %v2717 = vunpack.c.l.b16 %v2078
    %v2718 = vunpack.c.h.b16 %v2078
    %v2719 = vunpack.c.l.b16 %v2079
    %v2720 = vunpack.c.h.b16 %v2079
    %v2721 = vunpack.c.l.b16 %v2080
    %v2722 = vunpack.c.h.b16 %v2080
    %v2723 = vunpack.c.l.b16 %v2081
    %v2724 = vunpack.c.h.b16 %v2081
    %v2725 = vunpack.c.l.b16 %v2082
    %v2726 = vunpack.c.h.b16 %v2082
    %v2727 = vunpack.c.l.b16 %v2083
    %v2728 = vunpack.c.h.b16 %v2083
    %v2729 = vunpack.c.l.b16 %v2084
    %v2730 = vunpack.c.h.b16 %v2084
    %v2731 = vunpack.c.l.b16 %v2085
    %v2732 = vunpack.c.h.b16 %v2085
    %v2733 = vunpack.c.l.b16 %v2086
    %v2734 = vunpack.c.h.b16 %v2086
    %v2735 = vunpack.c.l.b16 %v2087
    %v2736 = vunpack.c.h.b16 %v2087
    %v2737 = vunpack.c.l.b16 %v2088
    %v2738 = vunpack.c.h.b16 %v2088
    %v2739 = vunpack.c.l.b16 %v2089
    %v2740 = vunpack.c.h.b16 %v2089
    %v2741 = vunpack.c.l.b16 %v2090
    %v2742 = vunpack.c.h.b16 %v2090
    %v2743 = vunpack.c.l.b16 %v2091
    %v2744 = vunpack.c.h.b16 %v2091
    %v2745 = vunpack.c.l.b16 %v2092
    %v2746 = vunpack.c.h.b16 %v2092
    %v2747 = vunpack.c.l.b16 %v2093
    %v2748 = vunpack.c.h.b16 %v2093
    %v2749 = vunpack.c.l.b16 %v2094
    %v2750 = vunpack.c.h.b16 %v2094
    %v2751 = vunpack.c.l.b16 %v2095
    %v2752 = vunpack.c.h.b16 %v2095
    %v2753 = vunpack.c.l.b16 %v2096
    %v2754 = vunpack.c.h.b16 %v2096
    %v2755 = vunpack.c.l.b16 %v2097
    %v2756 = vunpack.c.h.b16 %v2097
    %v2757 = vunpack.c.l.b16 %v2098
    %v2758 = vunpack.c.h.b16 %v2098
    %v2759 = vunpack.c.l.b16 %v2099
    %v2760 = vunpack.c.h.b16 %v2099
    %v2761 = vunpack.c.l.b16 %v2100
    %v2762 = vunpack.c.h.b16 %v2100
    %v2763 = vunpack.c.l.b16 %v2101
    %v2764 = vunpack.c.h.b16 %v2101
    %v2765 = vunpack.c.l.b16 %v2102
    %v2766 = vunpack.c.h.b16 %v2102
    %v2767 = vunpack.c.l.b16 %v2103
    %v2768 = vunpack.c.h.b16 %v2103
    %v2769 = vunpack.c.l.b16 %v2104
    %v2770 = vunpack.c.h.b16 %v2104
    %v2771 = vunpack.c.l.b16 %v2105
    %v2772 = vunpack.c.h.b16 %v2105
    %v2773 = vunpack.c.l.b16 %v2106
    %v2774 = vunpack.c.h.b16 %v2106
    %v2775 = vunpack.c.l.b16 %v2107
    %v2776 = vunpack.c.h.b16 %v2107
    %v2777 = vunpack.c.l.b16 %v2108
    %v2778 = vunpack.c.h.b16 %v2108
    %v2779 = vunpack.c.l.b16 %v2109
    %v2780 = vunpack.c.h.b16 %v2109
    %v2781 = vunpack.c.l.b16 %v2110
    %v2782 = vunpack.c.h.b16 %v2110
    %v2783 = vunpack.c.l.b16 %v2111
    %v2784 = vunpack.c.h.b16 %v2111
    %v2785 = vunpack.c.l.b16 %v2112
    %v2786 = vunpack.c.h.b16 %v2112
    %v2787 = vunpack.c.l.b16 %v2113
    %v2788 = vunpack.c.h.b16 %v2113
    %v2789 = vunpack.c.l.b16 %v2114
    %v2790 = vunpack.c.h.b16 %v2114
    %v2791 = vunpack.c.l.b16 %v2115
    %v2792 = vunpack.c.h.b16 %v2115
    %v2793 = vunpack.c.l.b16 %v2116
    %v2794 = vunpack.c.h.b16 %v2116
    %v2795 = vunpack.c.l.b16 %v2117
    %v2796 = vunpack.c.h.b16 %v2117
    %v2797 = vunpack.c.l.b16 %v2118
    %v2798 = vunpack.c.h.b16 %v2118
    %v2799 = vunpack.c.l.b16 %v2119
    %v2800 = vunpack.c.h.b16 %v2119
    %v2801 = vunpack.c.l.b16 %v2120
    %v2802 = vunpack.c.h.b16 %v2120
    %v2803 = vunpack.c.l.b16 %v2121
    %v2804 = vunpack.c.h.b16 %v2121
    %v2805 = vunpack.c.l.b16 %v2122
    %v2806 = vunpack.c.h.b16 %v2122
    %v2807 = vunpack.c.l.b16 %v2123
    %v2808 = vunpack.c.h.b16 %v2123
    %v2809 = vunpack.c.l.b16 %v2124
    %v2810 = vunpack.c.h.b16 %v2124
    %v2811 = vunpack.c.l.b16 %v2125
    %v2812 = vunpack.c.h.b16 %v2125
    %v2813 = vunpack.c.l.b16 %v2126
    %v2814 = vunpack.c.h.b16 %v2126
    %v2815 = vunpack.c.l.b16 %v2127
    %v2816 = vunpack.c.h.b16 %v2127
    %v2817 = vunpack.c.l.b16 %v2128
    %v2818 = vunpack.c.h.b16 %v2128
    %v2819 = vunpack.c.l.b16 %v2129
    %v2820 = vunpack.c.h.b16 %v2129
    %v2821 = vunpack.c.l.b16 %v2130
    %v2822 = vunpack.c.h.b16 %v2130
    %v2823 = vunpack.c.l.b16 %v2131
    %v2824 = vunpack.c.h.b16 %v2131
    %v2825 = vunpack.c.l.b16 %v2132
    %v2826 = vunpack.c.h.b16 %v2132
    %v2827 = vunpack.c.l.b16 %v2133
    %v2828 = vunpack.c.h.b16 %v2133
    %v2829 = vunpack.c.l.b16 %v2134
    %v2830 = vunpack.c.h.b16 %v2134
    %v2831 = vunpack.c.l.b16 %v2135
    %v2832 = vunpack.c.h.b16 %v2135
    %v2833 = vunpack.c.l.b16 %v2136
    %v2834 = vunpack.c.h.b16 %v2136
    %v2835 = vunpack.c.l.b16 %v2137
    %v2836 = vunpack.c.h.b16 %v2137
    %v2837 = vunpack.c.l.b16 %v2138
    %v2838 = vunpack.c.h.b16 %v2138
    %v2839 = vunpack.c.l.b16 %v2139
    %v2840 = vunpack.c.h.b16 %v2139
    %v2841 = vunpack.c.l.b16 %v2140
    %v2842 = vunpack.c.h.b16 %v2140
    %v2843 = vunpack.c.l.b16 %v2141
    %v2844 = vunpack.c.h.b16 %v2141
    %v2845 = vunpack.c.l.b16 %v2142
    %v2846 = vunpack.c.h.b16 %v2142
    %v2847 = vunpack.c.l.b16 %v2143
    %v2848 = vunpack.c.h.b16 %v2143
    %v2849 = vunpack.c.l.b16 %v2144
    %v2850 = vunpack.c.h.b16 %v2144
    %v2851 = vunpack.c.l.b16 %v2145
    %v2852 = vunpack.c.h.b16 %v2145
    %v2853 = vunpack.c.l.b16 %v2146
    %v2854 = vunpack.c.h.b16 %v2146
    %v2855 = vunpack.c.l.b16 %v2147
    %v2856 = vunpack.c.h.b16 %v2147
    %v2857 = vunpack.c.l.b16 %v2148
    %v2858 = vunpack.c.h.b16 %v2148
    %v2859 = vunpack.c.l.b16 %v2149
    %v2860 = vunpack.c.h.b16 %v2149
    %v2861 = vunpack.c.l.b16 %v2150
    %v2862 = vunpack.c.h.b16 %v2150
    %v2863 = vunpack.c.l.b16 %v2151
    %v2864 = vunpack.c.h.b16 %v2151
    %v2865 = vunpack.c.l.b16 %v2152
    %v2866 = vunpack.c.h.b16 %v2152
    %v2867 = vunpack.c.l.b16 %v2153
    %v2868 = vunpack.c.h.b16 %v2153
    %v2869 = vunpack.c.l.b16 %v2154
    %v2870 = vunpack.c.h.b16 %v2154
    %v2871 = vunpack.c.l.b16 %v2155
    %v2872 = vunpack.c.h.b16 %v2155
    %v2873 = vunpack.c.l.b16 %v2156
    %v2874 = vunpack.c.h.b16 %v2156
    %v2875 = vunpack.c.l.b16 %v2157
    %v2876 = vunpack.c.h.b16 %v2157
    %v2877 = vunpack.c.l.b16 %v2158
    %v2878 = vunpack.c.h.b16 %v2158
    %v2879 = vunpack.c.l.b16 %v2159
    %v2880 = vunpack.c.h.b16 %v2159
    %v2881 = vunpack.c.l.b16 %v2160
    %v2882 = vunpack.c.h.b16 %v2160
    %v2883 = vunpack.c.l.b16 %v2161
    %v2884 = vunpack.c.h.b16 %v2161
    %v2885 = vunpack.c.l.b16 %v2162
    %v2886 = vunpack.c.h.b16 %v2162
    %v2887 = vunpack.c.l.b16 %v2163
    %v2888 = vunpack.c.h.b16 %v2163
    %v2889 = vunpack.c.l.b16 %v2164
    %v2890 = vunpack.c.h.b16 %v2164
    %v2891 = vunpack.c.l.b16 %v2165
    %v2892 = vunpack.c.h.b16 %v2165
    %v2893 = vunpack.c.l.b16 %v2166
    %v2894 = vunpack.c.h.b16 %v2166
    %v2895 = vunpack.c.l.b16 %v2167
    %v2896 = vunpack.c.h.b16 %v2167
    %v2897 = vunpack.c.l.b16 %v2168
    %v2898 = vunpack.c.h.b16 %v2168
    %v2899 = vunpack.c.l.b16 %v2169
    %v2900 = vunpack.c.h.b16 %v2169
    %v2901 = vunpack.c.l.b16 %v2170
    %v2902 = vunpack.c.h.b16 %v2170
    %v2903 = vunpack.c.l.b16 %v2171
    %v2904 = vunpack.c.h.b16 %v2171
    %v2905 = vunpack.c.l.b16 %v2172
    %v2906 = vunpack.c.h.b16 %v2172
    %v2907 = vunpack.c.l.b16 %v2173
    %v2908 = vunpack.c.h.b16 %v2173
    %v2909 = vunpack.c.l.b16 %v2174
    %v2910 = vunpack.c.h.b16 %v2174
    %v2911 = vunpack.c.l.b16 %v2175
    %v2912 = vunpack.c.h.b16 %v2175
    %v2913 = vunpack.c.l.b16 %v2176
    %v2914 = vunpack.c.h.b16 %v2176
    %v2915 = vunpack.c.l.b16 %v2177
    %v2916 = vunpack.c.h.b16 %v2177
    %v2917 = vunpack.c.l.b16 %v2178
    %v2918 = vunpack.c.h.b16 %v2178
    %v2919 = vunpack.c.l.b16 %v2179
    %v2920 = vunpack.c.h.b16 %v2179
    %v2921 = vunpack.c.l.b16 %v2180
    %v2922 = vunpack.c.h.b16 %v2180
    %v2923 = vunpack.c.l.b16 %v2181
    %v2924 = vunpack.c.h.b16 %v2181
    %v2925 = vunpack.c.l.b16 %v2182
    %v2926 = vunpack.c.h.b16 %v2182
    %v2927 = vunpack.c.l.b16 %v2183
    %v2928 = vunpack.c.h.b16 %v2183
    %v2929 = vunpack.c.l.b16 %v2184
    %v2930 = vunpack.c.h.b16 %v2184
    %v2931 = vunpack.c.l.b16 %v2185
    %v2932 = vunpack.c.h.b16 %v2185
    %v2933 = vunpack.c.l.b16 %v2186
    %v2934 = vunpack.c.h.b16 %v2186
    %v2935 = vunpack.c.l.b16 %v2187
    %v2936 = vunpack.c.h.b16 %v2187
    %v2937 = vunpack.c.l.b16 %v2188
    %v2938 = vunpack.c.h.b16 %v2188
    %v2939 = vunpack.c.l.b16 %v2189
    %v2940 = vunpack.c.h.b16 %v2189
    %v2941 = vunpack.c.l.b16 %v2190
    %v2942 = vunpack.c.h.b16 %v2190
    %v2943 = vunpack.c.l.b16 %v2191
    %v2944 = vunpack.c.h.b16 %v2191
    %v2945 = vunpack.c.l.b16 %v2192
    %v2946 = vunpack.c.h.b16 %v2192
    %v2947 = vunpack.c.l.b16 %v2193
    %v2948 = vunpack.c.h.b16 %v2193
    %v2949 = vunpack.c.l.b16 %v2194
    %v2950 = vunpack.c.h.b16 %v2194
    %v2951 = vunpack.c.l.b16 %v2195
    %v2952 = vunpack.c.h.b16 %v2195
    %v2953 = vunpack.c.l.b16 %v2196
    %v2954 = vunpack.c.h.b16 %v2196
    %v2955 = vunpack.c.l.b16 %v2197
    %v2956 = vunpack.c.h.b16 %v2197
    %v2957 = vunpack.c.l.b16 %v2198
    %v2958 = vunpack.c.h.b16 %v2198
    %v2959 = vunpack.c.l.b16 %v2199
    %v2960 = vunpack.c.h.b16 %v2199
    %v2961 = vunpack.c.l.b16 %v2200
    %v2962 = vunpack.c.h.b16 %v2200
    %v2963 = vunpack.c.l.b16 %v2201
    %v2964 = vunpack.c.h.b16 %v2201
    %v2965 = vunpack.c.l.b16 %v2202
    %v2966 = vunpack.c.h.b16 %v2202
    %v2967 = vunpack.c.l.b16 %v2203
    %v2968 = vunpack.c.h.b16 %v2203
    %v2969 = vunpack.c.l.b16 %v2204
    %v2970 = vunpack.c.h.b16 %v2204
    %v2971 = vunpack.c.l.b16 %v2205
    %v2972 = vunpack.c.h.b16 %v2205
    %v2973 = vunpack.c.l.b16 %v2206
    %v2974 = vunpack.c.h.b16 %v2206
    %v2975 = vunpack.c.l.b16 %v2207
    %v2976 = vunpack.c.h.b16 %v2207
    %v2977 = vunpack.c.l.b16 %v2208
    %v2978 = vunpack.c.h.b16 %v2208
    %v2979 = vunpack.c.l.b16 %v2209
    %v2980 = vunpack.c.h.b16 %v2209
    %v2981 = vunpack.c.l.b16 %v2210
    %v2982 = vunpack.c.h.b16 %v2210
    %v2983 = vunpack.c.l.b16 %v2211
    %v2984 = vunpack.c.h.b16 %v2211
    %v2985 = vunpack.c.l.b16 %v2212
    %v2986 = vunpack.c.h.b16 %v2212
    %v2987 = vunpack.c.l.b16 %v2213
    %v2988 = vunpack.c.h.b16 %v2213
    %v2989 = vunpack.c.l.b16 %v2214
    %v2990 = vunpack.c.h.b16 %v2214
    %v2991 = vunpack.c.l.b16 %v2215
    %v2992 = vunpack.c.h.b16 %v2215
    %v2993 = vunpack.c.l.b16 %v2216
    %v2994 = vunpack.c.h.b16 %v2216
    %v2995 = vunpack.c.l.b16 %v2217
    %v2996 = vunpack.c.h.b16 %v2217
    %v2997 = vunpack.c.l.b16 %v2218
    %v2998 = vunpack.c.h.b16 %v2218
    %v2999 = vunpack.c.l.b16 %v2219
    %v3000 = vunpack.c.h.b16 %v2219
    %v3001 = vunpack.c.l.b16 %v2220
    %v3002 = vunpack.c.h.b16 %v2220
    %v3003 = vunpack.c.l.b16 %v2221
    %v3004 = vunpack.c.h.b16 %v2221
    %v3005 = vunpack.c.l.b16 %v2222
    %v3006 = vunpack.c.h.b16 %v2222
    %v3007 = vunpack.c.l.b16 %v2223
    %v3008 = vunpack.c.h.b16 %v2223
    %v3009 = vunpack.c.l.b16 %v2224
    %v3010 = vunpack.c.h.b16 %v2224
    %v3011 = vunpack.c.l.b16 %v2225
    %v3012 = vunpack.c.h.b16 %v2225
    %v3013 = vunpack.c.l.b16 %v2226
    %v3014 = vunpack.c.h.b16 %v2226
    %v3015 = vunpack.c.l.b16 %v2227
    %v3016 = vunpack.c.h.b16 %v2227
    %v3017 = vunpack.c.l.b16 %v2228
    %v3018 = vunpack.c.h.b16 %v2228
    %v3019 = vunpack.c.l.b16 %v2229
    %v3020 = vunpack.c.h.b16 %v2229
    %v3021 = vunpack.c.l.b16 %v2230
    %v3022 = vunpack.c.h.b16 %v2230
    %v3023 = vunpack.c.l.b16 %v2231
    %v3024 = vunpack.c.h.b16 %v2231
    %v3025 = vunpack.c.l.b16 %v2232
    %v3026 = vunpack.c.h.b16 %v2232
    %v3027 = vunpack.c.l.b16 %v2233
    %v3028 = vunpack.c.h.b16 %v2233
    %v3029 = vunpack.c.l.b16 %v2234
    %v3030 = vunpack.c.h.b16 %v2234
    %v3031 = vunpack.c.l.b16 %v2235
    %v3032 = vunpack.c.h.b16 %v2235
    %v3033 = vunpack.c.l.b16 %v2236
    %v3034 = vunpack.c.h.b16 %v2236
    %v3035 = vunpack.c.l.b16 %v2237
    %v3036 = vunpack.c.h.b16 %v2237
    %v3037 = vunpack.c.l.b16 %v2238
    %v3038 = vunpack.c.h.b16 %v2238
    %v3039 = vunpack.c.l.b16 %v2239
    %v3040 = vunpack.c.h.b16 %v2239
    %v3041 = vunpack.c.l.b16 %v2240
    %v3042 = vunpack.c.h.b16 %v2240
    %v3043 = vunpack.c.l.b16 %v2241
    %v3044 = vunpack.c.h.b16 %v2241
    %v3045 = vunpack.c.l.b16 %v2242
    %v3046 = vunpack.c.h.b16 %v2242
    %v3047 = vunpack.c.l.b16 %v2243
    %v3048 = vunpack.c.h.b16 %v2243
    %v3049 = vunpack.c.l.b16 %v2244
    %v3050 = vunpack.c.h.b16 %v2244
    %v3051 = vunpack.c.l.b16 %v2245
    %v3052 = vunpack.c.h.b16 %v2245
    %v3053 = vunpack.c.l.b16 %v2246
    %v3054 = vunpack.c.h.b16 %v2246
    %v3055 = vunpack.c.l.b16 %v2247
    %v3056 = vunpack.c.h.b16 %v2247
    %v3057 = vunpack.c.l.b16 %v2248
    %v3058 = vunpack.c.h.b16 %v2248
    %v3059 = vunpack.c.l.b16 %v2249
    %v3060 = vunpack.c.h.b16 %v2249
    %v3061 = vunpack.c.l.b16 %v2250
    %v3062 = vunpack.c.h.b16 %v2250
    %v3063 = vunpack.c.l.b16 %v2251
    %v3064 = vunpack.c.h.b16 %v2251
    %v3065 = vunpack.c.l.b16 %v2252
    %v3066 = vunpack.c.h.b16 %v2252
    %v3067 = vunpack.c.l.b16 %v2253
    %v3068 = vunpack.c.h.b16 %v2253
    %v3069 = vunpack.c.l.b16 %v2254
    %v3070 = vunpack.c.h.b16 %v2254
    %v3071 = vunpack.c.l.b16 %v2255
    %v3072 = vunpack.c.h.b16 %v2255
    %v3073 = vunpack.c.l.b16 %v2256
    %v3074 = vunpack.c.h.b16 %v2256
    %v3075 = vunpack.c.l.b16 %v2257
    %v3076 = vunpack.c.h.b16 %v2257
    %v3077 = vunpack.c.l.b16 %v2258
    %v3078 = vunpack.c.h.b16 %v2258
    %v3079 = vunpack.c.l.b16 %v2259
    %v3080 = vunpack.c.h.b16 %v2259
    %v3081 = vunpack.c.l.b16 %v2260
    %v3082 = vunpack.c.h.b16 %v2260
    %v3083 = vunpack.c.l.b16 %v2261
    %v3084 = vunpack.c.h.b16 %v2261
    %v3085 = vunpack.c.l.b16 %v2262
    %v3086 = vunpack.c.h.b16 %v2262
    %v3087 = vunpack.c.l.b16 %v2263
    %v3088 = vunpack.c.h.b16 %v2263
    %v3089 = vunpack.c.l.b16 %v2264
    %v3090 = vunpack.c.h.b16 %v2264
    %v3091 = vunpack.c.l.b16 %v2265
    %v3092 = vunpack.c.h.b16 %v2265
    %v3093 = vunpack.c.l.b16 %v2266
    %v3094 = vunpack.c.h.b16 %v2266
    %v3095 = vunpack.c.l.b16 %v2267
    %v3096 = vunpack.c.h.b16 %v2267
    %v3097 = vunpack.c.l.b16 %v2268
    %v3098 = vunpack.c.h.b16 %v2268
    %v3099 = vunpack.c.l.b16 %v2269
    %v3100 = vunpack.c.h.b16 %v2269
    %v3101 = vunpack.c.l.b16 %v2270
    %v3102 = vunpack.c.h.b16 %v2270
    %v3103 = vunpack.c.l.b16 %v2271
    %v3104 = vunpack.c.h.b16 %v2271
    %v3105 = vunpack.c.l.b16 %v2272
    %v3106 = vunpack.c.h.b16 %v2272
    %v3107 = vunpack.c.l.b16 %v2273
    %v3108 = vunpack.c.h.b16 %v2273
    %v3109 = vunpack.c.l.b16 %v2274
    %v3110 = vunpack.c.h.b16 %v2274
    %v3111 = vunpack.c.l.b16 %v2275
    %v3112 = vunpack.c.h.b16 %v2275
    %v3113 = vunpack.c.l.b16 %v2276
    %v3114 = vunpack.c.h.b16 %v2276
    %v3115 = vunpack.c.l.b16 %v2277
    %v3116 = vunpack.c.h.b16 %v2277
    %v3117 = vunpack.c.l.b16 %v2278
    %v3118 = vunpack.c.h.b16 %v2278
    %v3119 = vunpack.c.l.b16 %v2279
    %v3120 = vunpack.c.h.b16 %v2279
    %v3121 = vunpack.c.l.b16 %v2280
    %v3122 = vunpack.c.h.b16 %v2280
    %v3123 = vunpack.c.l.b16 %v2281
    %v3124 = vunpack.c.h.b16 %v2281
    %v3125 = vunpack.c.l.b16 %v2282
    %v3126 = vunpack.c.h.b16 %v2282
    %v3127 = vunpack.c.l.b16 %v2283
    %v3128 = vunpack.c.h.b16 %v2283
    %v3129 = vunpack.c.l.b16 %v2284
    %v3130 = vunpack.c.h.b16 %v2284
    %v3131 = vunpack.c.l.b16 %v2285
    %v3132 = vunpack.c.h.b16 %v2285
    %v3133 = vunpack.c.l.b16 %v2286
    %v3134 = vunpack.c.h.b16 %v2286
    %v3135 = vunpack.c.l.b16 %v2287
    %v3136 = vunpack.c.h.b16 %v2287
    %v3137 = vunpack.c.l.b16 %v2288
    %v3138 = vunpack.c.h.b16 %v2288
    %v3139 = vunpack.c.l.b16 %v2289
    %v3140 = vunpack.c.h.b16 %v2289
    %v3141 = vunpack.c.l.b16 %v2290
    %v3142 = vunpack.c.h.b16 %v2290
    %v3143 = vunpack.c.l.b16 %v2291
    %v3144 = vunpack.c.h.b16 %v2291
    %v3145 = vunpack.c.l.b16 %v2292
    %v3146 = vunpack.c.h.b16 %v2292
    %v3147 = vunpack.c.l.b16 %v2293
    %v3148 = vunpack.c.h.b16 %v2293
    %v3149 = vunpack.c.l.b16 %v2294
    %v3150 = vunpack.c.h.b16 %v2294
    %v3151 = vunpack.c.l.b16 %v2295
    %v3152 = vunpack.c.h.b16 %v2295
    %v3153 = vunpack.c.l.b16 %v2296
    %v3154 = vunpack.c.h.b16 %v2296
    %v3155 = vunpack.c.l.b16 %v2297
    %v3156 = vunpack.c.h.b16 %v2297
    %v3157 = vunpack.c.l.b16 %v2298
    %v3158 = vunpack.c.h.b16 %v2298
    %v3159 = vunpack.c.l.b16 %v2299
    %v3160 = vunpack.c.h.b16 %v2299
    %v3161 = vunpack.c.l.b16 %v2300
    %v3162 = vunpack.c.h.b16 %v2300
    %v3163 = vunpack.c.l.b16 %v2301
    %v3164 = vunpack.c.h.b16 %v2301
    %v3165 = vunpack.c.l.b16 %v2302
    %v3166 = vunpack.c.h.b16 %v2302
    %v3167 = vunpack.c.l.b16 %v2303
    %v3168 = vunpack.c.h.b16 %v2303
    %v3169 = vunpack.c.l.b16 %v2304
    %v3170 = vunpack.c.h.b16 %v2304
    %v3171 = vunpack.c.l.b16 %v2305
    %v3172 = vunpack.c.h.b16 %v2305
    %v3173 = vunpack.c.l.b16 %v2306
    %v3174 = vunpack.c.h.b16 %v2306
    %v3175 = vunpack.c.l.b16 %v2307
    %v3176 = vunpack.c.h.b16 %v2307
    %v3177 = vunpack.c.l.b16 %v2308
    %v3178 = vunpack.c.h.b16 %v2308
    %v3179 = vunpack.c.l.b16 %v2309
    %v3180 = vunpack.c.h.b16 %v2309
    %v3181 = vunpack.c.l.b16 %v2310
    %v3182 = vunpack.c.h.b16 %v2310
    %v3183 = vunpack.c.l.b16 %v2311
    %v3184 = vunpack.c.h.b16 %v2311
    %v3185 = vunpack.c.l.b16 %v2312
    %v3186 = vunpack.c.h.b16 %v2312
    %v3187 = vunpack.c.l.b16 %v2313
    %v3188 = vunpack.c.h.b16 %v2313
    %v3189 = vunpack.c.l.b16 %v2314
    %v3190 = vunpack.c.h.b16 %v2314
    %v3191 = vunpack.c.l.b16 %v2315
    %v3192 = vunpack.c.h.b16 %v2315
    %v3193 = vunpack.c.l.b16 %v2316
    %v3194 = vunpack.c.h.b16 %v2316
    %v3195 = vunpack.c.l.b16 %v2317
    %v3196 = vunpack.c.h.b16 %v2317
    %v3197 = vunpack.c.l.b16 %v2318
    %v3198 = vunpack.c.h.b16 %v2318
    %v3199 = vunpack.c.l.b16 %v2319
    %v3200 = vunpack.c.h.b16 %v2319
    %v3201 = vunpack.c.l.b16 %v2320
    %v3202 = vunpack.c.h.b16 %v2320
    %v3203 = vunpack.c.l.b16 %v2321
    %v3204 = vunpack.c.h.b16 %v2321
    %v3205 = vunpack.c.l.b16 %v2322
    %v3206 = vunpack.c.h.b16 %v2322
    %v3207 = vunpack.c.l.b16 %v2323
    %v3208 = vunpack.c.h.b16 %v2323
    %v3209 = vunpack.c.l.b16 %v2324
    %v3210 = vunpack.c.h.b16 %v2324
    %v3211 = vunpack.c.l.b16 %v2325
    %v3212 = vunpack.c.h.b16 %v2325
    %v3213 = vunpack.c.l.b16 %v2326
    %v3214 = vunpack.c.h.b16 %v2326
    %v3215 = vunpack.c.l.b16 %v2327
    %v3216 = vunpack.c.h.b16 %v2327
    %v3217 = vunpack.c.l.b16 %v2328
    %v3218 = vunpack.c.h.b16 %v2328
    %v3219 = vunpack.c.l.b16 %v2329
    %v3220 = vunpack.c.h.b16 %v2329
    %v3221 = vunpack.c.l.b16 %v2330
    %v3222 = vunpack.c.h.b16 %v2330
    %v3223 = vunpack.c.l.b16 %v2331
    %v3224 = vunpack.c.h.b16 %v2331
    %v3225 = vunpack.c.l.b16 %v2332
    %v3226 = vunpack.c.h.b16 %v2332
    %v3227 = vunpack.c.l.b16 %v2333
    %v3228 = vunpack.c.h.b16 %v2333
    %v3229 = vunpack.c.l.b16 %v2334
    %v3230 = vunpack.c.h.b16 %v2334
    %v3231 = vpack.c.b16 %v2661, %v2655
    %v3232 = vpack.c.b16 %v2662, %v2656
    %v3233 = vpack.c.b16 %v2663, %v2657
    %v3234 = vpack.c.b16 %v2664, %v2658
    %v3235 = vpack.c.b16 %v2665, %v2659
    %v3236 = vpack.c.b16 %v2666, %v2660
    %v3237 = vpack.c.b16 %v2673, %v2667
    %v3238 = vpack.c.b16 %v2674, %v2668
    %v3239 = vpack.c.b16 %v2675, %v2669
    %v3240 = vpack.c.b16 %v2676, %v2670
    %v3241 = vpack.c.b16 %v2677, %v2671
    %v3242 = vpack.c.b16 %v2678, %v2672
    %v3243 = vpack.c.b16 %v2685, %v2679
    %v3244 = vpack.c.b16 %v2686, %v2680
    %v3245 = vpack.c.b16 %v2687, %v2681
    %v3246 = vpack.c.b16 %v2688, %v2682
    %v3247 = vpack.c.b16 %v2689, %v2683
    %v3248 = vpack.c.b16 %v2690, %v2684
    %v3249 = vpack.c.b16 %v2697, %v2691
    %v3250 = vpack.c.b16 %v2698, %v2692
    %v3251 = vpack.c.b16 %v2699, %v2693
    %v3252 = vpack.c.b16 %v2700, %v2694
    %v3253 = vpack.c.b16 %v2701, %v2695
    %v3254 = vpack.c.b16 %v2702, %v2696
    %v3255 = vpack.c.b16 %v2709, %v2703
    %v3256 = vpack.c.b16 %v2710, %v2704
    %v3257 = vpack.c.b16 %v2711, %v2705
    %v3258 = vpack.c.b16 %v2712, %v2706
    %v3259 = vpack.c.b16 %v2713, %v2707
    %v3260 = vpack.c.b16 %v2714, %v2708
    %v3261 = vpack.c.b16 %v2721, %v2715
    %v3262 = vpack.c.b16 %v2722, %v2716
    %v3263 = vpack.c.b16 %v2723, %v2717
    %v3264 = vpack.c.b16 %v2724, %v2718
    %v3265 = vpack.c.b16 %v2725, %v2719
    %v3266 = vpack.c.b16 %v2726, %v2720
    %v3267 = vpack.c.b16 %v2733, %v2727
    %v3268 = vpack.c.b16 %v2734, %v2728
    %v3269 = vpack.c.b16 %v2735, %v2729
    %v3270 = vpack.c.b16 %v2736, %v2730
    %v3271 = vpack.c.b16 %v2737, %v2731
    %v3272 = vpack.c.b16 %v2738, %v2732
    %v3273 = vpack.c.b16 %v2745, %v2739
    %v3274 = vpack.c.b16 %v2746, %v2740
    %v3275 = vpack.c.b16 %v2747, %v2741
    %v3276 = vpack.c.b16 %v2748, %v2742
    %v3277 = vpack.c.b16 %v2749, %v2743
    %v3278 = vpack.c.b16 %v2750, %v2744
    %v3279 = vpack.c.b16 %v2757, %v2751
    %v3280 = vpack.c.b16 %v2758, %v2752
    %v3281 = vpack.c.b16 %v2759, %v2753
    %v3282 = vpack.c.b16 %v2760, %v2754
    %v3283 = vpack.c.b16 %v2761, %v2755
    %v3284 = vpack.c.b16 %v2762, %v2756
    %v3285 = vpack.c.b16 %v2769, %v2763
    %v3286 = vpack.c.b16 %v2770, %v2764
    %v3287 = vpack.c.b16 %v2771, %v2765
    %v3288 = vpack.c.b16 %v2772, %v2766
    %v3289 = vpack.c.b16 %v2773, %v2767
    %v3290 = vpack.c.b16 %v2774, %v2768
    %v3291 = vpack.c.b16 %v2781, %v2775
    %v3292 = vpack.c.b16 %v2782, %v2776
    %v3293 = vpack.c.b16 %v2783, %v2777
    %v3294 = vpack.c.b16 %v2784, %v2778
    %v3295 = vpack.c.b16 %v2785, %v2779
    %v3296 = vpack.c.b16 %v2786, %v2780
    %v3297 = vpack.c.b16 %v2793, %v2787
    %v3298 = vpack.c.b16 %v2794, %v2788
    %v3299 = vpack.c.b16 %v2795, %v2789
    %v3300 = vpack.c.b16 %v2796, %v2790
    %v3301 = vpack.c.b16 %v2797, %v2791
    %v3302 = vpack.c.b16 %v2798, %v2792
    %v3303 = vpack.c.b16 %v2805, %v2799
    %v3304 = vpack.c.b16 %v2806, %v2800
    %v3305 = vpack.c.b16 %v2807, %v2801
    %v3306 = vpack.c.b16 %v2808, %v2802
    %v3307 = vpack.c.b16 %v2809, %v2803
    %v3308 = vpack.c.b16 %v2810, %v2804
    %v3309 = vpack.c.b16 %v2817, %v2811
    %v3310 = vpack.c.b16 %v2818, %v2812
    %v3311 = vpack.c.b16 %v2819, %v2813
    %v3312 = vpack.c.b16 %v2820, %v2814
    %v3313 = vpack.c.b16 %v2821, %v2815
    %v3314 = vpack.c.b16 %v2822, %v2816
    %v3315 = vpack.c.b16 %v2829, %v2823
    %v3316 = vpack.c.b16 %v2830, %v2824
    %v3317 = vpack.c.b16 %v2831, %v2825
    %v3318 = vpack.c.b16 %v2832, %v2826
    %v3319 = vpack.c.b16 %v2833, %v2827
    %v3320 = vpack.c.b16 %v2834, %v2828
    %v3321 = vpack.c.b16 %v2841, %v2835
    %v3322 = vpack.c.b16 %v2842, %v2836
    %v3323 = vpack.c.b16 %v2843, %v2837
    %v3324 = vpack.c.b16 %v2844, %v2838
    %v3325 = vpack.c.b16 %v2845, %v2839
    %v3326 = vpack.c.b16 %v2846, %v2840
    %v3327 = vpack.c.b16 %v2853, %v2847
    %v3328 = vpack.c.b16 %v2854, %v2848
    %v3329 = vpack.c.b16 %v2855, %v2849
    %v3330 = vpack.c.b16 %v2856, %v2850
    %v3331 = vpack.c.b16 %v2857, %v2851
    %v3332 = vpack.c.b16 %v2858, %v2852
    %v3333 = vpack.c.b16 %v2865, %v2859
    %v3334 = vpack.c.b16 %v2866, %v2860
    %v3335 = vpack.c.b16 %v2867, %v2861
    %v3336 = vpack.c.b16 %v2868, %v2862
    %v3337 = vpack.c.b16 %v2869, %v2863
    %v3338 = vpack.c.b16 %v2870, %v2864
    %v3339 = vpack.c.b16 %v2877, %v2871
    %v3340 = vpack.c.b16 %v2878, %v2872
    %v3341 = vpack.c.b16 %v2879, %v2873
    %v3342 = vpack.c.b16 %v2880, %v2874
    %v3343 = vpack.c.b16 %v2881, %v2875
    %v3344 = vpack.c.b16 %v2882, %v2876
    %v3345 = vpack.c.b16 %v2889, %v2883
    %v3346 = vpack.c.b16 %v2890, %v2884
    %v3347 = vpack.c.b16 %v2891, %v2885
    %v3348 = vpack.c.b16 %v2892, %v2886
    %v3349 = vpack.c.b16 %v2893, %v2887
    %v3350 = vpack.c.b16 %v2894, %v2888
    %v3351 = vpack.c.b16 %v2901, %v2895
    %v3352 = vpack.c.b16 %v2902, %v2896
    %v3353 = vpack.c.b16 %v2903, %v2897
    %v3354 = vpack.c.b16 %v2904, %v2898
    %v3355 = vpack.c.b16 %v2905, %v2899
    %v3356 = vpack.c.b16 %v2906, %v2900
    %v3357 = vpack.c.b16 %v2913, %v2907
    %v3358 = vpack.c.b16 %v2914, %v2908
    %v3359 = vpack.c.b16 %v2915, %v2909
    %v3360 = vpack.c.b16 %v2916, %v2910
    %v3361 = vpack.c.b16 %v2917, %v2911
    %v3362 = vpack.c.b16 %v2918, %v2912
    %v3363 = vpack.c.b16 %v2925, %v2919
    %v3364 = vpack.c.b16 %v2926, %v2920
    %v3365 = vpack.c.b16 %v2927, %v2921
    %v3366 = vpack.c.b16 %v2928, %v2922
    %v3367 = vpack.c.b16 %v2929, %v2923
    %v3368 = vpack.c.b16 %v2930, %v2924
    %v3369 = vpack.c.b16 %v2937, %v2931
    %v3370 = vpack.c.b16 %v2938, %v2932
    %v3371 = vpack.c.b16 %v2939, %v2933
    %v3372 = vpack.c.b16 %v2940, %v2934
    %v3373 = vpack.c.b16 %v2941, %v2935
    %v3374 = vpack.c.b16 %v2942, %v2936
    %v3375 = vpack.c.b16 %v2949, %v2943
    %v3376 = vpack.c.b16 %v2950, %v2944
    %v3377 = vpack.c.b16 %v2951, %v2945
    %v3378 = vpack.c.b16 %v2952, %v2946
    %v3379 = vpack.c.b16 %v2953, %v2947
    %v3380 = vpack.c.b16 %v2954, %v2948
    %v3381 = vpack.c.b16 %v2961, %v2955
    %v3382 = vpack.c.b16 %v2962, %v2956
    %v3383 = vpack.c.b16 %v2963, %v2957
    %v3384 = vpack.c.b16 %v2964, %v2958
    %v3385 = vpack.c.b16 %v2965, %v2959
    %v3386 = vpack.c.b16 %v2966, %v2960
    %v3387 = vpack.c.b16 %v2973, %v2967
    %v3388 = vpack.c.b16 %v2974, %v2968
    %v3389 = vpack.c.b16 %v2975, %v2969
    %v3390 = vpack.c.b16 %v2976, %v2970
    %v3391 = vpack.c.b16 %v2977, %v2971
    %v3392 = vpack.c.b16 %v2978, %v2972
    %v3393 = vpack.c.b16 %v2985, %v2979
    %v3394 = vpack.c.b16 %v2986, %v2980
    %v3395 = vpack.c.b16 %v2987, %v2981
    %v3396 = vpack.c.b16 %v2988, %v2982
    %v3397 = vpack.c.b16 %v2989, %v2983
    %v3398 = vpack.c.b16 %v2990, %v2984
    %v3399 = vpack.c.b16 %v2997, %v2991
    %v3400 = vpack.c.b16 %v2998, %v2992
    %v3401 = vpack.c.b16 %v2999, %v2993
    %v3402 = vpack.c.b16 %v3000, %v2994
    %v3403 = vpack.c.b16 %v3001, %v2995
    %v3404 = vpack.c.b16 %v3002, %v2996
    %v3405 = vpack.c.b16 %v3009, %v3003
    %v3406 = vpack.c.b16 %v3010, %v3004
    %v3407 = vpack.c.b16 %v3011, %v3005
    %v3408 = vpack.c.b16 %v3012, %v3006
    %v3409 = vpack.c.b16 %v3013, %v3007
    %v3410 = vpack.c.b16 %v3014, %v3008
    %v3411 = vpack.c.b16 %v3021, %v3015
    %v3412 = vpack.c.b16 %v3022, %v3016
    %v3413 = vpack.c.b16 %v3023, %v3017
    %v3414 = vpack.c.b16 %v3024, %v3018
    %v3415 = vpack.c.b16 %v3025, %v3019
    %v3416 = vpack.c.b16 %v3026, %v3020
    %v3417 = vpack.c.b16 %v3033, %v3027
    %v3418 = vpack.c.b16 %v3034, %v3028
    %v3419 = vpack.c.b16 %v3035, %v3029
    %v3420 = vpack.c.b16 %v3036, %v3030
    %v3421 = vpack.c.b16 %v3037, %v3031
    %v3422 = vpack.c.b16 %v3038, %v3032
    %v3423 = vpack.c.b16 %v3045, %v3039
    %v3424 = vpack.c.b16 %v3046, %v3040
    %v3425 = vpack.c.b16 %v3047, %v3041
    %v3426 = vpack.c.b16 %v3048, %v3042
    %v3427 = vpack.c.b16 %v3049, %v3043
    %v3428 = vpack.c.b16 %v3050, %v3044
    %v3429 = vpack.c.b16 %v3057, %v3051
    %v3430 = vpack.c.b16 %v3058, %v3052
    %v3431 = vpack.c.b16 %v3059, %v3053
    %v3432 = vpack.c.b16 %v3060, %v3054
    %v3433 = vpack.c.b16 %v3061, %v3055
    %v3434 = vpack.c.b16 %v3062, %v3056
    %v3435 = vpack.c.b16 %v3069, %v3063
    %v3436 = vpack.c.b16 %v3070, %v3064
    %v3437 = vpack.c.b16 %v3071, %v3065
    %v3438 = vpack.c.b16 %v3072, %v3066
    %v3439 = vpack.c.b16 %v3073, %v3067
    %v3440 = vpack.c.b16 %v3074, %v3068
    %v3441 = vpack.c.b16 %v3081, %v3075
    %v3442 = vpack.c.b16 %v3082, %v3076
    %v3443 = vpack.c.b16 %v3083, %v3077
    %v3444 = vpack.c.b16 %v3084, %v3078
    %v3445 = vpack.c.b16 %v3085, %v3079
    %v3446 = vpack.c.b16 %v3086, %v3080
    %v3447 = vpack.c.b16 %v3093, %v3087
    %v3448 = vpack.c.b16 %v3094, %v3088
    %v3449 = vpack.c.b16 %v3095, %v3089
    %v3450 = vpack.c.b16 %v3096, %v3090
    %v3451 = vpack.c.b16 %v3097, %v3091
    %v3452 = vpack.c.b16 %v3098, %v3092
    %v3453 = vpack.c.b16 %v3105, %v3099
    %v3454 = vpack.c.b16 %v3106, %v3100
    %v3455 = vpack.c.b16 %v3107, %v3101
    %v3456 = vpack.c.b16 %v3108, %v3102
    %v3457 = vpack.c.b16 %v3109, %v3103
    %v3458 = vpack.c.b16 %v3110, %v3104
    %v3459 = vpack.c.b16 %v3117, %v3111
    %v3460 = vpack.c.b16 %v3118, %v3112
    %v3461 = vpack.c.b16 %v3119, %v3113
    %v3462 = vpack.c.b16 %v3120, %v3114
    %v3463 = vpack.c.b16 %v3121, %v3115
    %v3464 = vpack.c.b16 %v3122, %v3116
    %v3465 = vpack.c.b16 %v3129, %v3123
    %v3466 = vpack.c.b16 %v3130, %v3124
    %v3467 = vpack.c.b16 %v3131, %v3125
    %v3468 = vpack.c.b16 %v3132, %v3126
    %v3469 = vpack.c.b16 %v3133, %v3127
    %v3470 = vpack.c.b16 %v3134, %v3128
    %v3471 = vpack.c.b16 %v3141, %v3135
    %v3472 = vpack.c.b16 %v3142, %v3136
    %v3473 = vpack.c.b16 %v3143, %v3137
    %v3474 = vpack.c.b16 %v3144, %v3138
    %v3475 = vpack.c.b16 %v3145, %v3139
    %v3476 = vpack.c.b16 %v3146, %v3140
    %v3477 = vpack.c.b16 %v3153, %v3147
    %v3478 = vpack.c.b16 %v3154, %v3148
    %v3479 = vpack.c.b16 %v3155, %v3149
    %v3480 = vpack.c.b16 %v3156, %v3150
    %v3481 = vpack.c.b16 %v3157, %v3151
    %v3482 = vpack.c.b16 %v3158, %v3152
    %v3483 = vpack.c.b16 %v3165, %v3159
    %v3484 = vpack.c.b16 %v3166, %v3160
    %v3485 = vpack.c.b16 %v3167, %v3161
    %v3486 = vpack.c.b16 %v3168, %v3162
    %v3487 = vpack.c.b16 %v3169, %v3163
    %v3488 = vpack.c.b16 %v3170, %v3164
    %v3489 = vpack.c.b16 %v3177, %v3171
    %v3490 = vpack.c.b16 %v3178, %v3172
    %v3491 = vpack.c.b16 %v3179, %v3173
    %v3492 = vpack.c.b16 %v3180, %v3174
    %v3493 = vpack.c.b16 %v3181, %v3175
    %v3494 = vpack.c.b16 %v3182, %v3176
    %v3495 = vpack.c.b16 %v3189, %v3183
    %v3496 = vpack.c.b16 %v3190, %v3184
    %v3497 = vpack.c.b16 %v3191, %v3185
    %v3498 = vpack.c.b16 %v3192, %v3186
    %v3499 = vpack.c.b16 %v3193, %v3187
    %v3500 = vpack.c.b16 %v3194, %v3188
    %v3501 = vpack.c.b16 %v3201, %v3195
    %v3502 = vpack.c.b16 %v3202, %v3196
    %v3503 = vpack.c.b16 %v3203, %v3197
    %v3504 = vpack.c.b16 %v3204, %v3198
    %v3505 = vpack.c.b16 %v3205, %v3199
    %v3506 = vpack.c.b16 %v3206, %v3200
    %v3507 = vpack.c.b16 %v3213, %v3207
    %v3508 = vpack.c.b16 %v3214, %v3208
    %v3509 = vpack.c.b16 %v3215, %v3209
    %v3510 = vpack.c.b16 %v3216, %v3210
    %v3511 = vpack.c.b16 %v3217, %v3211
    %v3512 = vpack.c.b16 %v3218, %v3212
    %v3513 = vpack.c.b16 %v3225, %v3219
    %v3514 = vpack.c.b16 %v3226, %v3220
    %v3515 = vpack.c.b16 %v3227, %v3221
    %v3516 = vpack.c.b16 %v3228, %v3222
    %v3517 = vpack.c.b16 %v3229, %v3223
    %v3518 = vpack.c.b16 %v3230, %v3224
    %3807 = vmatprep.subr.bf16.mxu0 %v3274
    %3808 = vmatpush1.bf16.msra.mxu0 %v3273
    %3809 = vmatprep.subr.bf16.mxu0 %v3268
    %3810 = vmatpush1.bf16.msra.mxu0 %v3267
    %3811 = vmatprep.subr.bf16.mxu0 %v3262
    %3812 = vmatpush1.bf16.msra.mxu0 %v3261
    %3813 = vmatprep.subr.bf16.mxu0 %v3256
    %3814 = vmatpush1.bf16.msra.mxu0 %v3255
    %3815 = vmatprep.subr.bf16.mxu0 %v3250
    %3816 = vmatpush1.bf16.msra.mxu0 %v3249
    %3817 = vmatprep.subr.bf16.mxu0 %v3244
    %3818 = vmatpush1.bf16.msra.mxu0 %v3243
    %3819 = vmatprep.subr.bf16.mxu0 %v3238
    %3820 = vmatpush1.bf16.msra.mxu0 %v3237
    %3821 = vmatprep.subr.bf16.mxu0 %v3232
    %3822 = vmatpush1.bf16.msra.mxu0 %v3231
    %3823 = vmatprep.subr.bf16.mxu0 %v3322
    %3824 = vmatpush2.bf16.msra.mxu0 %v3321
    %3825 = vmatprep.subr.bf16.mxu0 %v3316
    %3826 = vmatpush2.bf16.msra.mxu0 %v3315
    %3827 = vmatprep.subr.bf16.mxu0 %v3310
    %3828 = vmatpush2.bf16.msra.mxu0 %v3309
    %3829 = vmatprep.subr.bf16.mxu0 %v3304
    %3830 = vmatpush2.bf16.msra.mxu0 %v3303
    %3831 = vmatprep.subr.bf16.mxu0 %v3298
    %3832 = vmatpush2.bf16.msra.mxu0 %v3297
    %3833 = vmatprep.subr.bf16.mxu0 %v3292
    %3834 = vmatpush2.bf16.msra.mxu0 %v3291
    %3835 = vmatprep.subr.bf16.mxu0 %v3286
    %3836 = vmatpush2.bf16.msra.mxu0 %v3285
    %3837 = vmatprep.subr.bf16.mxu0 %v3280
    %3838 = vmatpush2.bf16.msra.mxu0 %v3279
    %3839 = vmatprep.mubr.bf16.mxu0 %v2042
    %3840 = vmatmul.mubr.bf16.gmra.mxu0 %v2041
    %v3841 = vpop.f32.mrf.mxu0
    %v3842 = vadd.f32 %v2340, %v3841
    %v3843 = vpop.f32.mrf.mxu0
    %v3844 = vadd.f32 %v2344, %v3843
    %v3845 = vpop.f32.mrf.mxu0
    %v3846 = vpop.f32.mrf.mxu0
    %3847 = vdwg.mxu0
    %3848 = vmatprep.subr.bf16.mxu0 %v3370
    %3849 = vmatpush1.bf16.msra.mxu0 %v3369
    %3850 = vmatprep.subr.bf16.mxu0 %v3364
    %3851 = vmatpush1.bf16.msra.mxu0 %v3363
    %3852 = vmatprep.subr.bf16.mxu0 %v3358
    %3853 = vmatpush1.bf16.msra.mxu0 %v3357
    %3854 = vmatprep.subr.bf16.mxu0 %v3352
    %3855 = vmatpush1.bf16.msra.mxu0 %v3351
    %3856 = vmatprep.subr.bf16.mxu0 %v3346
    %3857 = vmatpush1.bf16.msra.mxu0 %v3345
    %3858 = vmatprep.subr.bf16.mxu0 %v3340
    %3859 = vmatpush1.bf16.msra.mxu0 %v3339
    %3860 = vmatprep.subr.bf16.mxu0 %v3334
    %3861 = vmatpush1.bf16.msra.mxu0 %v3333
    %3862 = vmatprep.subr.bf16.mxu0 %v3328
    %3863 = vmatpush1.bf16.msra.mxu0 %v3327
    %3864 = vmatprep.subr.bf16.mxu0 %v3418
    %3865 = vmatpush2.bf16.msra.mxu0 %v3417
    %3866 = vmatprep.subr.bf16.mxu0 %v3412
    %3867 = vmatpush2.bf16.msra.mxu0 %v3411
    %3868 = vmatprep.subr.bf16.mxu0 %v3406
    %3869 = vmatpush2.bf16.msra.mxu0 %v3405
    %3870 = vmatprep.subr.bf16.mxu0 %v3400
    %3871 = vmatpush2.bf16.msra.mxu0 %v3399
    %3872 = vmatprep.subr.bf16.mxu0 %v3394
    %3873 = vmatpush2.bf16.msra.mxu0 %v3393
    %3874 = vmatprep.subr.bf16.mxu0 %v3388
    %3875 = vmatpush2.bf16.msra.mxu0 %v3387
    %3876 = vmatprep.subr.bf16.mxu0 %v3382
    %3877 = vmatpush2.bf16.msra.mxu0 %v3381
    %3878 = vmatprep.subr.bf16.mxu0 %v3376
    %3879 = vmatpush2.bf16.msra.mxu0 %v3375
    %3880 = vmatprep.mubr.bf16.mxu0 %v2044
    %3881 = vmatmul.mubr.bf16.gmra.mxu0 %v2043
    %v3882 = vpop.f32.mrf.mxu0
    %v3883 = vadd.f32 %v3842, %v3882
    %v3884 = vpop.f32.mrf.mxu0
    %v3885 = vadd.f32 %v3844, %v3884
    %v3886 = vpop.f32.mrf.mxu0
    %v3887 = vpop.f32.mrf.mxu0
    %3888 = vdwg.mxu0
    %3889 = vmatprep.subr.bf16.mxu0 %v3466
    %3890 = vmatpush1.bf16.msra.mxu0 %v3465
    %3891 = vmatprep.subr.bf16.mxu0 %v3460
    %3892 = vmatpush1.bf16.msra.mxu0 %v3459
    %3893 = vmatprep.subr.bf16.mxu0 %v3454
    %3894 = vmatpush1.bf16.msra.mxu0 %v3453
    %3895 = vmatprep.subr.bf16.mxu0 %v3448
    %3896 = vmatpush1.bf16.msra.mxu0 %v3447
    %3897 = vmatprep.subr.bf16.mxu0 %v3442
    %3898 = vmatpush1.bf16.msra.mxu0 %v3441
    %3899 = vmatprep.subr.bf16.mxu0 %v3436
    %3900 = vmatpush1.bf16.msra.mxu0 %v3435
    %3901 = vmatprep.subr.bf16.mxu0 %v3430
    %3902 = vmatpush1.bf16.msra.mxu0 %v3429
    %3903 = vmatprep.subr.bf16.mxu0 %v3424
    %3904 = vmatpush1.bf16.msra.mxu0 %v3423
    %3905 = vmatprep.subr.bf16.mxu0 %v3514
    %3906 = vmatpush2.bf16.msra.mxu0 %v3513
    %3907 = vmatprep.subr.bf16.mxu0 %v3508
    %3908 = vmatpush2.bf16.msra.mxu0 %v3507
    %3909 = vmatprep.subr.bf16.mxu0 %v3502
    %3910 = vmatpush2.bf16.msra.mxu0 %v3501
    %3911 = vmatprep.subr.bf16.mxu0 %v3496
    %3912 = vmatpush2.bf16.msra.mxu0 %v3495
    %3913 = vmatprep.subr.bf16.mxu0 %v3490
    %3914 = vmatpush2.bf16.msra.mxu0 %v3489
    %3915 = vmatprep.subr.bf16.mxu0 %v3484
    %3916 = vmatpush2.bf16.msra.mxu0 %v3483
    %3917 = vmatprep.subr.bf16.mxu0 %v3478
    %3918 = vmatpush2.bf16.msra.mxu0 %v3477
    %3919 = vmatprep.subr.bf16.mxu0 %v3472
    %3920 = vmatpush2.bf16.msra.mxu0 %v3471
    %3921 = vmatprep.mubr.bf16.mxu0 %v2046
    %3922 = vmatmul.mubr.bf16.gmra.mxu0 %v2045
    %v3923 = vpop.f32.mrf.mxu0
    %v3924 = vadd.f32 %v3883, %v3923
    %v3925 = vpop.f32.mrf.mxu0
    %v3926 = vadd.f32 %v3885, %v3925
    %v3927 = vpop.f32.mrf.mxu0
    %v3928 = vpop.f32.mrf.mxu0
    %3929 = vdwg.mxu0
    %3930 = vmatprep.subr.bf16.mxu0 %v3276
    %3931 = vmatpush1.bf16.msra.mxu0 %v3275
    %3932 = vmatprep.subr.bf16.mxu0 %v3270
    %3933 = vmatpush1.bf16.msra.mxu0 %v3269
    %3934 = vmatprep.subr.bf16.mxu0 %v3264
    %3935 = vmatpush1.bf16.msra.mxu0 %v3263
    %3936 = vmatprep.subr.bf16.mxu0 %v3258
    %3937 = vmatpush1.bf16.msra.mxu0 %v3257
    %3938 = vmatprep.subr.bf16.mxu0 %v3252
    %3939 = vmatpush1.bf16.msra.mxu0 %v3251
    %3940 = vmatprep.subr.bf16.mxu0 %v3246
    %3941 = vmatpush1.bf16.msra.mxu0 %v3245
    %3942 = vmatprep.subr.bf16.mxu0 %v3240
    %3943 = vmatpush1.bf16.msra.mxu0 %v3239
    %3944 = vmatprep.subr.bf16.mxu0 %v3234
    %3945 = vmatpush1.bf16.msra.mxu0 %v3233
    %3946 = vmatprep.subr.bf16.mxu0 %v3324
    %3947 = vmatpush2.bf16.msra.mxu0 %v3323
    %3948 = vmatprep.subr.bf16.mxu0 %v3318
    %3949 = vmatpush2.bf16.msra.mxu0 %v3317
    %3950 = vmatprep.subr.bf16.mxu0 %v3312
    %3951 = vmatpush2.bf16.msra.mxu0 %v3311
    %3952 = vmatprep.subr.bf16.mxu0 %v3306
    %3953 = vmatpush2.bf16.msra.mxu0 %v3305
    %3954 = vmatprep.subr.bf16.mxu0 %v3300
    %3955 = vmatpush2.bf16.msra.mxu0 %v3299
    %3956 = vmatprep.subr.bf16.mxu0 %v3294
    %3957 = vmatpush2.bf16.msra.mxu0 %v3293
    %3958 = vmatprep.subr.bf16.mxu0 %v3288
    %3959 = vmatpush2.bf16.msra.mxu0 %v3287
    %3960 = vmatprep.subr.bf16.mxu0 %v3282
    %3961 = vmatpush2.bf16.msra.mxu0 %v3281
    %3962 = vmatprep.mubr.bf16.mxu0 %v2042
    %3963 = vmatmul.mubr.bf16.gmra.mxu0 %v2041
    %v3964 = vpop.f32.mrf.mxu0
    %v3965 = vadd.f32 %v2348, %v3964
    %v3966 = vpop.f32.mrf.mxu0
    %v3967 = vadd.f32 %v2352, %v3966
    %v3968 = vpop.f32.mrf.mxu0
    %v3969 = vpop.f32.mrf.mxu0
    %3970 = vdwg.mxu0
    %3971 = vmatprep.subr.bf16.mxu0 %v3372
    %3972 = vmatpush1.bf16.msra.mxu0 %v3371
    %3973 = vmatprep.subr.bf16.mxu0 %v3366
    %3974 = vmatpush1.bf16.msra.mxu0 %v3365
    %3975 = vmatprep.subr.bf16.mxu0 %v3360
    %3976 = vmatpush1.bf16.msra.mxu0 %v3359
    %3977 = vmatprep.subr.bf16.mxu0 %v3354
    %3978 = vmatpush1.bf16.msra.mxu0 %v3353
    %3979 = vmatprep.subr.bf16.mxu0 %v3348
    %3980 = vmatpush1.bf16.msra.mxu0 %v3347
    %3981 = vmatprep.subr.bf16.mxu0 %v3342
    %3982 = vmatpush1.bf16.msra.mxu0 %v3341
    %3983 = vmatprep.subr.bf16.mxu0 %v3336
    %3984 = vmatpush1.bf16.msra.mxu0 %v3335
    %3985 = vmatprep.subr.bf16.mxu0 %v3330
    %3986 = vmatpush1.bf16.msra.mxu0 %v3329
    %3987 = vmatprep.subr.bf16.mxu0 %v3420
    %3988 = vmatpush2.bf16.msra.mxu0 %v3419
    %3989 = vmatprep.subr.bf16.mxu0 %v3414
    %3990 = vmatpush2.bf16.msra.mxu0 %v3413
    %3991 = vmatprep.subr.bf16.mxu0 %v3408
    %3992 = vmatpush2.bf16.msra.mxu0 %v3407
    %3993 = vmatprep.subr.bf16.mxu0 %v3402
    %3994 = vmatpush2.bf16.msra.mxu0 %v3401
    %3995 = vmatprep.subr.bf16.mxu0 %v3396
    %3996 = vmatpush2.bf16.msra.mxu0 %v3395
    %3997 = vmatprep.subr.bf16.mxu0 %v3390
    %3998 = vmatpush2.bf16.msra.mxu0 %v3389
    %3999 = vmatprep.subr.bf16.mxu0 %v3384
    %4000 = vmatpush2.bf16.msra.mxu0 %v3383
    %4001 = vmatprep.subr.bf16.mxu0 %v3378
    %4002 = vmatpush2.bf16.msra.mxu0 %v3377
    %4003 = vmatprep.mubr.bf16.mxu0 %v2044
    %4004 = vmatmul.mubr.bf16.gmra.mxu0 %v2043
    %v4005 = vpop.f32.mrf.mxu0
    %v4006 = vadd.f32 %v3965, %v4005
    %v4007 = vpop.f32.mrf.mxu0
    %v4008 = vadd.f32 %v3967, %v4007
    %v4009 = vpop.f32.mrf.mxu0
    %v4010 = vpop.f32.mrf.mxu0
    %4011 = vdwg.mxu0
    %4012 = vmatprep.subr.bf16.mxu0 %v3468
    %4013 = vmatpush1.bf16.msra.mxu0 %v3467
    %4014 = vmatprep.subr.bf16.mxu0 %v3462
    %4015 = vmatpush1.bf16.msra.mxu0 %v3461
    %4016 = vmatprep.subr.bf16.mxu0 %v3456
    %4017 = vmatpush1.bf16.msra.mxu0 %v3455
    %4018 = vmatprep.subr.bf16.mxu0 %v3450
    %4019 = vmatpush1.bf16.msra.mxu0 %v3449
    %4020 = vmatprep.subr.bf16.mxu0 %v3444
    %4021 = vmatpush1.bf16.msra.mxu0 %v3443
    %4022 = vmatprep.subr.bf16.mxu0 %v3438
    %4023 = vmatpush1.bf16.msra.mxu0 %v3437
    %4024 = vmatprep.subr.bf16.mxu0 %v3432
    %4025 = vmatpush1.bf16.msra.mxu0 %v3431
    %4026 = vmatprep.subr.bf16.mxu0 %v3426
    %4027 = vmatpush1.bf16.msra.mxu0 %v3425
    %4028 = vmatprep.subr.bf16.mxu0 %v3516
    %4029 = vmatpush2.bf16.msra.mxu0 %v3515
    %4030 = vmatprep.subr.bf16.mxu0 %v3510
    %4031 = vmatpush2.bf16.msra.mxu0 %v3509
    %4032 = vmatprep.subr.bf16.mxu0 %v3504
    %4033 = vmatpush2.bf16.msra.mxu0 %v3503
    %4034 = vmatprep.subr.bf16.mxu0 %v3498
    %4035 = vmatpush2.bf16.msra.mxu0 %v3497
    %4036 = vmatprep.subr.bf16.mxu0 %v3492
    %4037 = vmatpush2.bf16.msra.mxu0 %v3491
    %4038 = vmatprep.subr.bf16.mxu0 %v3486
    %4039 = vmatpush2.bf16.msra.mxu0 %v3485
    %4040 = vmatprep.subr.bf16.mxu0 %v3480
    %4041 = vmatpush2.bf16.msra.mxu0 %v3479
    %4042 = vmatprep.subr.bf16.mxu0 %v3474
    %4043 = vmatpush2.bf16.msra.mxu0 %v3473
    %4044 = vmatprep.mubr.bf16.mxu0 %v2046
    %4045 = vmatmul.mubr.bf16.gmra.mxu0 %v2045
    %v4046 = vpop.f32.mrf.mxu0
    %v4047 = vadd.f32 %v4006, %v4046
    %v4048 = vpop.f32.mrf.mxu0
    %v4049 = vadd.f32 %v4008, %v4048
    %v4050 = vpop.f32.mrf.mxu0
    %v4051 = vpop.f32.mrf.mxu0
    %4052 = vdwg.mxu0
    %4053 = vmatprep.subr.bf16.mxu0 %v3278
    %4054 = vmatpush1.bf16.msra.mxu0 %v3277
    %4055 = vmatprep.subr.bf16.mxu0 %v3272
    %4056 = vmatpush1.bf16.msra.mxu0 %v3271
    %4057 = vmatprep.subr.bf16.mxu0 %v3266
    %4058 = vmatpush1.bf16.msra.mxu0 %v3265
    %4059 = vmatprep.subr.bf16.mxu0 %v3260
    %4060 = vmatpush1.bf16.msra.mxu0 %v3259
    %4061 = vmatprep.subr.bf16.mxu0 %v3254
    %4062 = vmatpush1.bf16.msra.mxu0 %v3253
    %4063 = vmatprep.subr.bf16.mxu0 %v3248
    %4064 = vmatpush1.bf16.msra.mxu0 %v3247
    %4065 = vmatprep.subr.bf16.mxu0 %v3242
    %4066 = vmatpush1.bf16.msra.mxu0 %v3241
    %4067 = vmatprep.subr.bf16.mxu0 %v3236
    %4068 = vmatpush1.bf16.msra.mxu0 %v3235
    %4069 = vmatprep.subr.bf16.mxu0 %v3326
    %4070 = vmatpush2.bf16.msra.mxu0 %v3325
    %4071 = vmatprep.subr.bf16.mxu0 %v3320
    %4072 = vmatpush2.bf16.msra.mxu0 %v3319
    %4073 = vmatprep.subr.bf16.mxu0 %v3314
    %4074 = vmatpush2.bf16.msra.mxu0 %v3313
    %4075 = vmatprep.subr.bf16.mxu0 %v3308
    %4076 = vmatpush2.bf16.msra.mxu0 %v3307
    %4077 = vmatprep.subr.bf16.mxu0 %v3302
    %4078 = vmatpush2.bf16.msra.mxu0 %v3301
    %4079 = vmatprep.subr.bf16.mxu0 %v3296
    %4080 = vmatpush2.bf16.msra.mxu0 %v3295
    %4081 = vmatprep.subr.bf16.mxu0 %v3290
    %4082 = vmatpush2.bf16.msra.mxu0 %v3289
    %4083 = vmatprep.subr.bf16.mxu0 %v3284
    %4084 = vmatpush2.bf16.msra.mxu0 %v3283
    %4085 = vmatprep.mubr.bf16.mxu0 %v2042
    %4086 = vmatmul.mubr.bf16.gmra.mxu0 %v2041
    %v4087 = vpop.f32.mrf.mxu0
    %v4088 = vadd.f32 %v2356, %v4087
    %v4089 = vpop.f32.mrf.mxu0
    %v4090 = vadd.f32 %v2360, %v4089
    %v4091 = vpop.f32.mrf.mxu0
    %v4092 = vpop.f32.mrf.mxu0
    %4093 = vdwg.mxu0
    %4094 = vmatprep.subr.bf16.mxu0 %v3374
    %4095 = vmatpush1.bf16.msra.mxu0 %v3373
    %4096 = vmatprep.subr.bf16.mxu0 %v3368
    %4097 = vmatpush1.bf16.msra.mxu0 %v3367
    %4098 = vmatprep.subr.bf16.mxu0 %v3362
    %4099 = vmatpush1.bf16.msra.mxu0 %v3361
    %4100 = vmatprep.subr.bf16.mxu0 %v3356
    %4101 = vmatpush1.bf16.msra.mxu0 %v3355
    %4102 = vmatprep.subr.bf16.mxu0 %v3350
    %4103 = vmatpush1.bf16.msra.mxu0 %v3349
    %4104 = vmatprep.subr.bf16.mxu0 %v3344
    %4105 = vmatpush1.bf16.msra.mxu0 %v3343
    %4106 = vmatprep.subr.bf16.mxu0 %v3338
    %4107 = vmatpush1.bf16.msra.mxu0 %v3337
    %4108 = vmatprep.subr.bf16.mxu0 %v3332
    %4109 = vmatpush1.bf16.msra.mxu0 %v3331
    %4110 = vmatprep.subr.bf16.mxu0 %v3422
    %4111 = vmatpush2.bf16.msra.mxu0 %v3421
    %4112 = vmatprep.subr.bf16.mxu0 %v3416
    %4113 = vmatpush2.bf16.msra.mxu0 %v3415
    %4114 = vmatprep.subr.bf16.mxu0 %v3410
    %4115 = vmatpush2.bf16.msra.mxu0 %v3409
    %4116 = vmatprep.subr.bf16.mxu0 %v3404
    %4117 = vmatpush2.bf16.msra.mxu0 %v3403
    %4118 = vmatprep.subr.bf16.mxu0 %v3398
    %4119 = vmatpush2.bf16.msra.mxu0 %v3397
    %4120 = vmatprep.subr.bf16.mxu0 %v3392
    %4121 = vmatpush2.bf16.msra.mxu0 %v3391
    %4122 = vmatprep.subr.bf16.mxu0 %v3386
    %4123 = vmatpush2.bf16.msra.mxu0 %v3385
    %4124 = vmatprep.subr.bf16.mxu0 %v3380
    %4125 = vmatpush2.bf16.msra.mxu0 %v3379
    %4126 = vmatprep.mubr.bf16.mxu0 %v2044
    %4127 = vmatmul.mubr.bf16.gmra.mxu0 %v2043
    %v4128 = vpop.f32.mrf.mxu0
    %v4129 = vadd.f32 %v4088, %v4128
    %v4130 = vpop.f32.mrf.mxu0
    %v4131 = vadd.f32 %v4090, %v4130
    %v4132 = vpop.f32.mrf.mxu0
    %v4133 = vpop.f32.mrf.mxu0
    %4134 = vdwg.mxu0
    %4135 = vmatprep.subr.bf16.mxu0 %v3470
    %4136 = vmatpush1.bf16.msra.mxu0 %v3469
    %4137 = vmatprep.subr.bf16.mxu0 %v3464
    %4138 = vmatpush1.bf16.msra.mxu0 %v3463
    %4139 = vmatprep.subr.bf16.mxu0 %v3458
    %4140 = vmatpush1.bf16.msra.mxu0 %v3457
    %4141 = vmatprep.subr.bf16.mxu0 %v3452
    %4142 = vmatpush1.bf16.msra.mxu0 %v3451
    %4143 = vmatprep.subr.bf16.mxu0 %v3446
    %4144 = vmatpush1.bf16.msra.mxu0 %v3445
    %4145 = vmatprep.subr.bf16.mxu0 %v3440
    %4146 = vmatpush1.bf16.msra.mxu0 %v3439
    %4147 = vmatprep.subr.bf16.mxu0 %v3434
    %4148 = vmatpush1.bf16.msra.mxu0 %v3433
    %4149 = vmatprep.subr.bf16.mxu0 %v3428
    %4150 = vmatpush1.bf16.msra.mxu0 %v3427
    %4151 = vmatprep.subr.bf16.mxu0 %v3518
    %4152 = vmatpush2.bf16.msra.mxu0 %v3517
    %4153 = vmatprep.subr.bf16.mxu0 %v3512
    %4154 = vmatpush2.bf16.msra.mxu0 %v3511
    %4155 = vmatprep.subr.bf16.mxu0 %v3506
    %4156 = vmatpush2.bf16.msra.mxu0 %v3505
    %4157 = vmatprep.subr.bf16.mxu0 %v3500
    %4158 = vmatpush2.bf16.msra.mxu0 %v3499
    %4159 = vmatprep.subr.bf16.mxu0 %v3494
    %4160 = vmatpush2.bf16.msra.mxu0 %v3493
    %4161 = vmatprep.subr.bf16.mxu0 %v3488
    %4162 = vmatpush2.bf16.msra.mxu0 %v3487
    %4163 = vmatprep.subr.bf16.mxu0 %v3482
    %4164 = vmatpush2.bf16.msra.mxu0 %v3481
    %4165 = vmatprep.subr.bf16.mxu0 %v3476
    %4166 = vmatpush2.bf16.msra.mxu0 %v3475
    %4167 = vmatprep.mubr.bf16.mxu0 %v2046
    %4168 = vmatmul.mubr.bf16.gmra.mxu0 %v2045
    %v4169 = vpop.f32.mrf.mxu0
    %v4170 = vadd.f32 %v4129, %v4169
    %v4171 = vpop.f32.mrf.mxu0
    %v4172 = vadd.f32 %v4131, %v4171
    %v4173 = vpop.f32.mrf.mxu0
    %v4174 = vpop.f32.mrf.mxu0
    %4175 = vdwg.mxu0
    %v4176 = vtanh.pop %v3924
    %v4177 = vtanh.pop %v3926
    %v4178 = vtanh.pop %v4047
    %v4179 = vtanh.pop %v4049
    %v4180 = vtanh.pop %v4170
    %v4181 = vtanh.pop %v4172
    %v4182 = vld [vmem:[#allocation13] sm:$0xff]
    %v4183 = vld [vmem:[#allocation13 + $0x8] sm:$0xff]
    %v4184 = vld [vmem:[#allocation13 + $0x10] sm:$0xff]
    %v4185 = vld [vmem:[#allocation13 + $0x18] sm:$0xff]
    %v4186 = vld [vmem:[#allocation13 + $0x20] sm:$0xff]
    %v4187 = vld [vmem:[#allocation13 + $0x28] sm:$0xff]
    %v4188 = vld [vmem:[#allocation13 + $0x30] sm:$0xff]
    %v4189 = vld [vmem:[#allocation13 + $0x38] sm:$0xff]
    %v4190 = vld [vmem:[#allocation13 + $0x40] sm:$0xff]
    %v4191 = vld [vmem:[#allocation13 + $0x48] sm:$0xff]
    %v4192 = vld [vmem:[#allocation13 + $0x50] sm:$0xff]
    %v4193 = vld [vmem:[#allocation13 + $0x58] sm:$0xff]
    %v4194 = vld [vmem:[#allocation13 + $0x60] sm:$0xff]
    %v4195 = vld [vmem:[#allocation13 + $0x68] sm:$0xff]
    %v4196 = vld [vmem:[#allocation13 + $0x70] sm:$0xff]
    %v4197 = vld [vmem:[#allocation13 + $0x78] sm:$0xff]
    %v4198 = vld [vmem:[#allocation13 + $0x80] sm:$0xff]
    %v4199 = vld [vmem:[#allocation13 + $0x88] sm:$0xff]
    %v4200 = vld [vmem:[#allocation13 + $0x90] sm:$0xff]
    %v4201 = vld [vmem:[#allocation13 + $0x98] sm:$0xff]
    %v4202 = vld [vmem:[#allocation13 + $0xa0] sm:$0xff]
    %v4203 = vld [vmem:[#allocation13 + $0xa8] sm:$0xff]
    %v4204 = vld [vmem:[#allocation13 + $0xb0] sm:$0xff]
    %v4205 = vld [vmem:[#allocation13 + $0xb8] sm:$0xff]
    %v4206 = vld [vmem:[#allocation13 + $0xc0] sm:$0xff]
    %v4207 = vld [vmem:[#allocation13 + $0xc8] sm:$0xff]
    %v4208 = vld [vmem:[#allocation13 + $0xd0] sm:$0xff]
    %v4209 = vld [vmem:[#allocation13 + $0xd8] sm:$0xff]
    %v4210 = vld [vmem:[#allocation13 + $0xe0] sm:$0xff]
    %v4211 = vld [vmem:[#allocation13 + $0xe8] sm:$0xff]
    %v4212 = vld [vmem:[#allocation13 + $0xf0] sm:$0xff]
    %v4213 = vld [vmem:[#allocation13 + $0xf8] sm:$0xff]
    %v4214 = vld [vmem:[#allocation13 + $0x100] sm:$0xff]
    %v4215 = vld [vmem:[#allocation13 + $0x108] sm:$0xff]
    %v4216 = vld [vmem:[#allocation13 + $0x110] sm:$0xff]
    %v4217 = vld [vmem:[#allocation13 + $0x118] sm:$0xff]
    %v4218 = vld [vmem:[#allocation13 + $0x120] sm:$0xff]
    %v4219 = vld [vmem:[#allocation13 + $0x128] sm:$0xff]
    %v4220 = vld [vmem:[#allocation13 + $0x130] sm:$0xff]
    %v4221 = vld [vmem:[#allocation13 + $0x138] sm:$0xff]
    %v4222 = vld [vmem:[#allocation13 + $0x140] sm:$0xff]
    %v4223 = vld [vmem:[#allocation13 + $0x148] sm:$0xff]
    %v4224 = vld [vmem:[#allocation13 + $0x150] sm:$0xff]
    %v4225 = vld [vmem:[#allocation13 + $0x158] sm:$0xff]
    %v4226 = vld [vmem:[#allocation13 + $0x160] sm:$0xff]
    %v4227 = vld [vmem:[#allocation13 + $0x168] sm:$0xff]
    %v4228 = vld [vmem:[#allocation13 + $0x170] sm:$0xff]
    %v4229 = vld [vmem:[#allocation13 + $0x178] sm:$0xff]
    %v4230 = vld [vmem:[#allocation13 + $0x180] sm:$0xff]
    %v4231 = vld [vmem:[#allocation13 + $0x188] sm:$0xff]
    %v4232 = vld [vmem:[#allocation13 + $0x190] sm:$0xff]
    %v4233 = vld [vmem:[#allocation13 + $0x198] sm:$0xff]
    %v4234 = vld [vmem:[#allocation13 + $0x1a0] sm:$0xff]
    %v4235 = vld [vmem:[#allocation13 + $0x1a8] sm:$0xff]
    %v4236 = vld [vmem:[#allocation13 + $0x1b0] sm:$0xff]
    %v4237 = vld [vmem:[#allocation13 + $0x1b8] sm:$0xff]
    %v4238 = vld [vmem:[#allocation13 + $0x1c0] sm:$0xff]
    %v4239 = vld [vmem:[#allocation13 + $0x1c8] sm:$0xff]
    %v4240 = vld [vmem:[#allocation13 + $0x1d0] sm:$0xff]
    %v4241 = vld [vmem:[#allocation13 + $0x1d8] sm:$0xff]
    %v4242 = vld [vmem:[#allocation13 + $0x1e0] sm:$0xff]
    %v4243 = vld [vmem:[#allocation13 + $0x1e8] sm:$0xff]
    %v4244 = vld [vmem:[#allocation13 + $0x1f0] sm:$0xff]
    %v4245 = vld [vmem:[#allocation13 + $0x1f8] sm:$0xff]
    %v4246 = vld [vmem:[#allocation13 + $0x200] sm:$0xff]
    %v4247 = vld [vmem:[#allocation13 + $0x208] sm:$0xff]
    %v4248 = vld [vmem:[#allocation13 + $0x210] sm:$0xff]
    %v4249 = vld [vmem:[#allocation13 + $0x218] sm:$0xff]
    %v4250 = vld [vmem:[#allocation13 + $0x220] sm:$0xff]
    %v4251 = vld [vmem:[#allocation13 + $0x228] sm:$0xff]
    %v4252 = vld [vmem:[#allocation13 + $0x230] sm:$0xff]
    %v4253 = vld [vmem:[#allocation13 + $0x238] sm:$0xff]
    %v4254 = vld [vmem:[#allocation13 + $0x240] sm:$0xff]
    %v4255 = vld [vmem:[#allocation13 + $0x248] sm:$0xff]
    %v4256 = vld [vmem:[#allocation13 + $0x250] sm:$0xff]
    %v4257 = vld [vmem:[#allocation13 + $0x258] sm:$0xff]
    %v4258 = vld [vmem:[#allocation13 + $0x260] sm:$0xff]
    %v4259 = vld [vmem:[#allocation13 + $0x268] sm:$0xff]
    %v4260 = vld [vmem:[#allocation13 + $0x270] sm:$0xff]
    %v4261 = vld [vmem:[#allocation13 + $0x278] sm:$0xff]
    %v4262 = vld [vmem:[#allocation13 + $0x280] sm:$0xff]
    %v4263 = vld [vmem:[#allocation13 + $0x288] sm:$0xff]
    %v4264 = vld [vmem:[#allocation13 + $0x290] sm:$0xff]
    %v4265 = vld [vmem:[#allocation13 + $0x298] sm:$0xff]
    %v4266 = vld [vmem:[#allocation13 + $0x2a0] sm:$0xff]
    %v4267 = vld [vmem:[#allocation13 + $0x2a8] sm:$0xff]
    %v4268 = vld [vmem:[#allocation13 + $0x2b0] sm:$0xff]
    %v4269 = vld [vmem:[#allocation13 + $0x2b8] sm:$0xff]
    %v4270 = vld [vmem:[#allocation13 + $0x2c0] sm:$0xff]
    %v4271 = vld [vmem:[#allocation13 + $0x2c8] sm:$0xff]
    %v4272 = vld [vmem:[#allocation13 + $0x2d0] sm:$0xff]
    %v4273 = vld [vmem:[#allocation13 + $0x2d8] sm:$0xff]
    %v4274 = vld [vmem:[#allocation13 + $0x2e0] sm:$0xff]
    %v4275 = vld [vmem:[#allocation13 + $0x2e8] sm:$0xff]
    %v4276 = vld [vmem:[#allocation13 + $0x2f0] sm:$0xff]
    %v4277 = vld [vmem:[#allocation13 + $0x2f8] sm:$0xff]
    %v4278 = vld [vmem:[#allocation13 + $0x300] sm:$0xff]
    %v4279 = vld [vmem:[#allocation13 + $0x308] sm:$0xff]
    %v4280 = vld [vmem:[#allocation13 + $0x310] sm:$0xff]
    %v4281 = vld [vmem:[#allocation13 + $0x318] sm:$0xff]
    %v4282 = vld [vmem:[#allocation13 + $0x320] sm:$0xff]
    %v4283 = vld [vmem:[#allocation13 + $0x328] sm:$0xff]
    %v4284 = vld [vmem:[#allocation13 + $0x330] sm:$0xff]
    %v4285 = vld [vmem:[#allocation13 + $0x338] sm:$0xff]
    %v4286 = vld [vmem:[#allocation13 + $0x340] sm:$0xff]
    %v4287 = vld [vmem:[#allocation13 + $0x348] sm:$0xff]
    %v4288 = vld [vmem:[#allocation13 + $0x350] sm:$0xff]
    %v4289 = vld [vmem:[#allocation13 + $0x358] sm:$0xff]
    %v4290 = vld [vmem:[#allocation13 + $0x360] sm:$0xff]
    %v4291 = vld [vmem:[#allocation13 + $0x368] sm:$0xff]
    %v4292 = vld [vmem:[#allocation13 + $0x370] sm:$0xff]
    %v4293 = vld [vmem:[#allocation13 + $0x378] sm:$0xff]
    %v4294 = vld [vmem:[#allocation13 + $0x380] sm:$0xff]
    %v4295 = vld [vmem:[#allocation13 + $0x388] sm:$0xff]
    %v4296 = vld [vmem:[#allocation13 + $0x390] sm:$0xff]
    %v4297 = vld [vmem:[#allocation13 + $0x398] sm:$0xff]
    %v4298 = vld [vmem:[#allocation13 + $0x3a0] sm:$0xff]
    %v4299 = vld [vmem:[#allocation13 + $0x3a8] sm:$0xff]
    %v4300 = vld [vmem:[#allocation13 + $0x3b0] sm:$0xff]
    %v4301 = vld [vmem:[#allocation13 + $0x3b8] sm:$0xff]
    %v4302 = vld [vmem:[#allocation13 + $0x3c0] sm:$0xff]
    %v4303 = vld [vmem:[#allocation13 + $0x3c8] sm:$0xff]
    %v4304 = vld [vmem:[#allocation13 + $0x3d0] sm:$0xff]
    %v4305 = vld [vmem:[#allocation13 + $0x3d8] sm:$0xff]
    %v4306 = vld [vmem:[#allocation13 + $0x3e0] sm:$0xff]
    %v4307 = vld [vmem:[#allocation13 + $0x3e8] sm:$0xff]
    %v4308 = vld [vmem:[#allocation13 + $0x3f0] sm:$0xff]
    %v4309 = vld [vmem:[#allocation13 + $0x3f8] sm:$0xff]
    %v4310 = vld [vmem:[#allocation13 + $0x400] sm:$0xff]
    %v4311 = vld [vmem:[#allocation13 + $0x408] sm:$0xff]
    %v4312 = vld [vmem:[#allocation13 + $0x410] sm:$0xff]
    %v4313 = vld [vmem:[#allocation13 + $0x418] sm:$0xff]
    %v4314 = vld [vmem:[#allocation13 + $0x420] sm:$0xff]
    %v4315 = vld [vmem:[#allocation13 + $0x428] sm:$0xff]
    %v4316 = vld [vmem:[#allocation13 + $0x430] sm:$0xff]
    %v4317 = vld [vmem:[#allocation13 + $0x438] sm:$0xff]
    %v4318 = vld [vmem:[#allocation13 + $0x440] sm:$0xff]
    %v4319 = vld [vmem:[#allocation13 + $0x448] sm:$0xff]
    %v4320 = vld [vmem:[#allocation13 + $0x450] sm:$0xff]
    %v4321 = vld [vmem:[#allocation13 + $0x458] sm:$0xff]
    %v4322 = vld [vmem:[#allocation13 + $0x460] sm:$0xff]
    %v4323 = vld [vmem:[#allocation13 + $0x468] sm:$0xff]
    %v4324 = vld [vmem:[#allocation13 + $0x470] sm:$0xff]
    %v4325 = vld [vmem:[#allocation13 + $0x478] sm:$0xff]
    %v4326 = vld [vmem:[#allocation13 + $0x480] sm:$0xff]
    %v4327 = vld [vmem:[#allocation13 + $0x488] sm:$0xff]
    %v4328 = vld [vmem:[#allocation13 + $0x490] sm:$0xff]
    %v4329 = vld [vmem:[#allocation13 + $0x498] sm:$0xff]
    %v4330 = vld [vmem:[#allocation13 + $0x4a0] sm:$0xff]
    %v4331 = vld [vmem:[#allocation13 + $0x4a8] sm:$0xff]
    %v4332 = vld [vmem:[#allocation13 + $0x4b0] sm:$0xff]
    %v4333 = vld [vmem:[#allocation13 + $0x4b8] sm:$0xff]
    %v4334 = vld [vmem:[#allocation13 + $0x4c0] sm:$0xff]
    %v4335 = vld [vmem:[#allocation13 + $0x4c8] sm:$0xff]
    %v4336 = vld [vmem:[#allocation13 + $0x4d0] sm:$0xff]
    %v4337 = vld [vmem:[#allocation13 + $0x4d8] sm:$0xff]
    %v4338 = vld [vmem:[#allocation13 + $0x4e0] sm:$0xff]
    %v4339 = vld [vmem:[#allocation13 + $0x4e8] sm:$0xff]
    %v4340 = vld [vmem:[#allocation13 + $0x4f0] sm:$0xff]
    %v4341 = vld [vmem:[#allocation13 + $0x4f8] sm:$0xff]
    %v4342 = vld [vmem:[#allocation13 + $0x500] sm:$0xff]
    %v4343 = vld [vmem:[#allocation13 + $0x508] sm:$0xff]
    %v4344 = vld [vmem:[#allocation13 + $0x510] sm:$0xff]
    %v4345 = vld [vmem:[#allocation13 + $0x518] sm:$0xff]
    %v4346 = vld [vmem:[#allocation13 + $0x520] sm:$0xff]
    %v4347 = vld [vmem:[#allocation13 + $0x528] sm:$0xff]
    %v4348 = vld [vmem:[#allocation13 + $0x530] sm:$0xff]
    %v4349 = vld [vmem:[#allocation13 + $0x538] sm:$0xff]
    %v4350 = vld [vmem:[#allocation13 + $0x540] sm:$0xff]
    %v4351 = vld [vmem:[#allocation13 + $0x548] sm:$0xff]
    %v4352 = vld [vmem:[#allocation13 + $0x550] sm:$0xff]
    %v4353 = vld [vmem:[#allocation13 + $0x558] sm:$0xff]
    %v4354 = vld [vmem:[#allocation13 + $0x560] sm:$0xff]
    %v4355 = vld [vmem:[#allocation13 + $0x568] sm:$0xff]
    %v4356 = vld [vmem:[#allocation13 + $0x570] sm:$0xff]
    %v4357 = vld [vmem:[#allocation13 + $0x578] sm:$0xff]
    %v4358 = vld [vmem:[#allocation13 + $0x580] sm:$0xff]
    %v4359 = vld [vmem:[#allocation13 + $0x588] sm:$0xff]
    %v4360 = vld [vmem:[#allocation13 + $0x590] sm:$0xff]
    %v4361 = vld [vmem:[#allocation13 + $0x598] sm:$0xff]
    %v4362 = vld [vmem:[#allocation13 + $0x5a0] sm:$0xff]
    %v4363 = vld [vmem:[#allocation13 + $0x5a8] sm:$0xff]
    %v4364 = vld [vmem:[#allocation13 + $0x5b0] sm:$0xff]
    %v4365 = vld [vmem:[#allocation13 + $0x5b8] sm:$0xff]
    %v4366 = vld [vmem:[#allocation13 + $0x5c0] sm:$0xff]
    %v4367 = vld [vmem:[#allocation13 + $0x5c8] sm:$0xff]
    %v4368 = vld [vmem:[#allocation13 + $0x5d0] sm:$0xff]
    %v4369 = vld [vmem:[#allocation13 + $0x5d8] sm:$0xff]
    %v4370 = vld [vmem:[#allocation13 + $0x5e0] sm:$0xff]
    %v4371 = vld [vmem:[#allocation13 + $0x5e8] sm:$0xff]
    %v4372 = vld [vmem:[#allocation13 + $0x5f0] sm:$0xff]
    %v4373 = vld [vmem:[#allocation13 + $0x5f8] sm:$0xff]
    %v4374 = vld [vmem:[#allocation14] sm:$0x3]
    %v4376 = vlaneseq
    %v4377 = vshrl.u32 %v4376, 7
    %v4378 = vsub.s32 0, %v4377
    %v4379 = vrot.slane %v4374, %v4378
    %v4380 = vlaneseq
    %v4381 = vshrl.u32 %v4380, 7
    %v4382 = vsub.s32 1, %v4381
    %v4383 = vrot.slane %v4374, %v4382
    %4386 = vmatprep.subr.mxu0 %v4213
    %4387 = vmatpush1.msra.mxu0 %v4212
    %4388 = vmatprep.subr.mxu0 %v4211
    %4389 = vmatpush1.msra.mxu0 %v4210
    %4390 = vmatprep.subr.mxu0 %v4209
    %4391 = vmatpush1.msra.mxu0 %v4208
    %4392 = vmatprep.subr.mxu0 %v4207
    %4393 = vmatpush1.msra.mxu0 %v4206
    %4394 = vmatprep.subr.mxu0 %v4205
    %4395 = vmatpush1.msra.mxu0 %v4204
    %4396 = vmatprep.subr.mxu0 %v4203
    %4397 = vmatpush1.msra.mxu0 %v4202
    %4398 = vmatprep.subr.mxu0 %v4201
    %4399 = vmatpush1.msra.mxu0 %v4200
    %4400 = vmatprep.subr.mxu0 %v4199
    %4401 = vmatpush1.msra.mxu0 %v4198
    %4402 = vmatprep.subr.mxu0 %v4197
    %4403 = vmatpush1.msra.mxu0 %v4196
    %4404 = vmatprep.subr.mxu0 %v4195
    %4405 = vmatpush1.msra.mxu0 %v4194
    %4406 = vmatprep.subr.mxu0 %v4193
    %4407 = vmatpush1.msra.mxu0 %v4192
    %4408 = vmatprep.subr.mxu0 %v4191
    %4409 = vmatpush1.msra.mxu0 %v4190
    %4410 = vmatprep.subr.mxu0 %v4189
    %4411 = vmatpush1.msra.mxu0 %v4188
    %4412 = vmatprep.subr.mxu0 %v4187
    %4413 = vmatpush1.msra.mxu0 %v4186
    %4414 = vmatprep.subr.mxu0 %v4185
    %4415 = vmatpush1.msra.mxu0 %v4184
    %4416 = vmatprep.subr.mxu0 %v4183
    %4417 = vmatpush1.msra.mxu0 %v4182
    %4418 = vmatprep.subr.mxu0 %v4245
    %4419 = vmatpush2.msra.mxu0 %v4244
    %4420 = vmatprep.subr.mxu0 %v4243
    %4421 = vmatpush2.msra.mxu0 %v4242
    %4422 = vmatprep.subr.mxu0 %v4241
    %4423 = vmatpush2.msra.mxu0 %v4240
    %4424 = vmatprep.subr.mxu0 %v4239
    %4425 = vmatpush2.msra.mxu0 %v4238
    %4426 = vmatprep.subr.mxu0 %v4237
    %4427 = vmatpush2.msra.mxu0 %v4236
    %4428 = vmatprep.subr.mxu0 %v4235
    %4429 = vmatpush2.msra.mxu0 %v4234
    %4430 = vmatprep.subr.mxu0 %v4233
    %4431 = vmatpush2.msra.mxu0 %v4232
    %4432 = vmatprep.subr.mxu0 %v4231
    %4433 = vmatpush2.msra.mxu0 %v4230
    %4434 = vmatprep.subr.mxu0 %v4229
    %4435 = vmatpush2.msra.mxu0 %v4228
    %4436 = vmatprep.subr.mxu0 %v4227
    %4437 = vmatpush2.msra.mxu0 %v4226
    %4438 = vmatprep.subr.mxu0 %v4225
    %4439 = vmatpush2.msra.mxu0 %v4224
    %4440 = vmatprep.subr.mxu0 %v4223
    %4441 = vmatpush2.msra.mxu0 %v4222
    %4442 = vmatprep.subr.mxu0 %v4221
    %4443 = vmatpush2.msra.mxu0 %v4220
    %4444 = vmatprep.subr.mxu0 %v4219
    %4445 = vmatpush2.msra.mxu0 %v4218
    %4446 = vmatprep.subr.mxu0 %v4217
    %4447 = vmatpush2.msra.mxu0 %v4216
    %4448 = vmatprep.subr.mxu0 %v4215
    %4449 = vmatpush2.msra.mxu0 %v4214
    %4450 = vmatprep.mubr.f32.mxu0 %v4177
    %4451 = vmatmul.mubr.f32.gmra.mxu0 %v4176
    %v4452 = vpop.f32.mrf.mxu0
    %v4453 = vadd.f32 %v4379, %v4452
    %v4454 = vpop.f32.mrf.mxu0
    %v4455 = vadd.f32 %v4383, %v4454
    %4456 = vdwg.mxu0
    %4457 = vmatprep.subr.mxu0 %v4277
    %4458 = vmatpush1.msra.mxu0 %v4276
    %4459 = vmatprep.subr.mxu0 %v4275
    %4460 = vmatpush1.msra.mxu0 %v4274
    %4461 = vmatprep.subr.mxu0 %v4273
    %4462 = vmatpush1.msra.mxu0 %v4272
    %4463 = vmatprep.subr.mxu0 %v4271
    %4464 = vmatpush1.msra.mxu0 %v4270
    %4465 = vmatprep.subr.mxu0 %v4269
    %4466 = vmatpush1.msra.mxu0 %v4268
    %4467 = vmatprep.subr.mxu0 %v4267
    %4468 = vmatpush1.msra.mxu0 %v4266
    %4469 = vmatprep.subr.mxu0 %v4265
    %4470 = vmatpush1.msra.mxu0 %v4264
    %4471 = vmatprep.subr.mxu0 %v4263
    %4472 = vmatpush1.msra.mxu0 %v4262
    %4473 = vmatprep.subr.mxu0 %v4261
    %4474 = vmatpush1.msra.mxu0 %v4260
    %4475 = vmatprep.subr.mxu0 %v4259
    %4476 = vmatpush1.msra.mxu0 %v4258
    %4477 = vmatprep.subr.mxu0 %v4257
    %4478 = vmatpush1.msra.mxu0 %v4256
    %4479 = vmatprep.subr.mxu0 %v4255
    %4480 = vmatpush1.msra.mxu0 %v4254
    %4481 = vmatprep.subr.mxu0 %v4253
    %4482 = vmatpush1.msra.mxu0 %v4252
    %4483 = vmatprep.subr.mxu0 %v4251
    %4484 = vmatpush1.msra.mxu0 %v4250
    %4485 = vmatprep.subr.mxu0 %v4249
    %4486 = vmatpush1.msra.mxu0 %v4248
    %4487 = vmatprep.subr.mxu0 %v4247
    %4488 = vmatpush1.msra.mxu0 %v4246
    %4489 = vmatprep.subr.mxu0 %v4309
    %4490 = vmatpush2.msra.mxu0 %v4308
    %4491 = vmatprep.subr.mxu0 %v4307
    %4492 = vmatpush2.msra.mxu0 %v4306
    %4493 = vmatprep.subr.mxu0 %v4305
    %4494 = vmatpush2.msra.mxu0 %v4304
    %4495 = vmatprep.subr.mxu0 %v4303
    %4496 = vmatpush2.msra.mxu0 %v4302
    %4497 = vmatprep.subr.mxu0 %v4301
    %4498 = vmatpush2.msra.mxu0 %v4300
    %4499 = vmatprep.subr.mxu0 %v4299
    %4500 = vmatpush2.msra.mxu0 %v4298
    %4501 = vmatprep.subr.mxu0 %v4297
    %4502 = vmatpush2.msra.mxu0 %v4296
    %4503 = vmatprep.subr.mxu0 %v4295
    %4504 = vmatpush2.msra.mxu0 %v4294
    %4505 = vmatprep.subr.mxu0 %v4293
    %4506 = vmatpush2.msra.mxu0 %v4292
    %4507 = vmatprep.subr.mxu0 %v4291
    %4508 = vmatpush2.msra.mxu0 %v4290
    %4509 = vmatprep.subr.mxu0 %v4289
    %4510 = vmatpush2.msra.mxu0 %v4288
    %4511 = vmatprep.subr.mxu0 %v4287
    %4512 = vmatpush2.msra.mxu0 %v4286
    %4513 = vmatprep.subr.mxu0 %v4285
    %4514 = vmatpush2.msra.mxu0 %v4284
    %4515 = vmatprep.subr.mxu0 %v4283
    %4516 = vmatpush2.msra.mxu0 %v4282
    %4517 = vmatprep.subr.mxu0 %v4281
    %4518 = vmatpush2.msra.mxu0 %v4280
    %4519 = vmatprep.subr.mxu0 %v4279
    %4520 = vmatpush2.msra.mxu0 %v4278
    %4521 = vmatprep.mubr.f32.mxu0 %v4179
    %4522 = vmatmul.mubr.f32.gmra.mxu0 %v4178
    %v4523 = vpop.f32.mrf.mxu0
    %v4524 = vadd.f32 %v4453, %v4523
    %v4525 = vpop.f32.mrf.mxu0
    %v4526 = vadd.f32 %v4455, %v4525
    %4527 = vdwg.mxu0
    %4528 = vmatprep.subr.mxu0 %v4341
    %4529 = vmatpush1.msra.mxu0 %v4340
    %4530 = vmatprep.subr.mxu0 %v4339
    %4531 = vmatpush1.msra.mxu0 %v4338
    %4532 = vmatprep.subr.mxu0 %v4337
    %4533 = vmatpush1.msra.mxu0 %v4336
    %4534 = vmatprep.subr.mxu0 %v4335
    %4535 = vmatpush1.msra.mxu0 %v4334
    %4536 = vmatprep.subr.mxu0 %v4333
    %4537 = vmatpush1.msra.mxu0 %v4332
    %4538 = vmatprep.subr.mxu0 %v4331
    %4539 = vmatpush1.msra.mxu0 %v4330
    %4540 = vmatprep.subr.mxu0 %v4329
    %4541 = vmatpush1.msra.mxu0 %v4328
    %4542 = vmatprep.subr.mxu0 %v4327
    %4543 = vmatpush1.msra.mxu0 %v4326
    %4544 = vmatprep.subr.mxu0 %v4325
    %4545 = vmatpush1.msra.mxu0 %v4324
    %4546 = vmatprep.subr.mxu0 %v4323
    %4547 = vmatpush1.msra.mxu0 %v4322
    %4548 = vmatprep.subr.mxu0 %v4321
    %4549 = vmatpush1.msra.mxu0 %v4320
    %4550 = vmatprep.subr.mxu0 %v4319
    %4551 = vmatpush1.msra.mxu0 %v4318
    %4552 = vmatprep.subr.mxu0 %v4317
    %4553 = vmatpush1.msra.mxu0 %v4316
    %4554 = vmatprep.subr.mxu0 %v4315
    %4555 = vmatpush1.msra.mxu0 %v4314
    %4556 = vmatprep.subr.mxu0 %v4313
    %4557 = vmatpush1.msra.mxu0 %v4312
    %4558 = vmatprep.subr.mxu0 %v4311
    %4559 = vmatpush1.msra.mxu0 %v4310
    %4560 = vmatprep.subr.mxu0 %v4373
    %4561 = vmatpush2.msra.mxu0 %v4372
    %4562 = vmatprep.subr.mxu0 %v4371
    %4563 = vmatpush2.msra.mxu0 %v4370
    %4564 = vmatprep.subr.mxu0 %v4369
    %4565 = vmatpush2.msra.mxu0 %v4368
    %4566 = vmatprep.subr.mxu0 %v4367
    %4567 = vmatpush2.msra.mxu0 %v4366
    %4568 = vmatprep.subr.mxu0 %v4365
    %4569 = vmatpush2.msra.mxu0 %v4364
    %4570 = vmatprep.subr.mxu0 %v4363
    %4571 = vmatpush2.msra.mxu0 %v4362
    %4572 = vmatprep.subr.mxu0 %v4361
    %4573 = vmatpush2.msra.mxu0 %v4360
    %4574 = vmatprep.subr.mxu0 %v4359
    %4575 = vmatpush2.msra.mxu0 %v4358
    %4576 = vmatprep.subr.mxu0 %v4357
    %4577 = vmatpush2.msra.mxu0 %v4356
    %4578 = vmatprep.subr.mxu0 %v4355
    %4579 = vmatpush2.msra.mxu0 %v4354
    %4580 = vmatprep.subr.mxu0 %v4353
    %4581 = vmatpush2.msra.mxu0 %v4352
    %4582 = vmatprep.subr.mxu0 %v4351
    %4583 = vmatpush2.msra.mxu0 %v4350
    %4584 = vmatprep.subr.mxu0 %v4349
    %4585 = vmatpush2.msra.mxu0 %v4348
    %4586 = vmatprep.subr.mxu0 %v4347
    %4587 = vmatpush2.msra.mxu0 %v4346
    %4588 = vmatprep.subr.mxu0 %v4345
    %4589 = vmatpush2.msra.mxu0 %v4344
    %4590 = vmatprep.subr.mxu0 %v4343
    %4591 = vmatpush2.msra.mxu0 %v4342
    %4592 = vmatprep.mubr.f32.mxu0 %v4181
    %4593 = vmatmul.mubr.f32.gmra.mxu0 %v4180
    %v4594 = vpop.f32.mrf.mxu0
    %v4595 = vadd.f32 %v4524, %v4594
    %v4596 = vpop.f32.mrf.mxu0
    %v4597 = vadd.f32 %v4526, %v4596
    %4598 = vdwg.mxu0
    %v4599 = vmax.f32 %v4595, 0.0
    %v4600 = vmax.f32 %v4597, 0.0
    %v4601 = vld [vmem:[#allocation7] sm:$0x3]
    %v4602 = vtanh.pop %v4601
    %v4603 = vld [vmem:[#allocation16] sm:$0xff]
    %v4604 = vld [vmem:[#allocation16 + $0x8] sm:$0xff]
    %v4605 = vld [vmem:[#allocation16 + $0x10] sm:$0xff]
    %v4606 = vld [vmem:[#allocation16 + $0x18] sm:$0xff]
    %v4607 = vld [vmem:[#allocation16 + $0x20] sm:$0xff]
    %v4608 = vld [vmem:[#allocation16 + $0x28] sm:$0xff]
    %v4609 = vld [vmem:[#allocation16 + $0x30] sm:$0xff]
    %v4610 = vld [vmem:[#allocation16 + $0x38] sm:$0xff]
    %v4611 = vld [vmem:[#allocation16 + $0x40] sm:$0xff]
    %v4612 = vld [vmem:[#allocation16 + $0x48] sm:$0xff]
    %v4613 = vld [vmem:[#allocation16 + $0x50] sm:$0xff]
    %v4614 = vld [vmem:[#allocation16 + $0x58] sm:$0xff]
    %v4615 = vld [vmem:[#allocation16 + $0x60] sm:$0xff]
    %v4616 = vld [vmem:[#allocation16 + $0x68] sm:$0xff]
    %v4617 = vld [vmem:[#allocation16 + $0x70] sm:$0xff]
    %v4618 = vld [vmem:[#allocation16 + $0x78] sm:$0xff]
    %v4619 = vld [vmem:[#allocation16 + $0x80] sm:$0xff]
    %v4620 = vld [vmem:[#allocation16 + $0x88] sm:$0xff]
    %v4621 = vld [vmem:[#allocation16 + $0x90] sm:$0xff]
    %v4622 = vld [vmem:[#allocation16 + $0x98] sm:$0xff]
    %v4623 = vld [vmem:[#allocation16 + $0xa0] sm:$0xff]
    %v4624 = vld [vmem:[#allocation16 + $0xa8] sm:$0xff]
    %v4625 = vld [vmem:[#allocation16 + $0xb0] sm:$0xff]
    %v4626 = vld [vmem:[#allocation16 + $0xb8] sm:$0xff]
    %v4627 = vld [vmem:[#allocation16 + $0xc0] sm:$0xff]
    %v4628 = vld [vmem:[#allocation16 + $0xc8] sm:$0xff]
    %v4629 = vld [vmem:[#allocation16 + $0xd0] sm:$0xff]
    %v4630 = vld [vmem:[#allocation16 + $0xd8] sm:$0xff]
    %v4631 = vld [vmem:[#allocation16 + $0xe0] sm:$0xff]
    %v4632 = vld [vmem:[#allocation16 + $0xe8] sm:$0xff]
    %v4633 = vld [vmem:[#allocation16 + $0xf0] sm:$0xff]
    %v4634 = vld [vmem:[#allocation16 + $0xf8] sm:$0xff]
    %v4635 = vld [vmem:[#allocation17] sm:$0x1f]
    %vm4636 = vcmask 39936
    %v4638 = vsel %vm4636, %v4602, 0
    %vm4640 = vcmask 1044480
    %v4642 = vsel %vm4640, %v4635, 0
    %4644 = vmatprep.subr.mxu0 0.0
    %4645 = vmatpush1.msra.mxu0 0.0
    %4646 = vmatprep.subr.mxu0 0.0
    %4647 = vmatpush1.msra.mxu0 0.0
    %4648 = vmatprep.subr.mxu0 0.0
    %4649 = vmatpush1.msra.mxu0 0.0
    %4650 = vmatprep.subr.mxu0 0.0
    %4651 = vmatpush1.msra.mxu0 0.0
    %4652 = vmatprep.subr.mxu0 0.0
    %4653 = vmatpush1.msra.mxu0 0.0
    %4654 = vmatprep.subr.mxu0 0.0
    %4655 = vmatpush1.msra.mxu0 0.0
    %4656 = vmatprep.subr.mxu0 0.0
    %4657 = vmatpush1.msra.mxu0 0.0
    %4658 = vmatprep.subr.mxu0 0.0
    %4659 = vmatpush1.msra.mxu0 0.0
    %4660 = vmatprep.subr.mxu0 0.0
    %4661 = vmatpush1.msra.mxu0 0.0
    %4662 = vmatprep.subr.mxu0 0.0
    %4663 = vmatpush1.msra.mxu0 0.0
    %4664 = vmatprep.subr.mxu0 0.0
    %4665 = vmatpush1.msra.mxu0 0.0
    %4666 = vmatprep.subr.mxu0 0.0
    %4667 = vmatpush1.msra.mxu0 0.0
    %4668 = vmatprep.subr.mxu0 0.0
    %4669 = vmatpush1.msra.mxu0 0.0
    %4670 = vmatprep.subr.mxu0 0.0
    %4671 = vmatpush1.msra.mxu0 0.0
    %4672 = vmatprep.subr.mxu0 0.0
    %4673 = vmatpush1.msra.mxu0 0.0
    %4674 = vmatprep.subr.mxu0 0.0
    %4675 = vmatpush1.msra.mxu0 %v4642
    %4676 = vmatprep.subr.mxu0 0.0
    %4677 = vmatpush2.msra.mxu0 0.0
    %4678 = vmatprep.subr.mxu0 0.0
    %4679 = vmatpush2.msra.mxu0 0.0
    %4680 = vmatprep.subr.mxu0 0.0
    %4681 = vmatpush2.msra.mxu0 0.0
    %4682 = vmatprep.subr.mxu0 0.0
    %4683 = vmatpush2.msra.mxu0 0.0
    %4684 = vmatprep.subr.mxu0 0.0
    %4685 = vmatpush2.msra.mxu0 0.0
    %4686 = vmatprep.subr.mxu0 0.0
    %4687 = vmatpush2.msra.mxu0 0.0
    %4688 = vmatprep.subr.mxu0 0.0
    %4689 = vmatpush2.msra.mxu0 0.0
    %4690 = vmatprep.subr.mxu0 0.0
    %4691 = vmatpush2.msra.mxu0 0.0
    %4692 = vmatprep.subr.mxu0 0.0
    %4693 = vmatpush2.msra.mxu0 0.0
    %4694 = vmatprep.subr.mxu0 0.0
    %4695 = vmatpush2.msra.mxu0 0.0
    %4696 = vmatprep.subr.mxu0 0.0
    %4697 = vmatpush2.msra.mxu0 0.0
    %4698 = vmatprep.subr.mxu0 0.0
    %4699 = vmatpush2.msra.mxu0 0.0
    %4700 = vmatprep.subr.mxu0 0.0
    %4701 = vmatpush2.msra.mxu0 0.0
    %4702 = vmatprep.subr.mxu0 0.0
    %4703 = vmatpush2.msra.mxu0 0.0
    %4704 = vmatprep.subr.mxu0 0.0
    %4705 = vmatpush2.msra.mxu0 0.0
    %4706 = vmatprep.subr.mxu0 0.0
    %4707 = vmatpush2.msra.mxu0 0.0
    %4708 = vmatprep.mubr.f32.mxu0 0.0
    %4709 = vmatmul.mubr.f32.gmra.mxu0 %v4638
    %v4710 = vpop.f32.mrf.mxu0
    %v4711 = vadd.f32 0.0, %v4710
    %v4712 = vpop.f32.mrf.mxu0
    %4713 = vdwg.mxu0
    %4714 = vmatprep.subr.mxu0 0.0
    %4715 = vmatpush1.msra.mxu0 %v4618
    %4716 = vmatprep.subr.mxu0 0.0
    %4717 = vmatpush1.msra.mxu0 %v4617
    %4718 = vmatprep.subr.mxu0 0.0
    %4719 = vmatpush1.msra.mxu0 %v4616
    %4720 = vmatprep.subr.mxu0 0.0
    %4721 = vmatpush1.msra.mxu0 %v4615
    %4722 = vmatprep.subr.mxu0 0.0
    %4723 = vmatpush1.msra.mxu0 %v4614
    %4724 = vmatprep.subr.mxu0 0.0
    %4725 = vmatpush1.msra.mxu0 %v4613
    %4726 = vmatprep.subr.mxu0 0.0
    %4727 = vmatpush1.msra.mxu0 %v4612
    %4728 = vmatprep.subr.mxu0 0.0
    %4729 = vmatpush1.msra.mxu0 %v4611
    %4730 = vmatprep.subr.mxu0 0.0
    %4731 = vmatpush1.msra.mxu0 %v4610
    %4732 = vmatprep.subr.mxu0 0.0
    %4733 = vmatpush1.msra.mxu0 %v4609
    %4734 = vmatprep.subr.mxu0 0.0
    %4735 = vmatpush1.msra.mxu0 %v4608
    %4736 = vmatprep.subr.mxu0 0.0
    %4737 = vmatpush1.msra.mxu0 %v4607
    %4738 = vmatprep.subr.mxu0 0.0
    %4739 = vmatpush1.msra.mxu0 %v4606
    %4740 = vmatprep.subr.mxu0 0.0
    %4741 = vmatpush1.msra.mxu0 %v4605
    %4742 = vmatprep.subr.mxu0 0.0
    %4743 = vmatpush1.msra.mxu0 %v4604
    %4744 = vmatprep.subr.mxu0 0.0
    %4745 = vmatpush1.msra.mxu0 %v4603
    %4746 = vmatprep.subr.mxu0 0.0
    %4747 = vmatpush2.msra.mxu0 %v4634
    %4748 = vmatprep.subr.mxu0 0.0
    %4749 = vmatpush2.msra.mxu0 %v4633
    %4750 = vmatprep.subr.mxu0 0.0
    %4751 = vmatpush2.msra.mxu0 %v4632
    %4752 = vmatprep.subr.mxu0 0.0
    %4753 = vmatpush2.msra.mxu0 %v4631
    %4754 = vmatprep.subr.mxu0 0.0
    %4755 = vmatpush2.msra.mxu0 %v4630
    %4756 = vmatprep.subr.mxu0 0.0
    %4757 = vmatpush2.msra.mxu0 %v4629
    %4758 = vmatprep.subr.mxu0 0.0
    %4759 = vmatpush2.msra.mxu0 %v4628
    %4760 = vmatprep.subr.mxu0 0.0
    %4761 = vmatpush2.msra.mxu0 %v4627
    %4762 = vmatprep.subr.mxu0 0.0
    %4763 = vmatpush2.msra.mxu0 %v4626
    %4764 = vmatprep.subr.mxu0 0.0
    %4765 = vmatpush2.msra.mxu0 %v4625
    %4766 = vmatprep.subr.mxu0 0.0
    %4767 = vmatpush2.msra.mxu0 %v4624
    %4768 = vmatprep.subr.mxu0 0.0
    %4769 = vmatpush2.msra.mxu0 %v4623
    %4770 = vmatprep.subr.mxu0 0.0
    %4771 = vmatpush2.msra.mxu0 %v4622
    %4772 = vmatprep.subr.mxu0 0.0
    %4773 = vmatpush2.msra.mxu0 %v4621
    %4774 = vmatprep.subr.mxu0 0.0
    %4775 = vmatpush2.msra.mxu0 %v4620
    %4776 = vmatprep.subr.mxu0 0.0
    %4777 = vmatpush2.msra.mxu0 %v4619
    %4778 = vmatprep.mubr.f32.mxu0 %v4600
    %4779 = vmatmul.mubr.f32.gmra.mxu0 %v4599
    %v4780 = vpop.f32.mrf.mxu0
    %v4781 = vadd.f32 %v4711, %v4780
    %v4782 = vpop.f32.mrf.mxu0
    %4783 = vdwg.mxu0
    %v4784 = vld [vmem:[#allocation19] sm:$0x1]
    %v4786 = vlaneseq
    %v4787 = vshrl.u32 %v4786, 7
    %v4788 = vsub.s32 0, %v4787
    %v4789 = vrot.slane %v4784, %v4788
    %v4791 = vadd.f32 %v4781, %v4789
    %v4792 = vmax.f32 %v4791, 0.0
    %v4793 = vld [vmem:[#allocation20] sm:$0xff]
    %v4794 = vld [vmem:[#allocation20 + $0x8] sm:$0xff]
    %v4795 = vld [vmem:[#allocation20 + $0x10] sm:$0xff]
    %v4796 = vld [vmem:[#allocation20 + $0x18] sm:$0xff]
    %v4797 = vld [vmem:[#allocation20 + $0x20] sm:$0xff]
    %v4798 = vld [vmem:[#allocation20 + $0x28] sm:$0xff]
    %v4799 = vld [vmem:[#allocation20 + $0x30] sm:$0xff]
    %v4800 = vld [vmem:[#allocation20 + $0x38] sm:$0xff]
    %v4801 = vld [vmem:[#allocation20 + $0x40] sm:$0xff]
    %v4802 = vld [vmem:[#allocation20 + $0x48] sm:$0xff]
    %v4803 = vld [vmem:[#allocation20 + $0x50] sm:$0xff]
    %v4804 = vld [vmem:[#allocation20 + $0x58] sm:$0xff]
    %v4805 = vld [vmem:[#allocation20 + $0x60] sm:$0xff]
    %v4806 = vld [vmem:[#allocation20 + $0x68] sm:$0xff]
    %v4807 = vld [vmem:[#allocation20 + $0x70] sm:$0xff]
    %v4808 = vld [vmem:[#allocation20 + $0x78] sm:$0xff]
    %v4809 = vld [vmem:[#allocation22] sm:$0x1]
    %v4811 = vlaneseq
    %v4812 = vshrl.u32 %v4811, 7
    %v4813 = vsub.s32 0, %v4812
    %v4814 = vrot.slane %v4809, %v4813
    %4816 = vmatprep.subr.mxu0 0.0
    %4817 = vmatpush1.msra.mxu0 %v4808
    %4818 = vmatprep.subr.mxu0 0.0
    %4819 = vmatpush1.msra.mxu0 %v4807
    %4820 = vmatprep.subr.mxu0 0.0
    %4821 = vmatpush1.msra.mxu0 %v4806
    %4822 = vmatprep.subr.mxu0 0.0
    %4823 = vmatpush1.msra.mxu0 %v4805
    %4824 = vmatprep.subr.mxu0 0.0
    %4825 = vmatpush1.msra.mxu0 %v4804
    %4826 = vmatprep.subr.mxu0 0.0
    %4827 = vmatpush1.msra.mxu0 %v4803
    %4828 = vmatprep.subr.mxu0 0.0
    %4829 = vmatpush1.msra.mxu0 %v4802
    %4830 = vmatprep.subr.mxu0 0.0
    %4831 = vmatpush1.msra.mxu0 %v4801
    %4832 = vmatprep.subr.mxu0 0.0
    %4833 = vmatpush1.msra.mxu0 %v4800
    %4834 = vmatprep.subr.mxu0 0.0
    %4835 = vmatpush1.msra.mxu0 %v4799
    %4836 = vmatprep.subr.mxu0 0.0
    %4837 = vmatpush1.msra.mxu0 %v4798
    %4838 = vmatprep.subr.mxu0 0.0
    %4839 = vmatpush1.msra.mxu0 %v4797
    %4840 = vmatprep.subr.mxu0 0.0
    %4841 = vmatpush1.msra.mxu0 %v4796
    %4842 = vmatprep.subr.mxu0 0.0
    %4843 = vmatpush1.msra.mxu0 %v4795
    %4844 = vmatprep.subr.mxu0 0.0
    %4845 = vmatpush1.msra.mxu0 %v4794
    %4846 = vmatprep.subr.mxu0 0.0
    %4847 = vmatpush1.msra.mxu0 %v4793
    %4848 = vmatprep.subr.mxu0 0.0
    %4849 = vmatpush2.msra.mxu0 0.0
    %4850 = vmatprep.subr.mxu0 0.0
    %4851 = vmatpush2.msra.mxu0 0.0
    %4852 = vmatprep.subr.mxu0 0.0
    %4853 = vmatpush2.msra.mxu0 0.0
    %4854 = vmatprep.subr.mxu0 0.0
    %4855 = vmatpush2.msra.mxu0 0.0
    %4856 = vmatprep.subr.mxu0 0.0
    %4857 = vmatpush2.msra.mxu0 0.0
    %4858 = vmatprep.subr.mxu0 0.0
    %4859 = vmatpush2.msra.mxu0 0.0
    %4860 = vmatprep.subr.mxu0 0.0
    %4861 = vmatpush2.msra.mxu0 0.0
    %4862 = vmatprep.subr.mxu0 0.0
    %4863 = vmatpush2.msra.mxu0 0.0
    %4864 = vmatprep.subr.mxu0 0.0
    %4865 = vmatpush2.msra.mxu0 0.0
    %4866 = vmatprep.subr.mxu0 0.0
    %4867 = vmatpush2.msra.mxu0 0.0
    %4868 = vmatprep.subr.mxu0 0.0
    %4869 = vmatpush2.msra.mxu0 0.0
    %4870 = vmatprep.subr.mxu0 0.0
    %4871 = vmatpush2.msra.mxu0 0.0
    %4872 = vmatprep.subr.mxu0 0.0
    %4873 = vmatpush2.msra.mxu0 0.0
    %4874 = vmatprep.subr.mxu0 0.0
    %4875 = vmatpush2.msra.mxu0 0.0
    %4876 = vmatprep.subr.mxu0 0.0
    %4877 = vmatpush2.msra.mxu0 0.0
    %4878 = vmatprep.subr.mxu0 0.0
    %4879 = vmatpush2.msra.mxu0 0.0
    %4880 = vmatprep.mubr.f32.mxu0 0.0
    %4881 = vmatmul.mubr.f32.gmra.mxu0 %v4792
    %v4882 = vpop.f32.mrf.mxu0
    %v4883 = vadd.f32 %v4814, %v4882
    %v4884 = vpop.f32.mrf.mxu0
    %4885 = vdwg.mxu0
    %4886 = vst [vmem:[#allocation23] sm:$0x3] %v4883
    // Predicated region
    $region106: #{tpu_custom_call.1} parent=1 // pred_check
      _
    $region107: #{tpu_custom_call.1} parent=1 // pred_check_branch
      %4888 = sbr.rel (0) target = $region109
    $region108: #{tpu_custom_call.1} parent=1 // pred_region
      %s4890 = ssub.s32 32, 32
      %4891 = vsyncadd [#allocation4], %s4890
      %s4893 = sshll.u32 [#allocation23], 4
      %s4894 = int_to_ptr.vmem [resolvable:$true] %s4893
      %4896 = dma.vmem_to_hbm [thread:$0]  %s4894, 32, %s13, [#allocation4]
    $region109: #{tpu_custom_call.1} parent=1 // pred_fallthru
      _
    // Predicated region
    $region110: #{tpu_custom_call.1} parent=1 // pred_check
      _
    $region111: #{tpu_custom_call.1} parent=1 // pred_check_branch
      %4898 = sbr.rel (0) target = $region113
    $region112: #{tpu_custom_call.1} parent=1 // pred_region
      %4899 = dma.done [#allocation4], 32
    $region113: #{tpu_custom_call.1} parent=1 // pred_fallthru
      _
    %4900 = vsyncpa [#allocation3], 1
    %4901 = vsyncpa [#allocation6], 1
    %4902 = vsyncpa [#allocation9], 1
    %4903 = vsyncpa [#allocation12], 1
    %4904 = vsyncpa [#allocation15], 1
    %4905 = vsyncpa [#allocation18], 1
    %4906 = vsyncpa [#allocation21], 1
    %4907 = vsyncpa [#allocation4], 1

</llo_original>
